<compile_context>
chip_gen: v7x
topology: tpu7x:2x2x1
jax: 0.10.0
libtpu: 0.0.40
codegen_flags: <defaults>
</compile_context>

<pallas_src>
import jax
import jax.numpy as jnp
from jax import lax
from jax.experimental import pallas as pl
from jax.experimental.pallas import tpu as pltpu

NUM_NODES = 4
NUM_EDGES = NUM_NODES * (NUM_NODES - 1) // 2  # 6
BN_EPS = 1e-5


# ---------------------------------------------------------------------------
# Wrapper-side weight packing: ReLU-conv3x3 + ReLU-conv1x1 as one matmul on
# lane-dense rows.  Row index k = dh*W*C + w_in*C + c_in, column index
# j = w_out*C + c_out (first W*C cols = 3x3 conv, next W*C = 1x1 conv).
# ---------------------------------------------------------------------------
def _edge_weight_block(w3, w1, W, C):
    WC = W * C
    # 3x3: band (block-tri-diagonal) matrix per dh; w_in = w_out + dw - 1.
    m3 = jnp.concatenate(
        [sum(jnp.kron(jnp.eye(W, k=1 - dw, dtype=jnp.float32), w3[dh, dw])
             for dw in range(3))
         for dh in range(3)], axis=0)                               # (3*WC, WC)
    # 1x1: block-diagonal, only in the dh=1 (unshifted) row block.
    zero = jnp.zeros((WC, WC), jnp.float32)
    m1 = jnp.concatenate(
        [zero, jnp.kron(jnp.eye(W, dtype=jnp.float32), w1), zero], axis=0)
    return jnp.concatenate([m3, m1], axis=1)                        # (3*WC, 2*WC)


# ---------------------------------------------------------------------------
# Fused Cell forward: single pallas_call
# ---------------------------------------------------------------------------
def cell_forward(x_nchw, edge_params):
    N, C, H, W = x_nchw.shape
    WC = W * C                       # 128 for C=8, W=16 -> exactly one lane tile
    NH = N * H
    NHW = N * H * W
    total = NUM_EDGES * 2 * WC
    inv_n = 1.0 / float(NHW)

    # ---- pack weights / BN params, edges grouped by SOURCE node -------------
    w_cols, g_cols, b_cols = [], [], []
    for s in range(NUM_NODES - 1):
        for d in range(s + 1, NUM_NODES):
            p = edge_params[(s, d)]
            w_cols.append(_edge_weight_block(p["w3"], p["w1"], W, C))
            g_cols.append(jnp.concatenate([jnp.tile(p["g3"], W), jnp.tile(p["g1"], W)]))
            b_cols.append(jnp.concatenate([jnp.tile(p["b3"], W), jnp.tile(p["b1"], W)]))
    w_all = jnp.concatenate(w_cols, axis=1)                         # (3*WC, total)
    gb = jnp.stack([jnp.concatenate(g_cols), jnp.concatenate(b_cols)])  # (2, total)

    # channel-grouping matrix: per 128-lane block, sums each channel over the W
    # lane-groups and broadcasts it back to every (w, c) column.
    bmat = jnp.kron(jnp.ones((W, W), jnp.float32), jnp.eye(C, dtype=jnp.float32))

    # avg_pool_3x3 reciprocal counts (count_include_pad=False), pre-expanded to
    # the kernel's lane-dense layout (NH, WC).
    hi = jnp.arange(H, dtype=jnp.float32)
    wi = jnp.arange(W, dtype=jnp.float32)
    rows = jnp.minimum(hi + 1.0, H - 1.0) - jnp.maximum(hi - 1.0, 0.0) + 1.0
    cols = jnp.minimum(wi + 1.0, W - 1.0) - jnp.maximum(wi - 1.0, 0.0) + 1.0
    inv2d = 1.0 / (rows[:, None] * cols[None, :])                   # (H, W)
    inv_cnt = jnp.tile(inv2d[None, :, :, None], (N, 1, 1, C)).reshape(NH, WC)

    # input in lane-dense layout: rows = (n, h), lanes = (w, c)
    x2d = jnp.transpose(x_nchw, (0, 2, 3, 1)).reshape(NH, WC)

    def kernel(x_ref, w_ref, gb_ref, bmat_ref, inv_ref, o_ref, f1_ref, f2_ref):
        f1_ref[...] = jnp.zeros_like(f1_ref)
        f2_ref[...] = jnp.zeros_like(f2_ref)
        o_ref[...] = jnp.zeros_like(o_ref)
        node_refs = [f1_ref, f2_ref, o_ref]       # nodes 1, 2, 3 (node 3 == output)

        inv_cnt_v = inv_ref[...]
        Bg = bmat_ref[...]
        gbv = gb_ref[...]
        zrow = jnp.zeros((1, WC), jnp.float32)
        zcol = jnp.zeros((NH, C), jnp.float32)

        col_off = 0
        # Edges grouped by source node: node k is fully accumulated before read.
        for s in range(NUM_NODES - 1):
            x_s = x_ref[...] if s == 0 else node_refs[s - 1][...]   # (NH, WC)

            def hshift(x2, up):   # rows shifted by -/+1 in H per image, zero fill
                parts = []
                for n in range(N):
                    xn = x2[n * H:(n + 1) * H]
                    parts.append(jnp.concatenate([zrow, xn[:H - 1]], axis=0) if up
                                 else jnp.concatenate([xn[1:], zrow], axis=0))
                return jnp.concatenate(parts, axis=0)

            up = hshift(x_s, True)     # row h sees input row h-1
            dn = hshift(x_s, False)    # row h sees input row h+1

            # avg_pool_3x3 (count_include_pad=False): separable sums + 1/cnt mult
            csum = up + x_s + dn
            left = jnp.concatenate([zcol, csum[:, :WC - C]], axis=1)
            right = jnp.concatenate([csum[:, C:], zcol], axis=1)
            base = x_s + (left + csum + right) * inv_cnt_v   # none + skip + pool

            # ONE ReLU per shifted block, stacked along K -> one matmul per source
            A = jnp.concatenate([jnp.maximum(up, 0.0),
                                 jnp.maximum(x_s, 0.0),
                                 jnp.maximum(dn, 0.0)], axis=1)      # (NH, 3*WC)

            ndst = NUM_NODES - 1 - s
            width = ndst * 2 * WC
            Y = jnp.dot(A, w_ref[:, col_off:col_off + width],
                        preferred_element_type=jnp.float32)          # (NH, width)

            # Train-mode BatchNorm for all convs of this source, batched:
            # one row-reduction pass for sums and sums-of-squares, then a tiny
            # matmul with Bg groups per-channel stats over the W lane-groups
            # (result already broadcast back to every (w, c) column).
            ssum = jnp.sum(Y, axis=0, keepdims=True)                 # (1, width)
            ssq = jnp.sum(Y * Y, axis=0, keepdims=True)              # (1, width)
            nblk = width // WC
            st = jnp.concatenate(
                [ssum[:, b * WC:(b + 1) * WC] for b in range(nblk)]
                + [ssq[:, b * WC:(b + 1) * WC] for b in range(nblk)], axis=0)
            grp = jnp.dot(st, Bg, preferred_element_type=jnp.float32)
            mu = jnp.concatenate([grp[b:b + 1] for b in range(nblk)], axis=1) * inv_n
            ex2 = jnp.concatenate([grp[nblk + b:nblk + b + 1] for b in range(nblk)],
                                  axis=1) * inv_n
            var = jnp.maximum(ex2 - mu * mu, 0.0)
            scale = gbv[0:1, col_off:col_off + width] * lax.rsqrt(var + BN_EPS)
            shift = gbv[1:2, col_off:col_off + width] - mu * scale
            Ybn = Y * scale + shift                                  # folded BN

            for e in range(ndst):                      # destinations s+1 .. 3
                y3 = Ybn[:, e * 2 * WC:e * 2 * WC + WC]
                y1 = Ybn[:, e * 2 * WC + WC:(e + 1) * 2 * WC]
                dst = node_refs[s + e]
                dst[...] = dst[...] + base + y3 + y1

            col_off += width

    out2d = pl.pallas_call(
        kernel,
        out_shape=jax.ShapeDtypeStruct((NH, WC), jnp.float32),
        grid=(1,),
        in_specs=[
            pl.BlockSpec((NH, WC), lambda i: (0, 0)),
            pl.BlockSpec((3 * WC, total), lambda i: (0, 0)),
            pl.BlockSpec((2, total), lambda i: (0, 0)),
            pl.BlockSpec((WC, WC), lambda i: (0, 0)),
            pl.BlockSpec((NH, WC), lambda i: (0, 0)),
        ],
        out_specs=pl.BlockSpec((NH, WC), lambda i: (0, 0)),
        scratch_shapes=[pltpu.VMEM((NH, WC), jnp.float32),
                        pltpu.VMEM((NH, WC), jnp.float32)],
        compiler_params=pltpu.CompilerParams(
            dimension_semantics=("arbitrary",)),
    )(x2d, w_all, gb, bmat, inv_cnt)

    return jnp.transpose(out2d.reshape(N, H, W, C), (0, 3, 1, 2))    # NHWC -> NCHW


# ---------------------------------------------------------------------------
# Pure-JAX reference (lax.conv / reduce_window) for verification
# ---------------------------------------------------------------------------
def _bn_ref(y, gamma, beta):
    mu = jnp.mean(y, axis=(0, 1, 2), keepdims=True)
    var = jnp.mean((y - mu) ** 2, axis=(0, 1, 2), keepdims=True)
    return ((y - mu) / jnp.sqrt(var + BN_EPS) * gamma.reshape(1, 1, 1, -1)
            + beta.reshape(1, 1, 1, -1))


def mixed_op_ref(x, p):
    C = x.shape[-1]
    rx = jax.nn.relu(x)
    dn = ("NHWC", "HWIO", "NHWC")
    y1 = lax.conv_general_dilated(rx, p["w1"].reshape(1, 1, C, C), (1, 1), "VALID",
                                  dimension_numbers=dn)
    y1 = _bn_ref(y1, p["g1"], p["b1"])
    y3 = lax.conv_general_dilated(rx, p["w3"], (1, 1), ((1, 1), (1, 1)),
                                  dimension_numbers=dn)
    y3 = _bn_ref(y3, p["g3"], p["b3"])
    pad = ((0, 0), (1, 1), (1, 1), (0, 0))
    s = lax.reduce_window(x, 0.0, lax.add, (1, 3, 3, 1), (1, 1, 1, 1), pad)
    cnt = lax.reduce_window(jnp.ones_like(x), 0.0, lax.add, (1, 3, 3, 1),
                            (1, 1, 1, 1), pad)
    return x + y1 + y3 + s / cnt


def cell_forward_ref(x_nchw, edge_params):
    x = jnp.transpose(x_nchw, (0, 2, 3, 1))
    nodes = [x]
    for i in range(1, NUM_NODES):
        feat = None
        for k in range(i):
            y = mixed_op_ref(nodes[k], edge_params[(k, i)])
            feat = y if feat is None else feat + y
        nodes.append(feat)
    return jnp.transpose(nodes[-1], (0, 3, 1, 2))


# ---------------------------------------------------------------------------
# Deterministic parameter init (PyTorch shapes; BN params randomized to test wiring)
# ---------------------------------------------------------------------------
def init_edge_params(key, C):
    k1, k2, k3, k4, k5, k6 = jax.random.split(key, 6)
    return {
        "w1": jax.random.normal(k1, (C, C), jnp.float32) * 0.1,        # (Cin, Cout)
        "g1": 1.0 + 0.1 * jax.random.normal(k2, (C,), jnp.float32),
        "b1": 0.1 * jax.random.normal(k3, (C,), jnp.float32),
        "w3": jax.random.normal(k4, (3, 3, C, C), jnp.float32) * 0.1,  # HWIO
        "g3": 1.0 + 0.1 * jax.random.normal(k5, (C,), jnp.float32),
        "b3": 0.1 * jax.random.normal(k6, (C,), jnp.float32),
    }


if __name__ == "__main__":
    # Cell(cell_id=0, C_in=8, C_out=8, stride=1)
    N, C, H, W = 2, 8, 16, 16
    root = jax.random.PRNGKey(0)
    kx, kp = jax.random.split(root)
    x = jax.random.normal(kx, (N, C, H, W), jnp.float32)   # PyTorch NCHW input

    edges = [(k, i) for i in range(1, NUM_NODES) for k in range(i)]
    edge_keys = jax.random.split(kp, len(edges))
    edge_params = {e: init_edge_params(edge_keys[n], C) for n, e in enumerate(edges)}

    cell_fn = jax.jit(cell_forward)
    out = jax.block_until_ready(cell_fn(x, edge_params))

    ref = jax.block_until_ready(cell_forward_ref(x, edge_params))
    assert out.shape == (N, C, H, W) and out.dtype == jnp.float32
    err = float(jnp.max(jnp.abs(out - ref)))
    assert jnp.allclose(out, ref, rtol=1e-3, atol=1e-3), err

    print("KERNEL_OK")
</pallas_src>

<mosaic_0001>
module attributes {stable_mosaic.version = 11 : i64} {
  func.func @kernel(%arg0: i32, %arg1: memref<32x128xf32, #tpu.memory_space<vmem>>, %arg2: memref<384x1536xf32, #tpu.memory_space<vmem>>, %arg3: memref<2x1536xf32, #tpu.memory_space<vmem>>, %arg4: memref<128x128xf32, #tpu.memory_space<vmem>>, %arg5: memref<32x128xf32, #tpu.memory_space<vmem>>, %arg6: memref<32x128xf32, #tpu.memory_space<vmem>>, %arg7: memref<32x128xf32, #tpu.memory_space<vmem>>, %arg8: memref<32x128xf32, #tpu.memory_space<vmem>>) attributes {dimension_semantics = [#tpu.dimension_semantics<arbitrary>], iteration_bounds = array<i64: 1>, scalar_prefetch = 0 : i64, scratch_operands = 2 : i64, tpu.core_type = #tpu.core_type<tc>, window_params = [{pipeline_mode = #tpu.pipeline_mode<synchronous>, transform_indices = @transform_0, window_bounds = array<i64: 32, 128>}, {pipeline_mode = #tpu.pipeline_mode<synchronous>, transform_indices = @transform_1, window_bounds = array<i64: 384, 1536>}, {pipeline_mode = #tpu.pipeline_mode<synchronous>, transform_indices = @transform_2, window_bounds = array<i64: 2, 1536>}, {pipeline_mode = #tpu.pipeline_mode<synchronous>, transform_indices = @transform_3, window_bounds = array<i64: 128, 128>}, {pipeline_mode = #tpu.pipeline_mode<synchronous>, transform_indices = @transform_4, window_bounds = array<i64: 32, 128>}, {pipeline_mode = #tpu.pipeline_mode<synchronous>, transform_indices = @transform_5, window_bounds = array<i64: 32, 128>}]} {
    %cst = arith.constant 0.000000e+00 : f32
    %0 = vector.broadcast %cst : f32 to vector<32x128xf32>
    %c0 = arith.constant 0 : index
    %c0_0 = arith.constant 0 : index
    %1 = vector.load %arg7[%c0, %c0_0] : memref<32x128xf32, #tpu.memory_space<vmem>>, vector<32x128xf32>
    tpu.vector_store %arg7[%c0, %c0_0], %0 {strides = array<i32>} : memref<32x128xf32, #tpu.memory_space<vmem>>, vector<32x128xf32>,
    %cst_1 = arith.constant 0.000000e+00 : f32
    %2 = vector.broadcast %cst_1 : f32 to vector<32x128xf32>
    %c0_2 = arith.constant 0 : index
    %c0_3 = arith.constant 0 : index
    %3 = vector.load %arg8[%c0_2, %c0_3] : memref<32x128xf32, #tpu.memory_space<vmem>>, vector<32x128xf32>
    tpu.vector_store %arg8[%c0_2, %c0_3], %2 {strides = array<i32>} : memref<32x128xf32, #tpu.memory_space<vmem>>, vector<32x128xf32>,
    %cst_4 = arith.constant 0.000000e+00 : f32
    %4 = vector.broadcast %cst_4 : f32 to vector<32x128xf32>
    %c0_5 = arith.constant 0 : index
    %c0_6 = arith.constant 0 : index
    %5 = vector.load %arg6[%c0_5, %c0_6] : memref<32x128xf32, #tpu.memory_space<vmem>>, vector<32x128xf32>
    tpu.vector_store %arg6[%c0_5, %c0_6], %4 {strides = array<i32>} : memref<32x128xf32, #tpu.memory_space<vmem>>, vector<32x128xf32>,
    %c0_7 = arith.constant 0 : index
    %c0_8 = arith.constant 0 : index
    %6 = vector.load %arg5[%c0_7, %c0_8] : memref<32x128xf32, #tpu.memory_space<vmem>>, vector<32x128xf32>
    %c0_9 = arith.constant 0 : index
    %c0_10 = arith.constant 0 : index
    %7 = vector.load %arg4[%c0_9, %c0_10] : memref<128x128xf32, #tpu.memory_space<vmem>>, vector<128x128xf32>
    %c0_11 = arith.constant 0 : index
    %c0_12 = arith.constant 0 : index
    %8 = vector.load %arg3[%c0_11, %c0_12] : memref<2x1536xf32, #tpu.memory_space<vmem>>, vector<2x1536xf32>
    %cst_13 = arith.constant 0.000000e+00 : f32
    %9 = vector.broadcast %cst_13 : f32 to vector<1x128xf32>
    %cst_14 = arith.constant 0.000000e+00 : f32
    %10 = vector.broadcast %cst_14 : f32 to vector<32x8xf32>
    %c0_15 = arith.constant 0 : index
    %c0_16 = arith.constant 0 : index
    %11 = vector.load %arg1[%c0_15, %c0_16] : memref<32x128xf32, #tpu.memory_space<vmem>>, vector<32x128xf32>
    %12 = vector.extract_strided_slice %11 {offsets = [0, 0], sizes = [16, 128], strides = [1, 1]} : vector<32x128xf32> to vector<16x128xf32>
    %13 = vector.extract_strided_slice %12 {offsets = [0, 0], sizes = [15, 128], strides = [1, 1]} : vector<16x128xf32> to vector<15x128xf32>
    %14 = tpu.concatenate %9, %13 in 0 : vector<1x128xf32>, vector<15x128xf32> -> vector<16x128xf32>
    %15 = vector.extract_strided_slice %11 {offsets = [16, 0], sizes = [16, 128], strides = [1, 1]} : vector<32x128xf32> to vector<16x128xf32>
    %16 = vector.extract_strided_slice %15 {offsets = [0, 0], sizes = [15, 128], strides = [1, 1]} : vector<16x128xf32> to vector<15x128xf32>
    %17 = tpu.concatenate %9, %16 in 0 : vector<1x128xf32>, vector<15x128xf32> -> vector<16x128xf32>
    %18 = tpu.concatenate %14, %17 in 0 : vector<16x128xf32>, vector<16x128xf32> -> vector<32x128xf32>
    %19 = vector.extract_strided_slice %11 {offsets = [0, 0], sizes = [16, 128], strides = [1, 1]} : vector<32x128xf32> to vector<16x128xf32>
    %20 = vector.extract_strided_slice %19 {offsets = [1, 0], sizes = [15, 128], strides = [1, 1]} : vector<16x128xf32> to vector<15x128xf32>
    %21 = tpu.concatenate %20, %9 in 0 : vector<15x128xf32>, vector<1x128xf32> -> vector<16x128xf32>
    %22 = vector.extract_strided_slice %11 {offsets = [16, 0], sizes = [16, 128], strides = [1, 1]} : vector<32x128xf32> to vector<16x128xf32>
    %23 = vector.extract_strided_slice %22 {offsets = [1, 0], sizes = [15, 128], strides = [1, 1]} : vector<16x128xf32> to vector<15x128xf32>
    %24 = tpu.concatenate %23, %9 in 0 : vector<15x128xf32>, vector<1x128xf32> -> vector<16x128xf32>
    %25 = tpu.concatenate %21, %24 in 0 : vector<16x128xf32>, vector<16x128xf32> -> vector<32x128xf32>
    %26 = arith.addf %18, %11 : vector<32x128xf32>
    %27 = arith.addf %26, %25 : vector<32x128xf32>
    %28 = vector.extract_strided_slice %27 {offsets = [0, 0], sizes = [32, 120], strides = [1, 1]} : vector<32x128xf32> to vector<32x120xf32>
    %29 = tpu.concatenate %10, %28 in 1 : vector<32x8xf32>, vector<32x120xf32> -> vector<32x128xf32>
    %30 = vector.extract_strided_slice %27 {offsets = [0, 8], sizes = [32, 120], strides = [1, 1]} : vector<32x128xf32> to vector<32x120xf32>
    %31 = tpu.concatenate %30, %10 in 1 : vector<32x120xf32>, vector<32x8xf32> -> vector<32x128xf32>
    %32 = arith.addf %29, %27 : vector<32x128xf32>
    %33 = arith.addf %32, %31 : vector<32x128xf32>
    %34 = arith.mulf %33, %6 : vector<32x128xf32>
    %35 = arith.addf %11, %34 : vector<32x128xf32>
    %cst_17 = arith.constant 0.000000e+00 : f32
    %36 = vector.broadcast %cst_17 : f32 to vector<32x128xf32>
    %37 = arith.maximumf %18, %36 : vector<32x128xf32>
    %cst_18 = arith.constant 0.000000e+00 : f32
    %38 = vector.broadcast %cst_18 : f32 to vector<32x128xf32>
    %39 = arith.maximumf %11, %38 : vector<32x128xf32>
    %cst_19 = arith.constant 0.000000e+00 : f32
    %40 = vector.broadcast %cst_19 : f32 to vector<32x128xf32>
    %41 = arith.maximumf %25, %40 : vector<32x128xf32>
    %42 = tpu.concatenate %37, %39, %41 in 1 : vector<32x128xf32>, vector<32x128xf32>, vector<32x128xf32> -> vector<32x384xf32>
    %c0_20 = arith.constant 0 : index
    %c0_21 = arith.constant 0 : index
    %43 = vector.load %arg2[%c0_20, %c0_21] : memref<384x1536xf32, #tpu.memory_space<vmem>>, vector<384x768xf32>
    %cst_22 = arith.constant dense<0.000000e+00> : vector<32x768xf32>
    %44 = tpu.matmul %42, %43, %cst_22 {dimension_numbers = #tpu.dot_dimension_numbers<[1], [0], [0], [1], [0, 0, 1, 1], [], []>} : vector<32x384xf32>, vector<384x768xf32>, vector<32x768xf32> -> vector<32x768xf32>
    %cst_23 = arith.constant dense<0.000000e+00> : vector<768xf32>
    %45 = vector.multi_reduction <add>, %44, %cst_23 [0] : vector<32x768xf32> to vector<768xf32>
    %46 = vector.shape_cast %45 : vector<768xf32> to vector<1x768xf32>
    %47 = arith.mulf %44, %44 : vector<32x768xf32>
    %cst_24 = arith.constant dense<0.000000e+00> : vector<768xf32>
    %48 = vector.multi_reduction <add>, %47, %cst_24 [0] : vector<32x768xf32> to vector<768xf32>
    %49 = vector.shape_cast %48 : vector<768xf32> to vector<1x768xf32>
    %50 = vector.extract_strided_slice %46 {offsets = [0, 0], sizes = [1, 128], strides = [1, 1]} : vector<1x768xf32> to vector<1x128xf32>
    %51 = vector.extract_strided_slice %46 {offsets = [0, 128], sizes = [1, 128], strides = [1, 1]} : vector<1x768xf32> to vector<1x128xf32>
    %52 = vector.extract_strided_slice %46 {offsets = [0, 256], sizes = [1, 128], strides = [1, 1]} : vector<1x768xf32> to vector<1x128xf32>
    %53 = vector.extract_strided_slice %46 {offsets = [0, 384], sizes = [1, 128], strides = [1, 1]} : vector<1x768xf32> to vector<1x128xf32>
    %54 = vector.extract_strided_slice %46 {offsets = [0, 512], sizes = [1, 128], strides = [1, 1]} : vector<1x768xf32> to vector<1x128xf32>
    %55 = vector.extract_strided_slice %46 {offsets = [0, 640], sizes = [1, 128], strides = [1, 1]} : vector<1x768xf32> to vector<1x128xf32>
    %56 = vector.extract_strided_slice %49 {offsets = [0, 0], sizes = [1, 128], strides = [1, 1]} : vector<1x768xf32> to vector<1x128xf32>
    %57 = vector.extract_strided_slice %49 {offsets = [0, 128], sizes = [1, 128], strides = [1, 1]} : vector<1x768xf32> to vector<1x128xf32>
    %58 = vector.extract_strided_slice %49 {offsets = [0, 256], sizes = [1, 128], strides = [1, 1]} : vector<1x768xf32> to vector<1x128xf32>
    %59 = vector.extract_strided_slice %49 {offsets = [0, 384], sizes = [1, 128], strides = [1, 1]} : vector<1x768xf32> to vector<1x128xf32>
    %60 = vector.extract_strided_slice %49 {offsets = [0, 512], sizes = [1, 128], strides = [1, 1]} : vector<1x768xf32> to vector<1x128xf32>
    %61 = vector.extract_strided_slice %49 {offsets = [0, 640], sizes = [1, 128], strides = [1, 1]} : vector<1x768xf32> to vector<1x128xf32>
    %62 = tpu.concatenate %50, %51, %52, %53, %54, %55, %56, %57, %58, %59, %60, %61 in 0 : vector<1x128xf32>, vector<1x128xf32>, vector<1x128xf32>, vector<1x128xf32>, vector<1x128xf32>, vector<1x128xf32>, vector<1x128xf32>, vector<1x128xf32>, vector<1x128xf32>, vector<1x128xf32>, vector<1x128xf32>, vector<1x128xf32> -> vector<12x128xf32>
    %cst_25 = arith.constant dense<0.000000e+00> : vector<12x128xf32>
    %63 = tpu.matmul %62, %7, %cst_25 {dimension_numbers = #tpu.dot_dimension_numbers<[1], [0], [0], [1], [0, 0, 1, 1], [], []>} : vector<12x128xf32>, vector<128x128xf32>, vector<12x128xf32> -> vector<12x128xf32>
    %64 = vector.extract_strided_slice %63 {offsets = [0, 0], sizes = [1, 128], strides = [1, 1]} : vector<12x128xf32> to vector<1x128xf32>
    %65 = vector.extract_strided_slice %63 {offsets = [1, 0], sizes = [1, 128], strides = [1, 1]} : vector<12x128xf32> to vector<1x128xf32>
    %66 = vector.extract_strided_slice %63 {offsets = [2, 0], sizes = [1, 128], strides = [1, 1]} : vector<12x128xf32> to vector<1x128xf32>
    %67 = vector.extract_strided_slice %63 {offsets = [3, 0], sizes = [1, 128], strides = [1, 1]} : vector<12x128xf32> to vector<1x128xf32>
    %68 = vector.extract_strided_slice %63 {offsets = [4, 0], sizes = [1, 128], strides = [1, 1]} : vector<12x128xf32> to vector<1x128xf32>
    %69 = vector.extract_strided_slice %63 {offsets = [5, 0], sizes = [1, 128], strides = [1, 1]} : vector<12x128xf32> to vector<1x128xf32>
    %70 = tpu.concatenate %64, %65, %66, %67, %68, %69 in 1 : vector<1x128xf32>, vector<1x128xf32>, vector<1x128xf32>, vector<1x128xf32>, vector<1x128xf32>, vector<1x128xf32> -> vector<1x768xf32>
    %cst_26 = arith.constant 0.001953125 : f32
    %71 = vector.broadcast %cst_26 : f32 to vector<1x768xf32>
    %72 = arith.mulf %70, %71 : vector<1x768xf32>
    %73 = vector.extract_strided_slice %63 {offsets = [6, 0], sizes = [1, 128], strides = [1, 1]} : vector<12x128xf32> to vector<1x128xf32>
    %74 = vector.extract_strided_slice %63 {offsets = [7, 0], sizes = [1, 128], strides = [1, 1]} : vector<12x128xf32> to vector<1x128xf32>
    %75 = vector.extract_strided_slice %63 {offsets = [8, 0], sizes = [1, 128], strides = [1, 1]} : vector<12x128xf32> to vector<1x128xf32>
    %76 = vector.extract_strided_slice %63 {offsets = [9, 0], sizes = [1, 128], strides = [1, 1]} : vector<12x128xf32> to vector<1x128xf32>
    %77 = vector.extract_strided_slice %63 {offsets = [10, 0], sizes = [1, 128], strides = [1, 1]} : vector<12x128xf32> to vector<1x128xf32>
    %78 = vector.extract_strided_slice %63 {offsets = [11, 0], sizes = [1, 128], strides = [1, 1]} : vector<12x128xf32> to vector<1x128xf32>
    %79 = tpu.concatenate %73, %74, %75, %76, %77, %78 in 1 : vector<1x128xf32>, vector<1x128xf32>, vector<1x128xf32>, vector<1x128xf32>, vector<1x128xf32>, vector<1x128xf32> -> vector<1x768xf32>
    %cst_27 = arith.constant 0.001953125 : f32
    %80 = vector.broadcast %cst_27 : f32 to vector<1x768xf32>
    %81 = arith.mulf %79, %80 : vector<1x768xf32>
    %82 = arith.mulf %72, %72 : vector<1x768xf32>
    %83 = arith.subf %81, %82 : vector<1x768xf32>
    %cst_28 = arith.constant 0.000000e+00 : f32
    %84 = vector.broadcast %cst_28 : f32 to vector<1x768xf32>
    %85 = arith.maximumf %83, %84 : vector<1x768xf32>
    %86 = vector.extract_strided_slice %8 {offsets = [0, 0], sizes = [1, 768], strides = [1, 1]} : vector<2x1536xf32> to vector<1x768xf32>
    %cst_29 = arith.constant 9.99999974E-6 : f32
    %87 = vector.broadcast %cst_29 : f32 to vector<1x768xf32>
    %88 = arith.addf %85, %87 : vector<1x768xf32>
    %89 = math.rsqrt %88 : vector<1x768xf32>
    %90 = arith.mulf %86, %89 : vector<1x768xf32>
    %91 = vector.extract_strided_slice %8 {offsets = [1, 0], sizes = [1, 768], strides = [1, 1]} : vector<2x1536xf32> to vector<1x768xf32>
    %92 = arith.mulf %72, %90 : vector<1x768xf32>
    %93 = arith.subf %91, %92 : vector<1x768xf32>
    %94 = vector.broadcast %90 : vector<1x768xf32> to vector<32x768xf32>
    %95 = arith.mulf %44, %94 : vector<32x768xf32>
    %96 = vector.broadcast %93 : vector<1x768xf32> to vector<32x768xf32>
    %97 = arith.addf %95, %96 : vector<32x768xf32>
    %98 = vector.extract_strided_slice %97 {offsets = [0, 0], sizes = [32, 128], strides = [1, 1]} : vector<32x768xf32> to vector<32x128xf32>
    %99 = vector.extract_strided_slice %97 {offsets = [0, 128], sizes = [32, 128], strides = [1, 1]} : vector<32x768xf32> to vector<32x128xf32>
    %c0_30 = arith.constant 0 : index
    %c0_31 = arith.constant 0 : index
    %100 = vector.load %arg7[%c0_30, %c0_31] : memref<32x128xf32, #tpu.memory_space<vmem>>, vector<32x128xf32>
    %101 = arith.addf %100, %35 : vector<32x128xf32>
    %102 = arith.addf %101, %98 : vector<32x128xf32>
    %103 = arith.addf %102, %99 : vector<32x128xf32>
    %c0_32 = arith.constant 0 : index
    %c0_33 = arith.constant 0 : index
    %104 = vector.load %arg7[%c0_32, %c0_33] : memref<32x128xf32, #tpu.memory_space<vmem>>, vector<32x128xf32>
    tpu.vector_store %arg7[%c0_32, %c0_33], %103 {strides = array<i32>} : memref<32x128xf32, #tpu.memory_space<vmem>>, vector<32x128xf32>,
    %105 = vector.extract_strided_slice %97 {offsets = [0, 256], sizes = [32, 128], strides = [1, 1]} : vector<32x768xf32> to vector<32x128xf32>
    %106 = vector.extract_strided_slice %97 {offsets = [0, 384], sizes = [32, 128], strides = [1, 1]} : vector<32x768xf32> to vector<32x128xf32>
    %c0_34 = arith.constant 0 : index
    %c0_35 = arith.constant 0 : index
    %107 = vector.load %arg8[%c0_34, %c0_35] : memref<32x128xf32, #tpu.memory_space<vmem>>, vector<32x128xf32>
    %108 = arith.addf %107, %35 : vector<32x128xf32>
    %109 = arith.addf %108, %105 : vector<32x128xf32>
    %110 = arith.addf %109, %106 : vector<32x128xf32>
    %c0_36 = arith.constant 0 : index
    %c0_37 = arith.constant 0 : index
    %111 = vector.load %arg8[%c0_36, %c0_37] : memref<32x128xf32, #tpu.memory_space<vmem>>, vector<32x128xf32>
    tpu.vector_store %arg8[%c0_36, %c0_37], %110 {strides = array<i32>} : memref<32x128xf32, #tpu.memory_space<vmem>>, vector<32x128xf32>,
    %112 = vector.extract_strided_slice %97 {offsets = [0, 512], sizes = [32, 128], strides = [1, 1]} : vector<32x768xf32> to vector<32x128xf32>
    %113 = vector.extract_strided_slice %97 {offsets = [0, 640], sizes = [32, 128], strides = [1, 1]} : vector<32x768xf32> to vector<32x128xf32>
    %c0_38 = arith.constant 0 : index
    %c0_39 = arith.constant 0 : index
    %114 = vector.load %arg6[%c0_38, %c0_39] : memref<32x128xf32, #tpu.memory_space<vmem>>, vector<32x128xf32>
    %115 = arith.addf %114, %35 : vector<32x128xf32>
    %116 = arith.addf %115, %112 : vector<32x128xf32>
    %117 = arith.addf %116, %113 : vector<32x128xf32>
    %c0_40 = arith.constant 0 : index
    %c0_41 = arith.constant 0 : index
    %118 = vector.load %arg6[%c0_40, %c0_41] : memref<32x128xf32, #tpu.memory_space<vmem>>, vector<32x128xf32>
    tpu.vector_store %arg6[%c0_40, %c0_41], %117 {strides = array<i32>} : memref<32x128xf32, #tpu.memory_space<vmem>>, vector<32x128xf32>,
    %c0_42 = arith.constant 0 : index
    %c0_43 = arith.constant 0 : index
    %119 = vector.load %arg7[%c0_42, %c0_43] : memref<32x128xf32, #tpu.memory_space<vmem>>, vector<32x128xf32>
    %120 = vector.extract_strided_slice %119 {offsets = [0, 0], sizes = [16, 128], strides = [1, 1]} : vector<32x128xf32> to vector<16x128xf32>
    %121 = vector.extract_strided_slice %120 {offsets = [0, 0], sizes = [15, 128], strides = [1, 1]} : vector<16x128xf32> to vector<15x128xf32>
    %122 = tpu.concatenate %9, %121 in 0 : vector<1x128xf32>, vector<15x128xf32> -> vector<16x128xf32>
    %123 = vector.extract_strided_slice %119 {offsets = [16, 0], sizes = [16, 128], strides = [1, 1]} : vector<32x128xf32> to vector<16x128xf32>
    %124 = vector.extract_strided_slice %123 {offsets = [0, 0], sizes = [15, 128], strides = [1, 1]} : vector<16x128xf32> to vector<15x128xf32>
    %125 = tpu.concatenate %9, %124 in 0 : vector<1x128xf32>, vector<15x128xf32> -> vector<16x128xf32>
    %126 = tpu.concatenate %122, %125 in 0 : vector<16x128xf32>, vector<16x128xf32> -> vector<32x128xf32>
    %127 = vector.extract_strided_slice %119 {offsets = [0, 0], sizes = [16, 128], strides = [1, 1]} : vector<32x128xf32> to vector<16x128xf32>
    %128 = vector.extract_strided_slice %127 {offsets = [1, 0], sizes = [15, 128], strides = [1, 1]} : vector<16x128xf32> to vector<15x128xf32>
    %129 = tpu.concatenate %128, %9 in 0 : vector<15x128xf32>, vector<1x128xf32> -> vector<16x128xf32>
    %130 = vector.extract_strided_slice %119 {offsets = [16, 0], sizes = [16, 128], strides = [1, 1]} : vector<32x128xf32> to vector<16x128xf32>
    %131 = vector.extract_strided_slice %130 {offsets = [1, 0], sizes = [15, 128], strides = [1, 1]} : vector<16x128xf32> to vector<15x128xf32>
    %132 = tpu.concatenate %131, %9 in 0 : vector<15x128xf32>, vector<1x128xf32> -> vector<16x128xf32>
    %133 = tpu.concatenate %129, %132 in 0 : vector<16x128xf32>, vector<16x128xf32> -> vector<32x128xf32>
    %134 = arith.addf %126, %119 : vector<32x128xf32>
    %135 = arith.addf %134, %133 : vector<32x128xf32>
    %136 = vector.extract_strided_slice %135 {offsets = [0, 0], sizes = [32, 120], strides = [1, 1]} : vector<32x128xf32> to vector<32x120xf32>
    %137 = tpu.concatenate %10, %136 in 1 : vector<32x8xf32>, vector<32x120xf32> -> vector<32x128xf32>
    %138 = vector.extract_strided_slice %135 {offsets = [0, 8], sizes = [32, 120], strides = [1, 1]} : vector<32x128xf32> to vector<32x120xf32>
    %139 = tpu.concatenate %138, %10 in 1 : vector<32x120xf32>, vector<32x8xf32> -> vector<32x128xf32>
    %140 = arith.addf %137, %135 : vector<32x128xf32>
    %141 = arith.addf %140, %139 : vector<32x128xf32>
    %142 = arith.mulf %141, %6 : vector<32x128xf32>
    %143 = arith.addf %119, %142 : vector<32x128xf32>
    %cst_44 = arith.constant 0.000000e+00 : f32
    %144 = vector.broadcast %cst_44 : f32 to vector<32x128xf32>
    %145 = arith.maximumf %126, %144 : vector<32x128xf32>
    %cst_45 = arith.constant 0.000000e+00 : f32
    %146 = vector.broadcast %cst_45 : f32 to vector<32x128xf32>
    %147 = arith.maximumf %119, %146 : vector<32x128xf32>
    %cst_46 = arith.constant 0.000000e+00 : f32
    %148 = vector.broadcast %cst_46 : f32 to vector<32x128xf32>
    %149 = arith.maximumf %133, %148 : vector<32x128xf32>
    %150 = tpu.concatenate %145, %147, %149 in 1 : vector<32x128xf32>, vector<32x128xf32>, vector<32x128xf32> -> vector<32x384xf32>
    %c0_47 = arith.constant 0 : index
    %c768 = arith.constant 768 : index
    %151 = vector.load %arg2[%c0_47, %c768] : memref<384x1536xf32, #tpu.memory_space<vmem>>, vector<384x512xf32>
    %cst_48 = arith.constant dense<0.000000e+00> : vector<32x512xf32>
    %152 = tpu.matmul %150, %151, %cst_48 {dimension_numbers = #tpu.dot_dimension_numbers<[1], [0], [0], [1], [0, 0, 1, 1], [], []>} : vector<32x384xf32>, vector<384x512xf32>, vector<32x512xf32> -> vector<32x512xf32>
    %cst_49 = arith.constant dense<0.000000e+00> : vector<512xf32>
    %153 = vector.multi_reduction <add>, %152, %cst_49 [0] : vector<32x512xf32> to vector<512xf32>
    %154 = vector.shape_cast %153 : vector<512xf32> to vector<1x512xf32>
    %155 = arith.mulf %152, %152 : vector<32x512xf32>
    %cst_50 = arith.constant dense<0.000000e+00> : vector<512xf32>
    %156 = vector.multi_reduction <add>, %155, %cst_50 [0] : vector<32x512xf32> to vector<512xf32>
    %157 = vector.shape_cast %156 : vector<512xf32> to vector<1x512xf32>
    %158 = vector.extract_strided_slice %154 {offsets = [0, 0], sizes = [1, 128], strides = [1, 1]} : vector<1x512xf32> to vector<1x128xf32>
    %159 = vector.extract_strided_slice %154 {offsets = [0, 128], sizes = [1, 128], strides = [1, 1]} : vector<1x512xf32> to vector<1x128xf32>
    %160 = vector.extract_strided_slice %154 {offsets = [0, 256], sizes = [1, 128], strides = [1, 1]} : vector<1x512xf32> to vector<1x128xf32>
    %161 = vector.extract_strided_slice %154 {offsets = [0, 384], sizes = [1, 128], strides = [1, 1]} : vector<1x512xf32> to vector<1x128xf32>
    %162 = vector.extract_strided_slice %157 {offsets = [0, 0], sizes = [1, 128], strides = [1, 1]} : vector<1x512xf32> to vector<1x128xf32>
    %163 = vector.extract_strided_slice %157 {offsets = [0, 128], sizes = [1, 128], strides = [1, 1]} : vector<1x512xf32> to vector<1x128xf32>
    %164 = vector.extract_strided_slice %157 {offsets = [0, 256], sizes = [1, 128], strides = [1, 1]} : vector<1x512xf32> to vector<1x128xf32>
    %165 = vector.extract_strided_slice %157 {offsets = [0, 384], sizes = [1, 128], strides = [1, 1]} : vector<1x512xf32> to vector<1x128xf32>
    %166 = tpu.concatenate %158, %159, %160, %161, %162, %163, %164, %165 in 0 : vector<1x128xf32>, vector<1x128xf32>, vector<1x128xf32>, vector<1x128xf32>, vector<1x128xf32>, vector<1x128xf32>, vector<1x128xf32>, vector<1x128xf32> -> vector<8x128xf32>
    %cst_51 = arith.constant dense<0.000000e+00> : vector<8x128xf32>
    %167 = tpu.matmul %166, %7, %cst_51 {dimension_numbers = #tpu.dot_dimension_numbers<[1], [0], [0], [1], [0, 0, 1, 1], [], []>} : vector<8x128xf32>, vector<128x128xf32>, vector<8x128xf32> -> vector<8x128xf32>
    %168 = vector.extract_strided_slice %167 {offsets = [0, 0], sizes = [1, 128], strides = [1, 1]} : vector<8x128xf32> to vector<1x128xf32>
    %169 = vector.extract_strided_slice %167 {offsets = [1, 0], sizes = [1, 128], strides = [1, 1]} : vector<8x128xf32> to vector<1x128xf32>
    %170 = vector.extract_strided_slice %167 {offsets = [2, 0], sizes = [1, 128], strides = [1, 1]} : vector<8x128xf32> to vector<1x128xf32>
    %171 = vector.extract_strided_slice %167 {offsets = [3, 0], sizes = [1, 128], strides = [1, 1]} : vector<8x128xf32> to vector<1x128xf32>
    %172 = tpu.concatenate %168, %169, %170, %171 in 1 : vector<1x128xf32>, vector<1x128xf32>, vector<1x128xf32>, vector<1x128xf32> -> vector<1x512xf32>
    %cst_52 = arith.constant 0.001953125 : f32
    %173 = vector.broadcast %cst_52 : f32 to vector<1x512xf32>
    %174 = arith.mulf %172, %173 : vector<1x512xf32>
    %175 = vector.extract_strided_slice %167 {offsets = [4, 0], sizes = [1, 128], strides = [1, 1]} : vector<8x128xf32> to vector<1x128xf32>
    %176 = vector.extract_strided_slice %167 {offsets = [5, 0], sizes = [1, 128], strides = [1, 1]} : vector<8x128xf32> to vector<1x128xf32>
    %177 = vector.extract_strided_slice %167 {offsets = [6, 0], sizes = [1, 128], strides = [1, 1]} : vector<8x128xf32> to vector<1x128xf32>
    %178 = vector.extract_strided_slice %167 {offsets = [7, 0], sizes = [1, 128], strides = [1, 1]} : vector<8x128xf32> to vector<1x128xf32>
    %179 = tpu.concatenate %175, %176, %177, %178 in 1 : vector<1x128xf32>, vector<1x128xf32>, vector<1x128xf32>, vector<1x128xf32> -> vector<1x512xf32>
    %cst_53 = arith.constant 0.001953125 : f32
    %180 = vector.broadcast %cst_53 : f32 to vector<1x512xf32>
    %181 = arith.mulf %179, %180 : vector<1x512xf32>
    %182 = arith.mulf %174, %174 : vector<1x512xf32>
    %183 = arith.subf %181, %182 : vector<1x512xf32>
    %cst_54 = arith.constant 0.000000e+00 : f32
    %184 = vector.broadcast %cst_54 : f32 to vector<1x512xf32>
    %185 = arith.maximumf %183, %184 : vector<1x512xf32>
    %186 = vector.extract_strided_slice %8 {offsets = [0, 768], sizes = [1, 512], strides = [1, 1]} : vector<2x1536xf32> to vector<1x512xf32>
    %cst_55 = arith.constant 9.99999974E-6 : f32
    %187 = vector.broadcast %cst_55 : f32 to vector<1x512xf32>
    %188 = arith.addf %185, %187 : vector<1x512xf32>
    %189 = math.rsqrt %188 : vector<1x512xf32>
    %190 = arith.mulf %186, %189 : vector<1x512xf32>
    %191 = vector.extract_strided_slice %8 {offsets = [1, 768], sizes = [1, 512], strides = [1, 1]} : vector<2x1536xf32> to vector<1x512xf32>
    %192 = arith.mulf %174, %190 : vector<1x512xf32>
    %193 = arith.subf %191, %192 : vector<1x512xf32>
    %194 = vector.broadcast %190 : vector<1x512xf32> to vector<32x512xf32>
    %195 = arith.mulf %152, %194 : vector<32x512xf32>
    %196 = vector.broadcast %193 : vector<1x512xf32> to vector<32x512xf32>
    %197 = arith.addf %195, %196 : vector<32x512xf32>
    %198 = vector.extract_strided_slice %197 {offsets = [0, 0], sizes = [32, 128], strides = [1, 1]} : vector<32x512xf32> to vector<32x128xf32>
    %199 = vector.extract_strided_slice %197 {offsets = [0, 128], sizes = [32, 128], strides = [1, 1]} : vector<32x512xf32> to vector<32x128xf32>
    %c0_56 = arith.constant 0 : index
    %c0_57 = arith.constant 0 : index
    %200 = vector.load %arg8[%c0_56, %c0_57] : memref<32x128xf32, #tpu.memory_space<vmem>>, vector<32x128xf32>
    %201 = arith.addf %200, %143 : vector<32x128xf32>
    %202 = arith.addf %201, %198 : vector<32x128xf32>
    %203 = arith.addf %202, %199 : vector<32x128xf32>
    %c0_58 = arith.constant 0 : index
    %c0_59 = arith.constant 0 : index
    %204 = vector.load %arg8[%c0_58, %c0_59] : memref<32x128xf32, #tpu.memory_space<vmem>>, vector<32x128xf32>
    tpu.vector_store %arg8[%c0_58, %c0_59], %203 {strides = array<i32>} : memref<32x128xf32, #tpu.memory_space<vmem>>, vector<32x128xf32>,
    %205 = vector.extract_strided_slice %197 {offsets = [0, 256], sizes = [32, 128], strides = [1, 1]} : vector<32x512xf32> to vector<32x128xf32>
    %206 = vector.extract_strided_slice %197 {offsets = [0, 384], sizes = [32, 128], strides = [1, 1]} : vector<32x512xf32> to vector<32x128xf32>
    %c0_60 = arith.constant 0 : index
    %c0_61 = arith.constant 0 : index
    %207 = vector.load %arg6[%c0_60, %c0_61] : memref<32x128xf32, #tpu.memory_space<vmem>>, vector<32x128xf32>
    %208 = arith.addf %207, %143 : vector<32x128xf32>
    %209 = arith.addf %208, %205 : vector<32x128xf32>
    %210 = arith.addf %209, %206 : vector<32x128xf32>
    %c0_62 = arith.constant 0 : index
    %c0_63 = arith.constant 0 : index
    %211 = vector.load %arg6[%c0_62, %c0_63] : memref<32x128xf32, #tpu.memory_space<vmem>>, vector<32x128xf32>
    tpu.vector_store %arg6[%c0_62, %c0_63], %210 {strides = array<i32>} : memref<32x128xf32, #tpu.memory_space<vmem>>, vector<32x128xf32>,
    %c0_64 = arith.constant 0 : index
    %c0_65 = arith.constant 0 : index
    %212 = vector.load %arg8[%c0_64, %c0_65] : memref<32x128xf32, #tpu.memory_space<vmem>>, vector<32x128xf32>
    %213 = vector.extract_strided_slice %212 {offsets = [0, 0], sizes = [16, 128], strides = [1, 1]} : vector<32x128xf32> to vector<16x128xf32>
    %214 = vector.extract_strided_slice %213 {offsets = [0, 0], sizes = [15, 128], strides = [1, 1]} : vector<16x128xf32> to vector<15x128xf32>
    %215 = tpu.concatenate %9, %214 in 0 : vector<1x128xf32>, vector<15x128xf32> -> vector<16x128xf32>
    %216 = vector.extract_strided_slice %212 {offsets = [16, 0], sizes = [16, 128], strides = [1, 1]} : vector<32x128xf32> to vector<16x128xf32>
    %217 = vector.extract_strided_slice %216 {offsets = [0, 0], sizes = [15, 128], strides = [1, 1]} : vector<16x128xf32> to vector<15x128xf32>
    %218 = tpu.concatenate %9, %217 in 0 : vector<1x128xf32>, vector<15x128xf32> -> vector<16x128xf32>
    %219 = tpu.concatenate %215, %218 in 0 : vector<16x128xf32>, vector<16x128xf32> -> vector<32x128xf32>
    %220 = vector.extract_strided_slice %212 {offsets = [0, 0], sizes = [16, 128], strides = [1, 1]} : vector<32x128xf32> to vector<16x128xf32>
    %221 = vector.extract_strided_slice %220 {offsets = [1, 0], sizes = [15, 128], strides = [1, 1]} : vector<16x128xf32> to vector<15x128xf32>
    %222 = tpu.concatenate %221, %9 in 0 : vector<15x128xf32>, vector<1x128xf32> -> vector<16x128xf32>
    %223 = vector.extract_strided_slice %212 {offsets = [16, 0], sizes = [16, 128], strides = [1, 1]} : vector<32x128xf32> to vector<16x128xf32>
    %224 = vector.extract_strided_slice %223 {offsets = [1, 0], sizes = [15, 128], strides = [1, 1]} : vector<16x128xf32> to vector<15x128xf32>
    %225 = tpu.concatenate %224, %9 in 0 : vector<15x128xf32>, vector<1x128xf32> -> vector<16x128xf32>
    %226 = tpu.concatenate %222, %225 in 0 : vector<16x128xf32>, vector<16x128xf32> -> vector<32x128xf32>
    %227 = arith.addf %219, %212 : vector<32x128xf32>
    %228 = arith.addf %227, %226 : vector<32x128xf32>
    %229 = vector.extract_strided_slice %228 {offsets = [0, 0], sizes = [32, 120], strides = [1, 1]} : vector<32x128xf32> to vector<32x120xf32>
    %230 = tpu.concatenate %10, %229 in 1 : vector<32x8xf32>, vector<32x120xf32> -> vector<32x128xf32>
    %231 = vector.extract_strided_slice %228 {offsets = [0, 8], sizes = [32, 120], strides = [1, 1]} : vector<32x128xf32> to vector<32x120xf32>
    %232 = tpu.concatenate %231, %10 in 1 : vector<32x120xf32>, vector<32x8xf32> -> vector<32x128xf32>
    %233 = arith.addf %230, %228 : vector<32x128xf32>
    %234 = arith.addf %233, %232 : vector<32x128xf32>
    %235 = arith.mulf %234, %6 : vector<32x128xf32>
    %236 = arith.addf %212, %235 : vector<32x128xf32>
    %cst_66 = arith.constant 0.000000e+00 : f32
    %237 = vector.broadcast %cst_66 : f32 to vector<32x128xf32>
    %238 = arith.maximumf %219, %237 : vector<32x128xf32>
    %cst_67 = arith.constant 0.000000e+00 : f32
    %239 = vector.broadcast %cst_67 : f32 to vector<32x128xf32>
    %240 = arith.maximumf %212, %239 : vector<32x128xf32>
    %cst_68 = arith.constant 0.000000e+00 : f32
    %241 = vector.broadcast %cst_68 : f32 to vector<32x128xf32>
    %242 = arith.maximumf %226, %241 : vector<32x128xf32>
    %243 = tpu.concatenate %238, %240, %242 in 1 : vector<32x128xf32>, vector<32x128xf32>, vector<32x128xf32> -> vector<32x384xf32>
    %c0_69 = arith.constant 0 : index
    %c1280 = arith.constant 1280 : index
    %244 = vector.load %arg2[%c0_69, %c1280] : memref<384x1536xf32, #tpu.memory_space<vmem>>, vector<384x256xf32>
    %cst_70 = arith.constant dense<0.000000e+00> : vector<32x256xf32>
    %245 = tpu.matmul %243, %244, %cst_70 {dimension_numbers = #tpu.dot_dimension_numbers<[1], [0], [0], [1], [0, 0, 1, 1], [], []>} : vector<32x384xf32>, vector<384x256xf32>, vector<32x256xf32> -> vector<32x256xf32>
    %cst_71 = arith.constant dense<0.000000e+00> : vector<256xf32>
    %246 = vector.multi_reduction <add>, %245, %cst_71 [0] : vector<32x256xf32> to vector<256xf32>
    %247 = vector.shape_cast %246 : vector<256xf32> to vector<1x256xf32>
    %248 = arith.mulf %245, %245 : vector<32x256xf32>
    %cst_72 = arith.constant dense<0.000000e+00> : vector<256xf32>
    %249 = vector.multi_reduction <add>, %248, %cst_72 [0] : vector<32x256xf32> to vector<256xf32>
    %250 = vector.shape_cast %249 : vector<256xf32> to vector<1x256xf32>
    %251 = vector.extract_strided_slice %247 {offsets = [0, 0], sizes = [1, 128], strides = [1, 1]} : vector<1x256xf32> to vector<1x128xf32>
    %252 = vector.extract_strided_slice %247 {offsets = [0, 128], sizes = [1, 128], strides = [1, 1]} : vector<1x256xf32> to vector<1x128xf32>
    %253 = vector.extract_strided_slice %250 {offsets = [0, 0], sizes = [1, 128], strides = [1, 1]} : vector<1x256xf32> to vector<1x128xf32>
    %254 = vector.extract_strided_slice %250 {offsets = [0, 128], sizes = [1, 128], strides = [1, 1]} : vector<1x256xf32> to vector<1x128xf32>
    %255 = tpu.concatenate %251, %252, %253, %254 in 0 : vector<1x128xf32>, vector<1x128xf32>, vector<1x128xf32>, vector<1x128xf32> -> vector<4x128xf32>
    %cst_73 = arith.constant dense<0.000000e+00> : vector<4x128xf32>
    %256 = tpu.matmul %255, %7, %cst_73 {dimension_numbers = #tpu.dot_dimension_numbers<[1], [0], [0], [1], [0, 0, 1, 1], [], []>} : vector<4x128xf32>, vector<128x128xf32>, vector<4x128xf32> -> vector<4x128xf32>
    %257 = vector.extract_strided_slice %256 {offsets = [0, 0], sizes = [1, 128], strides = [1, 1]} : vector<4x128xf32> to vector<1x128xf32>
    %258 = vector.extract_strided_slice %256 {offsets = [1, 0], sizes = [1, 128], strides = [1, 1]} : vector<4x128xf32> to vector<1x128xf32>
    %259 = tpu.concatenate %257, %258 in 1 : vector<1x128xf32>, vector<1x128xf32> -> vector<1x256xf32>
    %cst_74 = arith.constant 0.001953125 : f32
    %260 = vector.broadcast %cst_74 : f32 to vector<1x256xf32>
    %261 = arith.mulf %259, %260 : vector<1x256xf32>
    %262 = vector.extract_strided_slice %256 {offsets = [2, 0], sizes = [1, 128], strides = [1, 1]} : vector<4x128xf32> to vector<1x128xf32>
    %263 = vector.extract_strided_slice %256 {offsets = [3, 0], sizes = [1, 128], strides = [1, 1]} : vector<4x128xf32> to vector<1x128xf32>
    %264 = tpu.concatenate %262, %263 in 1 : vector<1x128xf32>, vector<1x128xf32> -> vector<1x256xf32>
    %cst_75 = arith.constant 0.001953125 : f32
    %265 = vector.broadcast %cst_75 : f32 to vector<1x256xf32>
    %266 = arith.mulf %264, %265 : vector<1x256xf32>
    %267 = arith.mulf %261, %261 : vector<1x256xf32>
    %268 = arith.subf %266, %267 : vector<1x256xf32>
    %cst_76 = arith.constant 0.000000e+00 : f32
    %269 = vector.broadcast %cst_76 : f32 to vector<1x256xf32>
    %270 = arith.maximumf %268, %269 : vector<1x256xf32>
    %271 = vector.extract_strided_slice %8 {offsets = [0, 1280], sizes = [1, 256], strides = [1, 1]} : vector<2x1536xf32> to vector<1x256xf32>
    %cst_77 = arith.constant 9.99999974E-6 : f32
    %272 = vector.broadcast %cst_77 : f32 to vector<1x256xf32>
    %273 = arith.addf %270, %272 : vector<1x256xf32>
    %274 = math.rsqrt %273 : vector<1x256xf32>
    %275 = arith.mulf %271, %274 : vector<1x256xf32>
    %276 = vector.extract_strided_slice %8 {offsets = [1, 1280], sizes = [1, 256], strides = [1, 1]} : vector<2x1536xf32> to vector<1x256xf32>
    %277 = arith.mulf %261, %275 : vector<1x256xf32>
    %278 = arith.subf %276, %277 : vector<1x256xf32>
    %279 = vector.broadcast %275 : vector<1x256xf32> to vector<32x256xf32>
    %280 = arith.mulf %245, %279 : vector<32x256xf32>
    %281 = vector.broadcast %278 : vector<1x256xf32> to vector<32x256xf32>
    %282 = arith.addf %280, %281 : vector<32x256xf32>
    %283 = vector.extract_strided_slice %282 {offsets = [0, 0], sizes = [32, 128], strides = [1, 1]} : vector<32x256xf32> to vector<32x128xf32>
    %284 = vector.extract_strided_slice %282 {offsets = [0, 128], sizes = [32, 128], strides = [1, 1]} : vector<32x256xf32> to vector<32x128xf32>
    %c0_78 = arith.constant 0 : index
    %c0_79 = arith.constant 0 : index
    %285 = vector.load %arg6[%c0_78, %c0_79] : memref<32x128xf32, #tpu.memory_space<vmem>>, vector<32x128xf32>
    %286 = arith.addf %285, %236 : vector<32x128xf32>
    %287 = arith.addf %286, %283 : vector<32x128xf32>
    %288 = arith.addf %287, %284 : vector<32x128xf32>
    %c0_80 = arith.constant 0 : index
    %c0_81 = arith.constant 0 : index
    %289 = vector.load %arg6[%c0_80, %c0_81] : memref<32x128xf32, #tpu.memory_space<vmem>>, vector<32x128xf32>
    tpu.vector_store %arg6[%c0_80, %c0_81], %288 {strides = array<i32>} : memref<32x128xf32, #tpu.memory_space<vmem>>, vector<32x128xf32>,
    return
  }
  func.func @transform_0(%arg0: i32) -> (i32, i32) {
    %c0_i32 = arith.constant 0 : i32
    %c0_i32_0 = arith.constant 0 : i32
    %c0_i32_1 = arith.constant 0 : i32
    return %c0_i32, %c0_i32_0 : i32, i32
  }
  func.func @transform_1(%arg0: i32) -> (i32, i32) {
    %c0_i32 = arith.constant 0 : i32
    %c0_i32_0 = arith.constant 0 : i32
    %c0_i32_1 = arith.constant 0 : i32
    return %c0_i32, %c0_i32_0 : i32, i32
  }
  func.func @transform_2(%arg0: i32) -> (i32, i32) {
    %c0_i32 = arith.constant 0 : i32
    %c0_i32_0 = arith.constant 0 : i32
    %c0_i32_1 = arith.constant 0 : i32
    return %c0_i32, %c0_i32_0 : i32, i32
  }
  func.func @transform_3(%arg0: i32) -> (i32, i32) {
    %c0_i32 = arith.constant 0 : i32
    %c0_i32_0 = arith.constant 0 : i32
    %c0_i32_1 = arith.constant 0 : i32
    return %c0_i32, %c0_i32_0 : i32, i32
  }
  func.func @transform_4(%arg0: i32) -> (i32, i32) {
    %c0_i32 = arith.constant 0 : i32
    %c0_i32_0 = arith.constant 0 : i32
    %c0_i32_1 = arith.constant 0 : i32
    return %c0_i32, %c0_i32_0 : i32, i32
  }
  func.func @transform_5(%arg0: i32) -> (i32, i32) {
    %c0_i32 = arith.constant 0 : i32
    %c0_i32_0 = arith.constant 0 : i32
    %c0_i32_1 = arith.constant 0 : i32
    return %c0_i32, %c0_i32_0 : i32, i32
  }
}

</mosaic_0001>

<llo_original>
// kernel: tile.142
$region0: #{tile.142}
  #allocation2 [shape = 's32[1]{0}', space=sflag, size = 0x4, scoped, tag = 'scoped memory for tile.142']
  %s0 = inlined_call_operand.hbm [shape: f32[8], index: 0, kind: input, shape index: {}]
  %s1 = inlined_call_operand.vmem [shape: f32[16,8], index: 1, kind: output, shape index: {}]
  $region1: #{tile.142} parent=0
    #allocation0 [shape = 'u8[512]{0}', space=vmem, size = 0x400, scoped, tag = 'operand span for operand 0']
    #allocation1 [shape = 's32[1]{0}', space=sflag, size = 0x4, scoped, tag = 'scoped memory for tile.142']
    %2 = vsyncpa [#allocation1], 0
    // Predicated region
    $region2: #{tile.142} parent=1 // pred_check
      _
    $region3: #{tile.142} parent=1 // pred_check_branch
      %4 = sbr.rel (0) target = $region5
    $region4: #{tile.142} parent=1 // pred_region
      %s6 = ssub.s32 16, 16
      %7 = vsyncadd [#allocation1], %s6
      %s9 = sshll.u32 [#allocation0], 4
      %s10 = int_to_ptr.vmem [resolvable:$true] %s9
      %12 = dma.hbm_to_vmem [thread:$0]  %s0, 16, %s10, [#allocation1]
    $region5: #{tile.142} parent=1 // pred_fallthru
      _
    // Predicated region
    $region6: #{tile.142} parent=1 // pred_check
      _
    $region7: #{tile.142} parent=1 // pred_check_branch
      %14 = sbr.rel (0) target = $region9
    $region8: #{tile.142} parent=1 // pred_region
      %15 = dma.done [#allocation1], 16
    $region9: #{tile.142} parent=1 // pred_fallthru
      _
    %v16 = vld [vmem:[#allocation0] ss:$0 sm:$0xff]
    %17 = vst [vmem:[%s1] sm:$0xff] %v16
    %s18 = scalar_lea.vmem %s1, 8
    %19 = vst [vmem:[%s18] sm:$0xff] %v16
    %20 = vsyncpa [#allocation1], 1

// kernel: tile.143
$region0: #{tile.143}
  %s0 = inlined_call_operand.vmem [shape: f32[16,8], index: 0, kind: input, shape index: {}]
  %s1 = inlined_call_operand.vmem [shape: f32[128], index: 1, kind: output, shape index: {}]
  $region1: #{tile.143} parent=0
    #allocation0 [shape = 'u8[4096]{0}', space=vmem, size = 0x1000, scoped, tag = 'scoped mem for output reshape']
    %v2 = vld [vmem:[%s0] sm:$0x1]
    %vm3 = vcmask 64512
    %4 = vst.msk [vmem:[#allocation0] sm:$0x1] %vm3, %v2
    %s5 = scalar_lea.vmem %s0, 15
    %v6 = vld [vmem:[%s5] sm:$0x1]
    %7 = vrot.lane.b32.xlu0 %v6, 120
    %v8 = vpop.permute.xlu0 %7
    %vm9 = vcmask 1048512
    %10 = vst.msk [vmem:[#allocation0] sm:$0x1] %vm9, %v8
    %s11 = scalar_lea.vmem %s0, 14
    %v12 = vld [vmem:[%s11] sm:$0x1]
    %13 = vrot.lane.b32.xlu0 %v12, 112
    %v14 = vpop.permute.xlu0 %13
    %vm15 = vcmask 982912
    %16 = vst.msk [vmem:[#allocation0] sm:$0x1] %vm15, %v14
    %s17 = scalar_lea.vmem %s0, 13
    %v18 = vld [vmem:[%s17] sm:$0x1]
    %19 = vrot.lane.b32.xlu0 %v18, 104
    %v20 = vpop.permute.xlu0 %19
    %vm21 = vcmask 917312
    %22 = vst.msk [vmem:[#allocation0] sm:$0x1] %vm21, %v20
    %s23 = scalar_lea.vmem %s0, 12
    %v24 = vld [vmem:[%s23] sm:$0x1]
    %25 = vrot.lane.b32.xlu0 %v24, 96
    %v26 = vpop.permute.xlu0 %25
    %vm27 = vcmask 851712
    %28 = vst.msk [vmem:[#allocation0] sm:$0x1] %vm27, %v26
    %s29 = scalar_lea.vmem %s0, 11
    %v30 = vld [vmem:[%s29] sm:$0x1]
    %31 = vrot.lane.b32.xlu0 %v30, 88
    %v32 = vpop.permute.xlu0 %31
    %vm33 = vcmask 786112
    %34 = vst.msk [vmem:[#allocation0] sm:$0x1] %vm33, %v32
    %s35 = scalar_lea.vmem %s0, 10
    %v36 = vld [vmem:[%s35] sm:$0x1]
    %37 = vrot.lane.b32.xlu0 %v36, 80
    %v38 = vpop.permute.xlu0 %37
    %vm39 = vcmask 720512
    %40 = vst.msk [vmem:[#allocation0] sm:$0x1] %vm39, %v38
    %s41 = scalar_lea.vmem %s0, 9
    %v42 = vld [vmem:[%s41] sm:$0x1]
    %43 = vrot.lane.b32.xlu0 %v42, 72
    %v44 = vpop.permute.xlu0 %43
    %vm45 = vcmask 654912
    %46 = vst.msk [vmem:[#allocation0] sm:$0x1] %vm45, %v44
    %s47 = scalar_lea.vmem %s0, 8
    %v48 = vld [vmem:[%s47] sm:$0x1]
    %49 = vrot.lane.b32.xlu0 %v48, 64
    %v50 = vpop.permute.xlu0 %49
    %vm51 = vcmask 589312
    %52 = vst.msk [vmem:[#allocation0] sm:$0x1] %vm51, %v50
    %s53 = scalar_lea.vmem %s0, 7
    %v54 = vld [vmem:[%s53] sm:$0x1]
    %55 = vrot.lane.b32.xlu0 %v54, 56
    %v56 = vpop.permute.xlu0 %55
    %vm57 = vcmask 523712
    %58 = vst.msk [vmem:[#allocation0] sm:$0x1] %vm57, %v56
    %s59 = scalar_lea.vmem %s0, 6
    %v60 = vld [vmem:[%s59] sm:$0x1]
    %61 = vrot.lane.b32.xlu0 %v60, 48
    %v62 = vpop.permute.xlu0 %61
    %vm63 = vcmask 458112
    %64 = vst.msk [vmem:[#allocation0] sm:$0x1] %vm63, %v62
    %s65 = scalar_lea.vmem %s0, 5
    %v66 = vld [vmem:[%s65] sm:$0x1]
    %67 = vrot.lane.b32.xlu0 %v66, 40
    %v68 = vpop.permute.xlu0 %67
    %vm69 = vcmask 392512
    %70 = vst.msk [vmem:[#allocation0] sm:$0x1] %vm69, %v68
    %s71 = scalar_lea.vmem %s0, 4
    %v72 = vld [vmem:[%s71] sm:$0x1]
    %73 = vrot.lane.b32.xlu0 %v72, 32
    %v74 = vpop.permute.xlu0 %73
    %vm75 = vcmask 326912
    %76 = vst.msk [vmem:[#allocation0] sm:$0x1] %vm75, %v74
    %s77 = scalar_lea.vmem %s0, 3
    %v78 = vld [vmem:[%s77] sm:$0x1]
    %79 = vrot.lane.b32.xlu0 %v78, 24
    %v80 = vpop.permute.xlu0 %79
    %vm81 = vcmask 261312
    %82 = vst.msk [vmem:[#allocation0] sm:$0x1] %vm81, %v80
    %s83 = scalar_lea.vmem %s0, 2
    %v84 = vld [vmem:[%s83] sm:$0x1]
    %85 = vrot.lane.b32.xlu0 %v84, 16
    %v86 = vpop.permute.xlu0 %85
    %vm87 = vcmask 195712
    %88 = vst.msk [vmem:[#allocation0] sm:$0x1] %vm87, %v86
    %s89 = scalar_lea.vmem %s0, 1
    %v90 = vld [vmem:[%s89] sm:$0x1]
    %91 = vrot.lane.b32.xlu0 %v90, 8
    %v92 = vpop.permute.xlu0 %91
    %vm93 = vcmask 130112
    %94 = vst.msk [vmem:[#allocation0] sm:$0x1] %vm93, %v92
    %s96 = sshllo.u32 0, 1
    %v98 = vld [vmem:[#allocation0] sm:%s96]
    %s99 = sshllo.u32 0, 1
    %100 = vst [vmem:[%s1] sm:%s99] %v98

// kernel: custom-call.1
$region0: #{custom-call.1}
  %s0 = inlined_call_operand.vmem [shape: f32[1536], index: 0, kind: output, shape index: {}]

// kernel: tile.247
$region0: #{tile.247}
  %s0 = inlined_call_operand.vmem [shape: f32[2,1,1,16,16,8], index: 0, kind: input, shape index: {}]
  %s1 = inlined_call_operand.vmem [shape: f32[32,128], index: 1, kind: output, shape index: {}]
  $region1: #{tile.247} parent=0
    #allocation0 [shape = 'u8[524288]{0}', space=vmem, size = 0x80000, scoped, tag = 'scoped mem for input reshape']
    %s3 = sshllo.u32 0, 2
    %s4 = smul.addr 2, 127
    %s5 = scalar_lea.vmem %s0, %s4
    %v6 = vld [vmem:[%s5] sm:%s3]
    %s7 = scalar_lea.vmem [#allocation0], 1016
    %8 = vst [vmem:[%s7] sm:%s3] %v6
    %s9 = smul.addr 2, 126
    %s10 = scalar_lea.vmem %s0, %s9
    %v11 = vld [vmem:[%s10] sm:%s3]
    %s12 = scalar_lea.vmem [#allocation0], 1008
    %13 = vst [vmem:[%s12] sm:%s3] %v11
    %s14 = smul.addr 2, 125
    %s15 = scalar_lea.vmem %s0, %s14
    %v16 = vld [vmem:[%s15] sm:%s3]
    %s17 = scalar_lea.vmem [#allocation0], 1000
    %18 = vst [vmem:[%s17] sm:%s3] %v16
    %s19 = smul.addr 2, 124
    %s20 = scalar_lea.vmem %s0, %s19
    %v21 = vld [vmem:[%s20] sm:%s3]
    %s22 = scalar_lea.vmem [#allocation0], 992
    %23 = vst [vmem:[%s22] sm:%s3] %v21
    %s24 = smul.addr 2, 123
    %s25 = scalar_lea.vmem %s0, %s24
    %v26 = vld [vmem:[%s25] sm:%s3]
    %s27 = scalar_lea.vmem [#allocation0], 984
    %28 = vst [vmem:[%s27] sm:%s3] %v26
    %s29 = smul.addr 2, 122
    %s30 = scalar_lea.vmem %s0, %s29
    %v31 = vld [vmem:[%s30] sm:%s3]
    %s32 = scalar_lea.vmem [#allocation0], 976
    %33 = vst [vmem:[%s32] sm:%s3] %v31
    %s34 = smul.addr 2, 121
    %s35 = scalar_lea.vmem %s0, %s34
    %v36 = vld [vmem:[%s35] sm:%s3]
    %s37 = scalar_lea.vmem [#allocation0], 968
    %38 = vst [vmem:[%s37] sm:%s3] %v36
    %s39 = smul.addr 2, 120
    %s40 = scalar_lea.vmem %s0, %s39
    %v41 = vld [vmem:[%s40] sm:%s3]
    %s42 = scalar_lea.vmem [#allocation0], 960
    %43 = vst [vmem:[%s42] sm:%s3] %v41
    %s44 = smul.addr 2, 119
    %s45 = scalar_lea.vmem %s0, %s44
    %v46 = vld [vmem:[%s45] sm:%s3]
    %s47 = scalar_lea.vmem [#allocation0], 952
    %48 = vst [vmem:[%s47] sm:%s3] %v46
    %s49 = smul.addr 2, 118
    %s50 = scalar_lea.vmem %s0, %s49
    %v51 = vld [vmem:[%s50] sm:%s3]
    %s52 = scalar_lea.vmem [#allocation0], 944
    %53 = vst [vmem:[%s52] sm:%s3] %v51
    %s54 = smul.addr 2, 117
    %s55 = scalar_lea.vmem %s0, %s54
    %v56 = vld [vmem:[%s55] sm:%s3]
    %s57 = scalar_lea.vmem [#allocation0], 936
    %58 = vst [vmem:[%s57] sm:%s3] %v56
    %s59 = smul.addr 2, 116
    %s60 = scalar_lea.vmem %s0, %s59
    %v61 = vld [vmem:[%s60] sm:%s3]
    %s62 = scalar_lea.vmem [#allocation0], 928
    %63 = vst [vmem:[%s62] sm:%s3] %v61
    %s64 = smul.addr 2, 115
    %s65 = scalar_lea.vmem %s0, %s64
    %v66 = vld [vmem:[%s65] sm:%s3]
    %s67 = scalar_lea.vmem [#allocation0], 920
    %68 = vst [vmem:[%s67] sm:%s3] %v66
    %s69 = smul.addr 2, 114
    %s70 = scalar_lea.vmem %s0, %s69
    %v71 = vld [vmem:[%s70] sm:%s3]
    %s72 = scalar_lea.vmem [#allocation0], 912
    %73 = vst [vmem:[%s72] sm:%s3] %v71
    %s74 = smul.addr 2, 113
    %s75 = scalar_lea.vmem %s0, %s74
    %v76 = vld [vmem:[%s75] sm:%s3]
    %s77 = scalar_lea.vmem [#allocation0], 904
    %78 = vst [vmem:[%s77] sm:%s3] %v76
    %s79 = smul.addr 2, 112
    %s80 = scalar_lea.vmem %s0, %s79
    %v81 = vld [vmem:[%s80] sm:%s3]
    %s82 = scalar_lea.vmem [#allocation0], 896
    %83 = vst [vmem:[%s82] sm:%s3] %v81
    %s84 = smul.addr 2, 111
    %s85 = scalar_lea.vmem %s0, %s84
    %v86 = vld [vmem:[%s85] sm:%s3]
    %s87 = scalar_lea.vmem [#allocation0], 888
    %88 = vst [vmem:[%s87] sm:%s3] %v86
    %s89 = smul.addr 2, 110
    %s90 = scalar_lea.vmem %s0, %s89
    %v91 = vld [vmem:[%s90] sm:%s3]
    %s92 = scalar_lea.vmem [#allocation0], 880
    %93 = vst [vmem:[%s92] sm:%s3] %v91
    %s94 = smul.addr 2, 109
    %s95 = scalar_lea.vmem %s0, %s94
    %v96 = vld [vmem:[%s95] sm:%s3]
    %s97 = scalar_lea.vmem [#allocation0], 872
    %98 = vst [vmem:[%s97] sm:%s3] %v96
    %s99 = smul.addr 2, 108
    %s100 = scalar_lea.vmem %s0, %s99
    %v101 = vld [vmem:[%s100] sm:%s3]
    %s102 = scalar_lea.vmem [#allocation0], 864
    %103 = vst [vmem:[%s102] sm:%s3] %v101
    %s104 = smul.addr 2, 107
    %s105 = scalar_lea.vmem %s0, %s104
    %v106 = vld [vmem:[%s105] sm:%s3]
    %s107 = scalar_lea.vmem [#allocation0], 856
    %108 = vst [vmem:[%s107] sm:%s3] %v106
    %s109 = smul.addr 2, 106
    %s110 = scalar_lea.vmem %s0, %s109
    %v111 = vld [vmem:[%s110] sm:%s3]
    %s112 = scalar_lea.vmem [#allocation0], 848
    %113 = vst [vmem:[%s112] sm:%s3] %v111
    %s114 = smul.addr 2, 105
    %s115 = scalar_lea.vmem %s0, %s114
    %v116 = vld [vmem:[%s115] sm:%s3]
    %s117 = scalar_lea.vmem [#allocation0], 840
    %118 = vst [vmem:[%s117] sm:%s3] %v116
    %s119 = smul.addr 2, 104
    %s120 = scalar_lea.vmem %s0, %s119
    %v121 = vld [vmem:[%s120] sm:%s3]
    %s122 = scalar_lea.vmem [#allocation0], 832
    %123 = vst [vmem:[%s122] sm:%s3] %v121
    %s124 = smul.addr 2, 103
    %s125 = scalar_lea.vmem %s0, %s124
    %v126 = vld [vmem:[%s125] sm:%s3]
    %s127 = scalar_lea.vmem [#allocation0], 824
    %128 = vst [vmem:[%s127] sm:%s3] %v126
    %s129 = smul.addr 2, 102
    %s130 = scalar_lea.vmem %s0, %s129
    %v131 = vld [vmem:[%s130] sm:%s3]
    %s132 = scalar_lea.vmem [#allocation0], 816
    %133 = vst [vmem:[%s132] sm:%s3] %v131
    %s134 = smul.addr 2, 101
    %s135 = scalar_lea.vmem %s0, %s134
    %v136 = vld [vmem:[%s135] sm:%s3]
    %s137 = scalar_lea.vmem [#allocation0], 808
    %138 = vst [vmem:[%s137] sm:%s3] %v136
    %s139 = smul.addr 2, 100
    %s140 = scalar_lea.vmem %s0, %s139
    %v141 = vld [vmem:[%s140] sm:%s3]
    %s142 = scalar_lea.vmem [#allocation0], 800
    %143 = vst [vmem:[%s142] sm:%s3] %v141
    %s144 = smul.addr 2, 99
    %s145 = scalar_lea.vmem %s0, %s144
    %v146 = vld [vmem:[%s145] sm:%s3]
    %s147 = scalar_lea.vmem [#allocation0], 792
    %148 = vst [vmem:[%s147] sm:%s3] %v146
    %s149 = smul.addr 2, 98
    %s150 = scalar_lea.vmem %s0, %s149
    %v151 = vld [vmem:[%s150] sm:%s3]
    %s152 = scalar_lea.vmem [#allocation0], 784
    %153 = vst [vmem:[%s152] sm:%s3] %v151
    %s154 = smul.addr 2, 97
    %s155 = scalar_lea.vmem %s0, %s154
    %v156 = vld [vmem:[%s155] sm:%s3]
    %s157 = scalar_lea.vmem [#allocation0], 776
    %158 = vst [vmem:[%s157] sm:%s3] %v156
    %s159 = smul.addr 2, 96
    %s160 = scalar_lea.vmem %s0, %s159
    %v161 = vld [vmem:[%s160] sm:%s3]
    %s162 = scalar_lea.vmem [#allocation0], 768
    %163 = vst [vmem:[%s162] sm:%s3] %v161
    %s164 = smul.addr 2, 95
    %s165 = scalar_lea.vmem %s0, %s164
    %v166 = vld [vmem:[%s165] sm:%s3]
    %s167 = scalar_lea.vmem [#allocation0], 760
    %168 = vst [vmem:[%s167] sm:%s3] %v166
    %s169 = smul.addr 2, 94
    %s170 = scalar_lea.vmem %s0, %s169
    %v171 = vld [vmem:[%s170] sm:%s3]
    %s172 = scalar_lea.vmem [#allocation0], 752
    %173 = vst [vmem:[%s172] sm:%s3] %v171
    %s174 = smul.addr 2, 93
    %s175 = scalar_lea.vmem %s0, %s174
    %v176 = vld [vmem:[%s175] sm:%s3]
    %s177 = scalar_lea.vmem [#allocation0], 744
    %178 = vst [vmem:[%s177] sm:%s3] %v176
    %s179 = smul.addr 2, 92
    %s180 = scalar_lea.vmem %s0, %s179
    %v181 = vld [vmem:[%s180] sm:%s3]
    %s182 = scalar_lea.vmem [#allocation0], 736
    %183 = vst [vmem:[%s182] sm:%s3] %v181
    %s184 = smul.addr 2, 91
    %s185 = scalar_lea.vmem %s0, %s184
    %v186 = vld [vmem:[%s185] sm:%s3]
    %s187 = scalar_lea.vmem [#allocation0], 728
    %188 = vst [vmem:[%s187] sm:%s3] %v186
    %s189 = smul.addr 2, 90
    %s190 = scalar_lea.vmem %s0, %s189
    %v191 = vld [vmem:[%s190] sm:%s3]
    %s192 = scalar_lea.vmem [#allocation0], 720
    %193 = vst [vmem:[%s192] sm:%s3] %v191
    %s194 = smul.addr 2, 89
    %s195 = scalar_lea.vmem %s0, %s194
    %v196 = vld [vmem:[%s195] sm:%s3]
    %s197 = scalar_lea.vmem [#allocation0], 712
    %198 = vst [vmem:[%s197] sm:%s3] %v196
    %s199 = smul.addr 2, 88
    %s200 = scalar_lea.vmem %s0, %s199
    %v201 = vld [vmem:[%s200] sm:%s3]
    %s202 = scalar_lea.vmem [#allocation0], 704
    %203 = vst [vmem:[%s202] sm:%s3] %v201
    %s204 = smul.addr 2, 87
    %s205 = scalar_lea.vmem %s0, %s204
    %v206 = vld [vmem:[%s205] sm:%s3]
    %s207 = scalar_lea.vmem [#allocation0], 696
    %208 = vst [vmem:[%s207] sm:%s3] %v206
    %s209 = smul.addr 2, 86
    %s210 = scalar_lea.vmem %s0, %s209
    %v211 = vld [vmem:[%s210] sm:%s3]
    %s212 = scalar_lea.vmem [#allocation0], 688
    %213 = vst [vmem:[%s212] sm:%s3] %v211
    %s214 = smul.addr 2, 85
    %s215 = scalar_lea.vmem %s0, %s214
    %v216 = vld [vmem:[%s215] sm:%s3]
    %s217 = scalar_lea.vmem [#allocation0], 680
    %218 = vst [vmem:[%s217] sm:%s3] %v216
    %s219 = smul.addr 2, 84
    %s220 = scalar_lea.vmem %s0, %s219
    %v221 = vld [vmem:[%s220] sm:%s3]
    %s222 = scalar_lea.vmem [#allocation0], 672
    %223 = vst [vmem:[%s222] sm:%s3] %v221
    %s224 = smul.addr 2, 83
    %s225 = scalar_lea.vmem %s0, %s224
    %v226 = vld [vmem:[%s225] sm:%s3]
    %s227 = scalar_lea.vmem [#allocation0], 664
    %228 = vst [vmem:[%s227] sm:%s3] %v226
    %s229 = smul.addr 2, 82
    %s230 = scalar_lea.vmem %s0, %s229
    %v231 = vld [vmem:[%s230] sm:%s3]
    %s232 = scalar_lea.vmem [#allocation0], 656
    %233 = vst [vmem:[%s232] sm:%s3] %v231
    %s234 = smul.addr 2, 81
    %s235 = scalar_lea.vmem %s0, %s234
    %v236 = vld [vmem:[%s235] sm:%s3]
    %s237 = scalar_lea.vmem [#allocation0], 648
    %238 = vst [vmem:[%s237] sm:%s3] %v236
    %s239 = smul.addr 2, 80
    %s240 = scalar_lea.vmem %s0, %s239
    %v241 = vld [vmem:[%s240] sm:%s3]
    %s242 = scalar_lea.vmem [#allocation0], 640
    %243 = vst [vmem:[%s242] sm:%s3] %v241
    %s244 = smul.addr 2, 79
    %s245 = scalar_lea.vmem %s0, %s244
    %v246 = vld [vmem:[%s245] sm:%s3]
    %s247 = scalar_lea.vmem [#allocation0], 632
    %248 = vst [vmem:[%s247] sm:%s3] %v246
    %s249 = smul.addr 2, 78
    %s250 = scalar_lea.vmem %s0, %s249
    %v251 = vld [vmem:[%s250] sm:%s3]
    %s252 = scalar_lea.vmem [#allocation0], 624
    %253 = vst [vmem:[%s252] sm:%s3] %v251
    %s254 = smul.addr 2, 77
    %s255 = scalar_lea.vmem %s0, %s254
    %v256 = vld [vmem:[%s255] sm:%s3]
    %s257 = scalar_lea.vmem [#allocation0], 616
    %258 = vst [vmem:[%s257] sm:%s3] %v256
    %s259 = smul.addr 2, 76
    %s260 = scalar_lea.vmem %s0, %s259
    %v261 = vld [vmem:[%s260] sm:%s3]
    %s262 = scalar_lea.vmem [#allocation0], 608
    %263 = vst [vmem:[%s262] sm:%s3] %v261
    %s264 = smul.addr 2, 75
    %s265 = scalar_lea.vmem %s0, %s264
    %v266 = vld [vmem:[%s265] sm:%s3]
    %s267 = scalar_lea.vmem [#allocation0], 600
    %268 = vst [vmem:[%s267] sm:%s3] %v266
    %s269 = smul.addr 2, 74
    %s270 = scalar_lea.vmem %s0, %s269
    %v271 = vld [vmem:[%s270] sm:%s3]
    %s272 = scalar_lea.vmem [#allocation0], 592
    %273 = vst [vmem:[%s272] sm:%s3] %v271
    %s274 = smul.addr 2, 73
    %s275 = scalar_lea.vmem %s0, %s274
    %v276 = vld [vmem:[%s275] sm:%s3]
    %s277 = scalar_lea.vmem [#allocation0], 584
    %278 = vst [vmem:[%s277] sm:%s3] %v276
    %s279 = smul.addr 2, 72
    %s280 = scalar_lea.vmem %s0, %s279
    %v281 = vld [vmem:[%s280] sm:%s3]
    %s282 = scalar_lea.vmem [#allocation0], 576
    %283 = vst [vmem:[%s282] sm:%s3] %v281
    %s284 = smul.addr 2, 71
    %s285 = scalar_lea.vmem %s0, %s284
    %v286 = vld [vmem:[%s285] sm:%s3]
    %s287 = scalar_lea.vmem [#allocation0], 568
    %288 = vst [vmem:[%s287] sm:%s3] %v286
    %s289 = smul.addr 2, 70
    %s290 = scalar_lea.vmem %s0, %s289
    %v291 = vld [vmem:[%s290] sm:%s3]
    %s292 = scalar_lea.vmem [#allocation0], 560
    %293 = vst [vmem:[%s292] sm:%s3] %v291
    %s294 = smul.addr 2, 69
    %s295 = scalar_lea.vmem %s0, %s294
    %v296 = vld [vmem:[%s295] sm:%s3]
    %s297 = scalar_lea.vmem [#allocation0], 552
    %298 = vst [vmem:[%s297] sm:%s3] %v296
    %s299 = smul.addr 2, 68
    %s300 = scalar_lea.vmem %s0, %s299
    %v301 = vld [vmem:[%s300] sm:%s3]
    %s302 = scalar_lea.vmem [#allocation0], 544
    %303 = vst [vmem:[%s302] sm:%s3] %v301
    %s304 = smul.addr 2, 67
    %s305 = scalar_lea.vmem %s0, %s304
    %v306 = vld [vmem:[%s305] sm:%s3]
    %s307 = scalar_lea.vmem [#allocation0], 536
    %308 = vst [vmem:[%s307] sm:%s3] %v306
    %s309 = smul.addr 2, 66
    %s310 = scalar_lea.vmem %s0, %s309
    %v311 = vld [vmem:[%s310] sm:%s3]
    %s312 = scalar_lea.vmem [#allocation0], 528
    %313 = vst [vmem:[%s312] sm:%s3] %v311
    %s314 = smul.addr 2, 65
    %s315 = scalar_lea.vmem %s0, %s314
    %v316 = vld [vmem:[%s315] sm:%s3]
    %s317 = scalar_lea.vmem [#allocation0], 520
    %318 = vst [vmem:[%s317] sm:%s3] %v316
    %s319 = smul.addr 2, 64
    %s320 = scalar_lea.vmem %s0, %s319
    %v321 = vld [vmem:[%s320] sm:%s3]
    %s322 = scalar_lea.vmem [#allocation0], 512
    %323 = vst [vmem:[%s322] sm:%s3] %v321
    %s324 = smul.addr 2, 63
    %s325 = scalar_lea.vmem %s0, %s324
    %v326 = vld [vmem:[%s325] sm:%s3]
    %s327 = scalar_lea.vmem [#allocation0], 504
    %328 = vst [vmem:[%s327] sm:%s3] %v326
    %s329 = smul.addr 2, 62
    %s330 = scalar_lea.vmem %s0, %s329
    %v331 = vld [vmem:[%s330] sm:%s3]
    %s332 = scalar_lea.vmem [#allocation0], 496
    %333 = vst [vmem:[%s332] sm:%s3] %v331
    %s334 = smul.addr 2, 61
    %s335 = scalar_lea.vmem %s0, %s334
    %v336 = vld [vmem:[%s335] sm:%s3]
    %s337 = scalar_lea.vmem [#allocation0], 488
    %338 = vst [vmem:[%s337] sm:%s3] %v336
    %s339 = smul.addr 2, 60
    %s340 = scalar_lea.vmem %s0, %s339
    %v341 = vld [vmem:[%s340] sm:%s3]
    %s342 = scalar_lea.vmem [#allocation0], 480
    %343 = vst [vmem:[%s342] sm:%s3] %v341
    %s344 = smul.addr 2, 59
    %s345 = scalar_lea.vmem %s0, %s344
    %v346 = vld [vmem:[%s345] sm:%s3]
    %s347 = scalar_lea.vmem [#allocation0], 472
    %348 = vst [vmem:[%s347] sm:%s3] %v346
    %s349 = smul.addr 2, 58
    %s350 = scalar_lea.vmem %s0, %s349
    %v351 = vld [vmem:[%s350] sm:%s3]
    %s352 = scalar_lea.vmem [#allocation0], 464
    %353 = vst [vmem:[%s352] sm:%s3] %v351
    %s354 = smul.addr 2, 57
    %s355 = scalar_lea.vmem %s0, %s354
    %v356 = vld [vmem:[%s355] sm:%s3]
    %s357 = scalar_lea.vmem [#allocation0], 456
    %358 = vst [vmem:[%s357] sm:%s3] %v356
    %s359 = smul.addr 2, 56
    %s360 = scalar_lea.vmem %s0, %s359
    %v361 = vld [vmem:[%s360] sm:%s3]
    %s362 = scalar_lea.vmem [#allocation0], 448
    %363 = vst [vmem:[%s362] sm:%s3] %v361
    %s364 = smul.addr 2, 55
    %s365 = scalar_lea.vmem %s0, %s364
    %v366 = vld [vmem:[%s365] sm:%s3]
    %s367 = scalar_lea.vmem [#allocation0], 440
    %368 = vst [vmem:[%s367] sm:%s3] %v366
    %s369 = smul.addr 2, 54
    %s370 = scalar_lea.vmem %s0, %s369
    %v371 = vld [vmem:[%s370] sm:%s3]
    %s372 = scalar_lea.vmem [#allocation0], 432
    %373 = vst [vmem:[%s372] sm:%s3] %v371
    %s374 = smul.addr 2, 53
    %s375 = scalar_lea.vmem %s0, %s374
    %v376 = vld [vmem:[%s375] sm:%s3]
    %s377 = scalar_lea.vmem [#allocation0], 424
    %378 = vst [vmem:[%s377] sm:%s3] %v376
    %s379 = smul.addr 2, 52
    %s380 = scalar_lea.vmem %s0, %s379
    %v381 = vld [vmem:[%s380] sm:%s3]
    %s382 = scalar_lea.vmem [#allocation0], 416
    %383 = vst [vmem:[%s382] sm:%s3] %v381
    %s384 = smul.addr 2, 51
    %s385 = scalar_lea.vmem %s0, %s384
    %v386 = vld [vmem:[%s385] sm:%s3]
    %s387 = scalar_lea.vmem [#allocation0], 408
    %388 = vst [vmem:[%s387] sm:%s3] %v386
    %s389 = smul.addr 2, 50
    %s390 = scalar_lea.vmem %s0, %s389
    %v391 = vld [vmem:[%s390] sm:%s3]
    %s392 = scalar_lea.vmem [#allocation0], 400
    %393 = vst [vmem:[%s392] sm:%s3] %v391
    %s394 = smul.addr 2, 49
    %s395 = scalar_lea.vmem %s0, %s394
    %v396 = vld [vmem:[%s395] sm:%s3]
    %s397 = scalar_lea.vmem [#allocation0], 392
    %398 = vst [vmem:[%s397] sm:%s3] %v396
    %s399 = smul.addr 2, 48
    %s400 = scalar_lea.vmem %s0, %s399
    %v401 = vld [vmem:[%s400] sm:%s3]
    %s402 = scalar_lea.vmem [#allocation0], 384
    %403 = vst [vmem:[%s402] sm:%s3] %v401
    %s404 = smul.addr 2, 47
    %s405 = scalar_lea.vmem %s0, %s404
    %v406 = vld [vmem:[%s405] sm:%s3]
    %s407 = scalar_lea.vmem [#allocation0], 376
    %408 = vst [vmem:[%s407] sm:%s3] %v406
    %s409 = smul.addr 2, 46
    %s410 = scalar_lea.vmem %s0, %s409
    %v411 = vld [vmem:[%s410] sm:%s3]
    %s412 = scalar_lea.vmem [#allocation0], 368
    %413 = vst [vmem:[%s412] sm:%s3] %v411
    %s414 = smul.addr 2, 45
    %s415 = scalar_lea.vmem %s0, %s414
    %v416 = vld [vmem:[%s415] sm:%s3]
    %s417 = scalar_lea.vmem [#allocation0], 360
    %418 = vst [vmem:[%s417] sm:%s3] %v416
    %s419 = smul.addr 2, 44
    %s420 = scalar_lea.vmem %s0, %s419
    %v421 = vld [vmem:[%s420] sm:%s3]
    %s422 = scalar_lea.vmem [#allocation0], 352
    %423 = vst [vmem:[%s422] sm:%s3] %v421
    %s424 = smul.addr 2, 43
    %s425 = scalar_lea.vmem %s0, %s424
    %v426 = vld [vmem:[%s425] sm:%s3]
    %s427 = scalar_lea.vmem [#allocation0], 344
    %428 = vst [vmem:[%s427] sm:%s3] %v426
    %s429 = smul.addr 2, 42
    %s430 = scalar_lea.vmem %s0, %s429
    %v431 = vld [vmem:[%s430] sm:%s3]
    %s432 = scalar_lea.vmem [#allocation0], 336
    %433 = vst [vmem:[%s432] sm:%s3] %v431
    %s434 = smul.addr 2, 41
    %s435 = scalar_lea.vmem %s0, %s434
    %v436 = vld [vmem:[%s435] sm:%s3]
    %s437 = scalar_lea.vmem [#allocation0], 328
    %438 = vst [vmem:[%s437] sm:%s3] %v436
    %s439 = smul.addr 2, 40
    %s440 = scalar_lea.vmem %s0, %s439
    %v441 = vld [vmem:[%s440] sm:%s3]
    %s442 = scalar_lea.vmem [#allocation0], 320
    %443 = vst [vmem:[%s442] sm:%s3] %v441
    %s444 = smul.addr 2, 39
    %s445 = scalar_lea.vmem %s0, %s444
    %v446 = vld [vmem:[%s445] sm:%s3]
    %s447 = scalar_lea.vmem [#allocation0], 312
    %448 = vst [vmem:[%s447] sm:%s3] %v446
    %s449 = smul.addr 2, 38
    %s450 = scalar_lea.vmem %s0, %s449
    %v451 = vld [vmem:[%s450] sm:%s3]
    %s452 = scalar_lea.vmem [#allocation0], 304
    %453 = vst [vmem:[%s452] sm:%s3] %v451
    %s454 = smul.addr 2, 37
    %s455 = scalar_lea.vmem %s0, %s454
    %v456 = vld [vmem:[%s455] sm:%s3]
    %s457 = scalar_lea.vmem [#allocation0], 296
    %458 = vst [vmem:[%s457] sm:%s3] %v456
    %s459 = smul.addr 2, 36
    %s460 = scalar_lea.vmem %s0, %s459
    %v461 = vld [vmem:[%s460] sm:%s3]
    %s462 = scalar_lea.vmem [#allocation0], 288
    %463 = vst [vmem:[%s462] sm:%s3] %v461
    %s464 = smul.addr 2, 35
    %s465 = scalar_lea.vmem %s0, %s464
    %v466 = vld [vmem:[%s465] sm:%s3]
    %s467 = scalar_lea.vmem [#allocation0], 280
    %468 = vst [vmem:[%s467] sm:%s3] %v466
    %s469 = smul.addr 2, 34
    %s470 = scalar_lea.vmem %s0, %s469
    %v471 = vld [vmem:[%s470] sm:%s3]
    %s472 = scalar_lea.vmem [#allocation0], 272
    %473 = vst [vmem:[%s472] sm:%s3] %v471
    %s474 = smul.addr 2, 33
    %s475 = scalar_lea.vmem %s0, %s474
    %v476 = vld [vmem:[%s475] sm:%s3]
    %s477 = scalar_lea.vmem [#allocation0], 264
    %478 = vst [vmem:[%s477] sm:%s3] %v476
    %s479 = smul.addr 2, 32
    %s480 = scalar_lea.vmem %s0, %s479
    %v481 = vld [vmem:[%s480] sm:%s3]
    %s482 = scalar_lea.vmem [#allocation0], 256
    %483 = vst [vmem:[%s482] sm:%s3] %v481
    %s484 = smul.addr 2, 31
    %s485 = scalar_lea.vmem %s0, %s484
    %v486 = vld [vmem:[%s485] sm:%s3]
    %s487 = scalar_lea.vmem [#allocation0], 248
    %488 = vst [vmem:[%s487] sm:%s3] %v486
    %s489 = smul.addr 2, 30
    %s490 = scalar_lea.vmem %s0, %s489
    %v491 = vld [vmem:[%s490] sm:%s3]
    %s492 = scalar_lea.vmem [#allocation0], 240
    %493 = vst [vmem:[%s492] sm:%s3] %v491
    %s494 = smul.addr 2, 29
    %s495 = scalar_lea.vmem %s0, %s494
    %v496 = vld [vmem:[%s495] sm:%s3]
    %s497 = scalar_lea.vmem [#allocation0], 232
    %498 = vst [vmem:[%s497] sm:%s3] %v496
    %s499 = smul.addr 2, 28
    %s500 = scalar_lea.vmem %s0, %s499
    %v501 = vld [vmem:[%s500] sm:%s3]
    %s502 = scalar_lea.vmem [#allocation0], 224
    %503 = vst [vmem:[%s502] sm:%s3] %v501
    %s504 = smul.addr 2, 27
    %s505 = scalar_lea.vmem %s0, %s504
    %v506 = vld [vmem:[%s505] sm:%s3]
    %s507 = scalar_lea.vmem [#allocation0], 216
    %508 = vst [vmem:[%s507] sm:%s3] %v506
    %s509 = smul.addr 2, 26
    %s510 = scalar_lea.vmem %s0, %s509
    %v511 = vld [vmem:[%s510] sm:%s3]
    %s512 = scalar_lea.vmem [#allocation0], 208
    %513 = vst [vmem:[%s512] sm:%s3] %v511
    %s514 = smul.addr 2, 25
    %s515 = scalar_lea.vmem %s0, %s514
    %v516 = vld [vmem:[%s515] sm:%s3]
    %s517 = scalar_lea.vmem [#allocation0], 200
    %518 = vst [vmem:[%s517] sm:%s3] %v516
    %s519 = smul.addr 2, 24
    %s520 = scalar_lea.vmem %s0, %s519
    %v521 = vld [vmem:[%s520] sm:%s3]
    %s522 = scalar_lea.vmem [#allocation0], 192
    %523 = vst [vmem:[%s522] sm:%s3] %v521
    %s524 = smul.addr 2, 23
    %s525 = scalar_lea.vmem %s0, %s524
    %v526 = vld [vmem:[%s525] sm:%s3]
    %s527 = scalar_lea.vmem [#allocation0], 184
    %528 = vst [vmem:[%s527] sm:%s3] %v526
    %s529 = smul.addr 2, 22
    %s530 = scalar_lea.vmem %s0, %s529
    %v531 = vld [vmem:[%s530] sm:%s3]
    %s532 = scalar_lea.vmem [#allocation0], 176
    %533 = vst [vmem:[%s532] sm:%s3] %v531
    %s534 = smul.addr 2, 21
    %s535 = scalar_lea.vmem %s0, %s534
    %v536 = vld [vmem:[%s535] sm:%s3]
    %s537 = scalar_lea.vmem [#allocation0], 168
    %538 = vst [vmem:[%s537] sm:%s3] %v536
    %s539 = smul.addr 2, 20
    %s540 = scalar_lea.vmem %s0, %s539
    %v541 = vld [vmem:[%s540] sm:%s3]
    %s542 = scalar_lea.vmem [#allocation0], 160
    %543 = vst [vmem:[%s542] sm:%s3] %v541
    %s544 = smul.addr 2, 19
    %s545 = scalar_lea.vmem %s0, %s544
    %v546 = vld [vmem:[%s545] sm:%s3]
    %s547 = scalar_lea.vmem [#allocation0], 152
    %548 = vst [vmem:[%s547] sm:%s3] %v546
    %s549 = smul.addr 2, 18
    %s550 = scalar_lea.vmem %s0, %s549
    %v551 = vld [vmem:[%s550] sm:%s3]
    %s552 = scalar_lea.vmem [#allocation0], 144
    %553 = vst [vmem:[%s552] sm:%s3] %v551
    %s554 = smul.addr 2, 17
    %s555 = scalar_lea.vmem %s0, %s554
    %v556 = vld [vmem:[%s555] sm:%s3]
    %s557 = scalar_lea.vmem [#allocation0], 136
    %558 = vst [vmem:[%s557] sm:%s3] %v556
    %s559 = smul.addr 2, 16
    %s560 = scalar_lea.vmem %s0, %s559
    %v561 = vld [vmem:[%s560] sm:%s3]
    %s562 = scalar_lea.vmem [#allocation0], 128
    %563 = vst [vmem:[%s562] sm:%s3] %v561
    %s564 = smul.addr 2, 15
    %s565 = scalar_lea.vmem %s0, %s564
    %v566 = vld [vmem:[%s565] sm:%s3]
    %s567 = scalar_lea.vmem [#allocation0], 120
    %568 = vst [vmem:[%s567] sm:%s3] %v566
    %s569 = smul.addr 2, 14
    %s570 = scalar_lea.vmem %s0, %s569
    %v571 = vld [vmem:[%s570] sm:%s3]
    %s572 = scalar_lea.vmem [#allocation0], 112
    %573 = vst [vmem:[%s572] sm:%s3] %v571
    %s574 = smul.addr 2, 13
    %s575 = scalar_lea.vmem %s0, %s574
    %v576 = vld [vmem:[%s575] sm:%s3]
    %s577 = scalar_lea.vmem [#allocation0], 104
    %578 = vst [vmem:[%s577] sm:%s3] %v576
    %s579 = smul.addr 2, 12
    %s580 = scalar_lea.vmem %s0, %s579
    %v581 = vld [vmem:[%s580] sm:%s3]
    %s582 = scalar_lea.vmem [#allocation0], 96
    %583 = vst [vmem:[%s582] sm:%s3] %v581
    %s584 = smul.addr 2, 11
    %s585 = scalar_lea.vmem %s0, %s584
    %v586 = vld [vmem:[%s585] sm:%s3]
    %s587 = scalar_lea.vmem [#allocation0], 88
    %588 = vst [vmem:[%s587] sm:%s3] %v586
    %s589 = smul.addr 2, 10
    %s590 = scalar_lea.vmem %s0, %s589
    %v591 = vld [vmem:[%s590] sm:%s3]
    %s592 = scalar_lea.vmem [#allocation0], 80
    %593 = vst [vmem:[%s592] sm:%s3] %v591
    %s594 = smul.addr 2, 9
    %s595 = scalar_lea.vmem %s0, %s594
    %v596 = vld [vmem:[%s595] sm:%s3]
    %s597 = scalar_lea.vmem [#allocation0], 72
    %598 = vst [vmem:[%s597] sm:%s3] %v596
    %s599 = smul.addr 2, 8
    %s600 = scalar_lea.vmem %s0, %s599
    %v601 = vld [vmem:[%s600] sm:%s3]
    %s602 = scalar_lea.vmem [#allocation0], 64
    %603 = vst [vmem:[%s602] sm:%s3] %v601
    %s604 = smul.addr 2, 7
    %s605 = scalar_lea.vmem %s0, %s604
    %v606 = vld [vmem:[%s605] sm:%s3]
    %s607 = scalar_lea.vmem [#allocation0], 56
    %608 = vst [vmem:[%s607] sm:%s3] %v606
    %s609 = smul.addr 2, 6
    %s610 = scalar_lea.vmem %s0, %s609
    %v611 = vld [vmem:[%s610] sm:%s3]
    %s612 = scalar_lea.vmem [#allocation0], 48
    %613 = vst [vmem:[%s612] sm:%s3] %v611
    %s614 = smul.addr 2, 5
    %s615 = scalar_lea.vmem %s0, %s614
    %v616 = vld [vmem:[%s615] sm:%s3]
    %s617 = scalar_lea.vmem [#allocation0], 40
    %618 = vst [vmem:[%s617] sm:%s3] %v616
    %s619 = smul.addr 2, 4
    %s620 = scalar_lea.vmem %s0, %s619
    %v621 = vld [vmem:[%s620] sm:%s3]
    %s622 = scalar_lea.vmem [#allocation0], 32
    %623 = vst [vmem:[%s622] sm:%s3] %v621
    %s624 = smul.addr 2, 3
    %s625 = scalar_lea.vmem %s0, %s624
    %v626 = vld [vmem:[%s625] sm:%s3]
    %s627 = scalar_lea.vmem [#allocation0], 24
    %628 = vst [vmem:[%s627] sm:%s3] %v626
    %s629 = smul.addr 2, 2
    %s630 = scalar_lea.vmem %s0, %s629
    %v631 = vld [vmem:[%s630] sm:%s3]
    %s632 = scalar_lea.vmem [#allocation0], 16
    %633 = vst [vmem:[%s632] sm:%s3] %v631
    %s634 = scalar_lea.vmem %s0, 2
    %v635 = vld [vmem:[%s634] sm:%s3]
    %s636 = scalar_lea.vmem [#allocation0], 8
    %637 = vst [vmem:[%s636] sm:%s3] %v635
    %v638 = vld [vmem:[%s0] sm:%s3]
    %639 = vst [vmem:[#allocation0] sm:%s3] %v638
    %v640 = vld [vmem:[#allocation0] ss:$8 sm:$0xf]
    %v641 = vld [vmem:[#allocation0] ss:$8 sm:$0xf0]
    %vm642 = vcmask 1047556
    %v643 = vsel %vm642, %v641, %v640
    %vm644 = vcmask 130048
    %645 = vst.msk [vmem:[%s1] sm:$0xff] %vm644, %v643
    %s646 = scalar_lea.vmem [#allocation0], 64
    %v647 = vld [vmem:[%s646] ss:$8 sm:$0xf]
    %s648 = scalar_lea.vmem [#allocation0], 64
    %v649 = vld [vmem:[%s648] ss:$8 sm:$0xf0]
    %vm650 = vcmask 1047556
    %v651 = vsel %vm650, %v649, %v647
    %vm652 = vcmask 130048
    %s653 = scalar_lea.vmem %s1, 8
    %654 = vst.msk [vmem:[%s653] sm:$0xff] %vm652, %v651
    %s655 = scalar_lea.vmem [#allocation0], 128
    %v656 = vld [vmem:[%s655] ss:$8 sm:$0xf]
    %s657 = scalar_lea.vmem [#allocation0], 128
    %v658 = vld [vmem:[%s657] ss:$8 sm:$0xf0]
    %vm659 = vcmask 1047556
    %v660 = vsel %vm659, %v658, %v656
    %vm661 = vcmask 130048
    %s662 = scalar_lea.vmem %s1, 16
    %663 = vst.msk [vmem:[%s662] sm:$0xff] %vm661, %v660
    %s664 = scalar_lea.vmem [#allocation0], 192
    %v665 = vld [vmem:[%s664] ss:$8 sm:$0xf]
    %s666 = scalar_lea.vmem [#allocation0], 192
    %v667 = vld [vmem:[%s666] ss:$8 sm:$0xf0]
    %vm668 = vcmask 1047556
    %v669 = vsel %vm668, %v667, %v665
    %vm670 = vcmask 130048
    %s671 = scalar_lea.vmem %s1, 24
    %672 = vst.msk [vmem:[%s671] sm:$0xff] %vm670, %v669
    %s673 = scalar_lea.vmem [#allocation0], 256
    %v674 = vld [vmem:[%s673] ss:$8 sm:$0xf]
    %s675 = scalar_lea.vmem [#allocation0], 256
    %v676 = vld [vmem:[%s675] ss:$8 sm:$0xf0]
    %vm677 = vcmask 1047556
    %v678 = vsel %vm677, %v676, %v674
    %vm679 = vcmask 130048
    %s680 = scalar_lea.vmem %s1, 32
    %681 = vst.msk [vmem:[%s680] sm:$0xff] %vm679, %v678
    %s682 = scalar_lea.vmem [#allocation0], 320
    %v683 = vld [vmem:[%s682] ss:$8 sm:$0xf]
    %s684 = scalar_lea.vmem [#allocation0], 320
    %v685 = vld [vmem:[%s684] ss:$8 sm:$0xf0]
    %vm686 = vcmask 1047556
    %v687 = vsel %vm686, %v685, %v683
    %vm688 = vcmask 130048
    %s689 = scalar_lea.vmem %s1, 40
    %690 = vst.msk [vmem:[%s689] sm:$0xff] %vm688, %v687
    %s691 = scalar_lea.vmem [#allocation0], 384
    %v692 = vld [vmem:[%s691] ss:$8 sm:$0xf]
    %s693 = scalar_lea.vmem [#allocation0], 384
    %v694 = vld [vmem:[%s693] ss:$8 sm:$0xf0]
    %vm695 = vcmask 1047556
    %v696 = vsel %vm695, %v694, %v692
    %vm697 = vcmask 130048
    %s698 = scalar_lea.vmem %s1, 48
    %699 = vst.msk [vmem:[%s698] sm:$0xff] %vm697, %v696
    %s700 = scalar_lea.vmem [#allocation0], 448
    %v701 = vld [vmem:[%s700] ss:$8 sm:$0xf]
    %s702 = scalar_lea.vmem [#allocation0], 448
    %v703 = vld [vmem:[%s702] ss:$8 sm:$0xf0]
    %vm704 = vcmask 1047556
    %v705 = vsel %vm704, %v703, %v701
    %vm706 = vcmask 130048
    %s707 = scalar_lea.vmem %s1, 56
    %708 = vst.msk [vmem:[%s707] sm:$0xff] %vm706, %v705
    %s709 = scalar_lea.vmem [#allocation0], 512
    %v710 = vld [vmem:[%s709] ss:$8 sm:$0xf]
    %s711 = scalar_lea.vmem [#allocation0], 512
    %v712 = vld [vmem:[%s711] ss:$8 sm:$0xf0]
    %vm713 = vcmask 1047556
    %v714 = vsel %vm713, %v712, %v710
    %vm715 = vcmask 130048
    %s716 = scalar_lea.vmem %s1, 64
    %717 = vst.msk [vmem:[%s716] sm:$0xff] %vm715, %v714
    %s718 = scalar_lea.vmem [#allocation0], 576
    %v719 = vld [vmem:[%s718] ss:$8 sm:$0xf]
    %s720 = scalar_lea.vmem [#allocation0], 576
    %v721 = vld [vmem:[%s720] ss:$8 sm:$0xf0]
    %vm722 = vcmask 1047556
    %v723 = vsel %vm722, %v721, %v719
    %vm724 = vcmask 130048
    %s725 = scalar_lea.vmem %s1, 72
    %726 = vst.msk [vmem:[%s725] sm:$0xff] %vm724, %v723
    %s727 = scalar_lea.vmem [#allocation0], 640
    %v728 = vld [vmem:[%s727] ss:$8 sm:$0xf]
    %s729 = scalar_lea.vmem [#allocation0], 640
    %v730 = vld [vmem:[%s729] ss:$8 sm:$0xf0]
    %vm731 = vcmask 1047556
    %v732 = vsel %vm731, %v730, %v728
    %vm733 = vcmask 130048
    %s734 = scalar_lea.vmem %s1, 80
    %735 = vst.msk [vmem:[%s734] sm:$0xff] %vm733, %v732
    %s736 = scalar_lea.vmem [#allocation0], 704
    %v737 = vld [vmem:[%s736] ss:$8 sm:$0xf]
    %s738 = scalar_lea.vmem [#allocation0], 704
    %v739 = vld [vmem:[%s738] ss:$8 sm:$0xf0]
    %vm740 = vcmask 1047556
    %v741 = vsel %vm740, %v739, %v737
    %vm742 = vcmask 130048
    %s743 = scalar_lea.vmem %s1, 88
    %744 = vst.msk [vmem:[%s743] sm:$0xff] %vm742, %v741
    %s745 = scalar_lea.vmem [#allocation0], 768
    %v746 = vld [vmem:[%s745] ss:$8 sm:$0xf]
    %s747 = scalar_lea.vmem [#allocation0], 768
    %v748 = vld [vmem:[%s747] ss:$8 sm:$0xf0]
    %vm749 = vcmask 1047556
    %v750 = vsel %vm749, %v748, %v746
    %vm751 = vcmask 130048
    %s752 = scalar_lea.vmem %s1, 96
    %753 = vst.msk [vmem:[%s752] sm:$0xff] %vm751, %v750
    %s754 = scalar_lea.vmem [#allocation0], 832
    %v755 = vld [vmem:[%s754] ss:$8 sm:$0xf]
    %s756 = scalar_lea.vmem [#allocation0], 832
    %v757 = vld [vmem:[%s756] ss:$8 sm:$0xf0]
    %vm758 = vcmask 1047556
    %v759 = vsel %vm758, %v757, %v755
    %vm760 = vcmask 130048
    %s761 = scalar_lea.vmem %s1, 104
    %762 = vst.msk [vmem:[%s761] sm:$0xff] %vm760, %v759
    %s763 = scalar_lea.vmem [#allocation0], 896
    %v764 = vld [vmem:[%s763] ss:$8 sm:$0xf]
    %s765 = scalar_lea.vmem [#allocation0], 896
    %v766 = vld [vmem:[%s765] ss:$8 sm:$0xf0]
    %vm767 = vcmask 1047556
    %v768 = vsel %vm767, %v766, %v764
    %vm769 = vcmask 130048
    %s770 = scalar_lea.vmem %s1, 112
    %771 = vst.msk [vmem:[%s770] sm:$0xff] %vm769, %v768
    %s772 = scalar_lea.vmem [#allocation0], 960
    %v773 = vld [vmem:[%s772] ss:$8 sm:$0xf]
    %s774 = scalar_lea.vmem [#allocation0], 960
    %v775 = vld [vmem:[%s774] ss:$8 sm:$0xf0]
    %vm776 = vcmask 1047556
    %v777 = vsel %vm776, %v775, %v773
    %vm778 = vcmask 130048
    %s779 = scalar_lea.vmem %s1, 120
    %780 = vst.msk [vmem:[%s779] sm:$0xff] %vm778, %v777
    %s781 = scalar_lea.vmem [#allocation0], 1
    %v782 = vld [vmem:[%s781] ss:$8 sm:$0xf]
    %s783 = scalar_lea.vmem [#allocation0], 1
    %v784 = vld [vmem:[%s783] ss:$8 sm:$0xf0]
    %vm785 = vcmask 1047556
    %v786 = vsel %vm785, %v784, %v782
    %787 = vrot.lane.b32.xlu0 %v786, 16
    %v788 = vpop.permute.xlu0 %787
    %vm789 = vcmask 261248
    %790 = vst.msk [vmem:[%s1] sm:$0xff] %vm789, %v788
    %s791 = scalar_lea.vmem [#allocation0], 257
    %v792 = vld [vmem:[%s791] ss:$8 sm:$0xf]
    %s793 = scalar_lea.vmem [#allocation0], 257
    %v794 = vld [vmem:[%s793] ss:$8 sm:$0xf0]
    %vm795 = vcmask 1047556
    %v796 = vsel %vm795, %v794, %v792
    %797 = vrot.lane.b32.xlu0 %v796, 16
    %v798 = vpop.permute.xlu0 %797
    %vm799 = vcmask 261248
    %s800 = scalar_lea.vmem %s1, 32
    %801 = vst.msk [vmem:[%s800] sm:$0xff] %vm799, %v798
    %s802 = scalar_lea.vmem [#allocation0], 513
    %v803 = vld [vmem:[%s802] ss:$8 sm:$0xf]
    %s804 = scalar_lea.vmem [#allocation0], 513
    %v805 = vld [vmem:[%s804] ss:$8 sm:$0xf0]
    %vm806 = vcmask 1047556
    %v807 = vsel %vm806, %v805, %v803
    %808 = vrot.lane.b32.xlu0 %v807, 16
    %v809 = vpop.permute.xlu0 %808
    %vm810 = vcmask 261248
    %s811 = scalar_lea.vmem %s1, 64
    %812 = vst.msk [vmem:[%s811] sm:$0xff] %vm810, %v809
    %s813 = scalar_lea.vmem [#allocation0], 769
    %v814 = vld [vmem:[%s813] ss:$8 sm:$0xf]
    %s815 = scalar_lea.vmem [#allocation0], 769
    %v816 = vld [vmem:[%s815] ss:$8 sm:$0xf0]
    %vm817 = vcmask 1047556
    %v818 = vsel %vm817, %v816, %v814
    %819 = vrot.lane.b32.xlu0 %v818, 16
    %v820 = vpop.permute.xlu0 %819
    %vm821 = vcmask 261248
    %s822 = scalar_lea.vmem %s1, 96
    %823 = vst.msk [vmem:[%s822] sm:$0xff] %vm821, %v820
    %s824 = scalar_lea.vmem [#allocation0], 65
    %v825 = vld [vmem:[%s824] ss:$8 sm:$0xf]
    %s826 = scalar_lea.vmem [#allocation0], 65
    %v827 = vld [vmem:[%s826] ss:$8 sm:$0xf0]
    %vm828 = vcmask 1047556
    %v829 = vsel %vm828, %v827, %v825
    %830 = vrot.lane.b32.xlu0 %v829, 16
    %v831 = vpop.permute.xlu0 %830
    %vm832 = vcmask 261248
    %s833 = scalar_lea.vmem %s1, 8
    %834 = vst.msk [vmem:[%s833] sm:$0xff] %vm832, %v831
    %s835 = scalar_lea.vmem [#allocation0], 321
    %v836 = vld [vmem:[%s835] ss:$8 sm:$0xf]
    %s837 = scalar_lea.vmem [#allocation0], 321
    %v838 = vld [vmem:[%s837] ss:$8 sm:$0xf0]
    %vm839 = vcmask 1047556
    %v840 = vsel %vm839, %v838, %v836
    %841 = vrot.lane.b32.xlu0 %v840, 16
    %v842 = vpop.permute.xlu0 %841
    %vm843 = vcmask 261248
    %s844 = scalar_lea.vmem %s1, 40
    %845 = vst.msk [vmem:[%s844] sm:$0xff] %vm843, %v842
    %s846 = scalar_lea.vmem [#allocation0], 577
    %v847 = vld [vmem:[%s846] ss:$8 sm:$0xf]
    %s848 = scalar_lea.vmem [#allocation0], 577
    %v849 = vld [vmem:[%s848] ss:$8 sm:$0xf0]
    %vm850 = vcmask 1047556
    %v851 = vsel %vm850, %v849, %v847
    %852 = vrot.lane.b32.xlu0 %v851, 16
    %v853 = vpop.permute.xlu0 %852
    %vm854 = vcmask 261248
    %s855 = scalar_lea.vmem %s1, 72
    %856 = vst.msk [vmem:[%s855] sm:$0xff] %vm854, %v853
    %s857 = scalar_lea.vmem [#allocation0], 833
    %v858 = vld [vmem:[%s857] ss:$8 sm:$0xf]
    %s859 = scalar_lea.vmem [#allocation0], 833
    %v860 = vld [vmem:[%s859] ss:$8 sm:$0xf0]
    %vm861 = vcmask 1047556
    %v862 = vsel %vm861, %v860, %v858
    %863 = vrot.lane.b32.xlu0 %v862, 16
    %v864 = vpop.permute.xlu0 %863
    %vm865 = vcmask 261248
    %s866 = scalar_lea.vmem %s1, 104
    %867 = vst.msk [vmem:[%s866] sm:$0xff] %vm865, %v864
    %s868 = scalar_lea.vmem [#allocation0], 129
    %v869 = vld [vmem:[%s868] ss:$8 sm:$0xf]
    %s870 = scalar_lea.vmem [#allocation0], 129
    %v871 = vld [vmem:[%s870] ss:$8 sm:$0xf0]
    %vm872 = vcmask 1047556
    %v873 = vsel %vm872, %v871, %v869
    %874 = vrot.lane.b32.xlu0 %v873, 16
    %v875 = vpop.permute.xlu0 %874
    %vm876 = vcmask 261248
    %s877 = scalar_lea.vmem %s1, 16
    %878 = vst.msk [vmem:[%s877] sm:$0xff] %vm876, %v875
    %s879 = scalar_lea.vmem [#allocation0], 385
    %v880 = vld [vmem:[%s879] ss:$8 sm:$0xf]
    %s881 = scalar_lea.vmem [#allocation0], 385
    %v882 = vld [vmem:[%s881] ss:$8 sm:$0xf0]
    %vm883 = vcmask 1047556
    %v884 = vsel %vm883, %v882, %v880
    %885 = vrot.lane.b32.xlu0 %v884, 16
    %v886 = vpop.permute.xlu0 %885
    %vm887 = vcmask 261248
    %s888 = scalar_lea.vmem %s1, 48
    %889 = vst.msk [vmem:[%s888] sm:$0xff] %vm887, %v886
    %s890 = scalar_lea.vmem [#allocation0], 641
    %v891 = vld [vmem:[%s890] ss:$8 sm:$0xf]
    %s892 = scalar_lea.vmem [#allocation0], 641
    %v893 = vld [vmem:[%s892] ss:$8 sm:$0xf0]
    %vm894 = vcmask 1047556
    %v895 = vsel %vm894, %v893, %v891
    %896 = vrot.lane.b32.xlu0 %v895, 16
    %v897 = vpop.permute.xlu0 %896
    %vm898 = vcmask 261248
    %s899 = scalar_lea.vmem %s1, 80
    %900 = vst.msk [vmem:[%s899] sm:$0xff] %vm898, %v897
    %s901 = scalar_lea.vmem [#allocation0], 897
    %v902 = vld [vmem:[%s901] ss:$8 sm:$0xf]
    %s903 = scalar_lea.vmem [#allocation0], 897
    %v904 = vld [vmem:[%s903] ss:$8 sm:$0xf0]
    %vm905 = vcmask 1047556
    %v906 = vsel %vm905, %v904, %v902
    %907 = vrot.lane.b32.xlu0 %v906, 16
    %v908 = vpop.permute.xlu0 %907
    %vm909 = vcmask 261248
    %s910 = scalar_lea.vmem %s1, 112
    %911 = vst.msk [vmem:[%s910] sm:$0xff] %vm909, %v908
    %s912 = scalar_lea.vmem [#allocation0], 193
    %v913 = vld [vmem:[%s912] ss:$8 sm:$0xf]
    %s914 = scalar_lea.vmem [#allocation0], 193
    %v915 = vld [vmem:[%s914] ss:$8 sm:$0xf0]
    %vm916 = vcmask 1047556
    %v917 = vsel %vm916, %v915, %v913
    %918 = vrot.lane.b32.xlu0 %v917, 16
    %v919 = vpop.permute.xlu0 %918
    %vm920 = vcmask 261248
    %s921 = scalar_lea.vmem %s1, 24
    %922 = vst.msk [vmem:[%s921] sm:$0xff] %vm920, %v919
    %s923 = scalar_lea.vmem [#allocation0], 449
    %v924 = vld [vmem:[%s923] ss:$8 sm:$0xf]
    %s925 = scalar_lea.vmem [#allocation0], 449
    %v926 = vld [vmem:[%s925] ss:$8 sm:$0xf0]
    %vm927 = vcmask 1047556
    %v928 = vsel %vm927, %v926, %v924
    %929 = vrot.lane.b32.xlu0 %v928, 16
    %v930 = vpop.permute.xlu0 %929
    %vm931 = vcmask 261248
    %s932 = scalar_lea.vmem %s1, 56
    %933 = vst.msk [vmem:[%s932] sm:$0xff] %vm931, %v930
    %s934 = scalar_lea.vmem [#allocation0], 705
    %v935 = vld [vmem:[%s934] ss:$8 sm:$0xf]
    %s936 = scalar_lea.vmem [#allocation0], 705
    %v937 = vld [vmem:[%s936] ss:$8 sm:$0xf0]
    %vm938 = vcmask 1047556
    %v939 = vsel %vm938, %v937, %v935
    %940 = vrot.lane.b32.xlu0 %v939, 16
    %v941 = vpop.permute.xlu0 %940
    %vm942 = vcmask 261248
    %s943 = scalar_lea.vmem %s1, 88
    %944 = vst.msk [vmem:[%s943] sm:$0xff] %vm942, %v941
    %s945 = scalar_lea.vmem [#allocation0], 961
    %v946 = vld [vmem:[%s945] ss:$8 sm:$0xf]
    %s947 = scalar_lea.vmem [#allocation0], 961
    %v948 = vld [vmem:[%s947] ss:$8 sm:$0xf0]
    %vm949 = vcmask 1047556
    %v950 = vsel %vm949, %v948, %v946
    %951 = vrot.lane.b32.xlu0 %v950, 16
    %v952 = vpop.permute.xlu0 %951
    %vm953 = vcmask 261248
    %s954 = scalar_lea.vmem %s1, 120
    %955 = vst.msk [vmem:[%s954] sm:$0xff] %vm953, %v952

// kernel: cell_forward.1
$region0: #{cell_forward.1}
  #allocation0 [shape = 'u32[]', space=smem, size = 0x4, offset = 0x4, fixed_abs, tag = 'smem constant byte address 0x4 - core index']
  #allocation1 [shape = 'u32[144,128]{1,0:T(1,128)}', space=vmem, size = 0x12000, scoped, tag = 'internal scratch']
  #allocation2 [shape = 'f32[32,128]{1,0:T(8,128)}', space=vmem, size = 0x4000, scoped, tag = 'scratch operand']
  #allocation3 [shape = 'f32[32,128]{1,0:T(8,128)}', space=vmem, size = 0x4000, scoped, tag = 'scratch operand']
  %s0 = inlined_call_operand.vmem [shape: f32[32,128], index: 0, kind: input, shape index: {}]
  %s1 = inlined_call_operand.vmem [shape: f32[384,1536], index: 1, kind: input, shape index: {}]
  %s2 = inlined_call_operand.vmem [shape: f32[2,1536], index: 2, kind: input, shape index: {}]
  %s3 = inlined_call_operand.vmem [shape: f32[128,128], index: 3, kind: input, shape index: {}]
  %s4 = inlined_call_operand.vmem [shape: f32[32,128], index: 4, kind: input, shape index: {}]
  %s5 = inlined_call_operand.vmem [shape: f32[32,128], index: 5, kind: output, shape index: {}]
  %s6 = sld [smem:[#allocation0]]
  $region30: #{cell_forward.1} parent=0
    _
  %s8 = ssub.s32 1, %s6
  %s9 = scalar_select 0, %s8, %s6
  // Predicated region
  $region2: #{cell_forward.1} parent=0 // pred_check
    _
  $region3: #{cell_forward.1} parent=0 // pred_check_branch
    %11 = sbr.rel (0) target = $region5
  $region4: #{cell_forward.1} parent=0 // pred_region
    _
  $region5: #{cell_forward.1} parent=0 // pred_fallthru
    _
  // Predicated region
  $region6: #{cell_forward.1} parent=0 // pred_check
    _
  $region7: #{cell_forward.1} parent=0 // pred_check_branch
    %13 = sbr.rel (0) target = $region9
  $region8: #{cell_forward.1} parent=0 // pred_region
    _
  $region9: #{cell_forward.1} parent=0 // pred_fallthru
    _
  // Predicated region
  $region10: #{cell_forward.1} parent=0 // pred_check
    _
  $region11: #{cell_forward.1} parent=0 // pred_check_branch
    %15 = sbr.rel (0) target = $region13
  $region12: #{cell_forward.1} parent=0 // pred_region
    _
  $region13: #{cell_forward.1} parent=0 // pred_fallthru
    _
  // Predicated region
  $region14: #{cell_forward.1} parent=0 // pred_check
    _
  $region15: #{cell_forward.1} parent=0 // pred_check_branch
    %17 = sbr.rel (0) target = $region17
  $region16: #{cell_forward.1} parent=0 // pred_region
    _
  $region17: #{cell_forward.1} parent=0 // pred_fallthru
    _
  // Predicated region
  $region18: #{cell_forward.1} parent=0 // pred_check
    _
  $region19: #{cell_forward.1} parent=0 // pred_check_branch
    %19 = sbr.rel (0) target = $region21
  $region20: #{cell_forward.1} parent=0 // pred_region
    _
  $region21: #{cell_forward.1} parent=0 // pred_fallthru
    _
  %20 = vst [vmem:[#allocation2] sm:$0xff] 0.0
  %21 = vst [vmem:[#allocation2 + $0x8] sm:$0xff] 0.0
  %22 = vst [vmem:[#allocation2 + $0x10] sm:$0xff] 0.0
  %23 = vst [vmem:[#allocation2 + $0x18] sm:$0xff] 0.0
  %24 = vst [vmem:[#allocation3] sm:$0xff] 0.0
  %25 = vst [vmem:[#allocation3 + $0x8] sm:$0xff] 0.0
  %26 = vst [vmem:[#allocation3 + $0x10] sm:$0xff] 0.0
  %27 = vst [vmem:[#allocation3 + $0x18] sm:$0xff] 0.0
  %28 = vst [vmem:[%s5] sm:$0xff] 0.0
  %29 = vst [vmem:[%s5 + $0x8] sm:$0xff] 0.0
  %30 = vst [vmem:[%s5 + $0x10] sm:$0xff] 0.0
  %31 = vst [vmem:[%s5 + $0x18] sm:$0xff] 0.0
  %v32 = vld [vmem:[%s4] sm:$0xff]
  %v33 = vld [vmem:[%s4 + $0x8] sm:$0xff]
  %v34 = vld [vmem:[%s4 + $0x10] sm:$0xff]
  %v35 = vld [vmem:[%s4 + $0x18] sm:$0xff]
  %v36 = vld [vmem:[%s3] sm:$0xff]
  %v37 = vld [vmem:[%s3 + $0x8] sm:$0xff]
  %v38 = vld [vmem:[%s3 + $0x10] sm:$0xff]
  %v39 = vld [vmem:[%s3 + $0x18] sm:$0xff]
  %v40 = vld [vmem:[%s3 + $0x20] sm:$0xff]
  %v41 = vld [vmem:[%s3 + $0x28] sm:$0xff]
  %v42 = vld [vmem:[%s3 + $0x30] sm:$0xff]
  %v43 = vld [vmem:[%s3 + $0x38] sm:$0xff]
  %v44 = vld [vmem:[%s3 + $0x40] sm:$0xff]
  %v45 = vld [vmem:[%s3 + $0x48] sm:$0xff]
  %v46 = vld [vmem:[%s3 + $0x50] sm:$0xff]
  %v47 = vld [vmem:[%s3 + $0x58] sm:$0xff]
  %v48 = vld [vmem:[%s3 + $0x60] sm:$0xff]
  %v49 = vld [vmem:[%s3 + $0x68] sm:$0xff]
  %v50 = vld [vmem:[%s3 + $0x70] sm:$0xff]
  %v51 = vld [vmem:[%s3 + $0x78] sm:$0xff]
  %v52 = vld [vmem:[%s2] sm:$0xff]
  %v53 = vld [vmem:[%s2 + $0x8] sm:$0xff]
  %v54 = vld [vmem:[%s2 + $0x10] sm:$0xff]
  %v55 = vld [vmem:[%s0] sm:$0xff]
  %v56 = vld [vmem:[%s0 + $0x8] sm:$0xff]
  %v57 = vld [vmem:[%s0 + $0x10] sm:$0xff]
  %v58 = vld [vmem:[%s0 + $0x18] sm:$0xff]
  %vm61 = vcmask 1040384
  %v62 = vrot.slane %v55, 7
  %v63 = vrot.slane %v56, 7
  %v64 = vsel %vm61, %v62, %v63
  %v67 = vsel %vm61, 0.0, %v62
  %v70 = vrot.slane %v57, 7
  %v71 = vrot.slane %v58, 7
  %v72 = vsel %vm61, %v70, %v71
  %v75 = vsel %vm61, 0.0, %v70
  %vm76 = vcmask 1046528
  %v77 = vrot.slane %v55, 1
  %v78 = vrot.slane %v56, 1
  %v79 = vsel %vm76, %v77, %v78
  %v82 = vsel %vm76, %v78, 0.0
  %v83 = vrot.slane %v57, 1
  %v84 = vrot.slane %v58, 1
  %v85 = vsel %vm76, %v83, %v84
  %v88 = vsel %vm76, %v84, 0.0
  %v89 = vadd.f32 %v67, %v55
  %v90 = vadd.f32 %v64, %v56
  %v91 = vadd.f32 %v75, %v57
  %v92 = vadd.f32 %v72, %v58
  %v93 = vadd.f32 %v89, %v79
  %v94 = vadd.f32 %v90, %v82
  %v95 = vadd.f32 %v91, %v85
  %v96 = vadd.f32 %v92, %v88
  %101 = vrot.lane.b32.xlu0 %v93, 8
  %v102 = vpop.permute.xlu0 %101
  %103 = vrot.lane.b32.xlu0 %v94, 8
  %v104 = vpop.permute.xlu0 %103
  %105 = vrot.lane.b32.xlu0 %v95, 8
  %v106 = vpop.permute.xlu0 %105
  %107 = vrot.lane.b32.xlu0 %v96, 8
  %v108 = vpop.permute.xlu0 %107
  %vm113 = vcmask 64512
  %v114 = vsel %vm113, 0.0, %v102
  %v115 = vsel %vm113, 0.0, %v104
  %v116 = vsel %vm113, 0.0, %v106
  %v117 = vsel %vm113, 0.0, %v108
  %118 = vrot.lane.b32.xlu0 %v93, 120
  %v119 = vpop.permute.xlu0 %118
  %120 = vrot.lane.b32.xlu0 %v94, 120
  %v121 = vpop.permute.xlu0 %120
  %122 = vrot.lane.b32.xlu0 %v95, 120
  %v123 = vpop.permute.xlu0 %122
  %124 = vrot.lane.b32.xlu0 %v96, 120
  %v125 = vpop.permute.xlu0 %124
  %vm130 = vcmask 982016
  %v131 = vsel %vm130, %v119, 0.0
  %v132 = vsel %vm130, %v121, 0.0
  %v133 = vsel %vm130, %v123, 0.0
  %v134 = vsel %vm130, %v125, 0.0
  %v135 = vadd.f32 %v114, %v93
  %v136 = vadd.f32 %v115, %v94
  %v137 = vadd.f32 %v116, %v95
  %v138 = vadd.f32 %v117, %v96
  %v139 = vadd.f32 %v135, %v131
  %v140 = vadd.f32 %v136, %v132
  %v141 = vadd.f32 %v137, %v133
  %v142 = vadd.f32 %v138, %v134
  %v143 = vmul.f32 %v139, %v32
  %v144 = vmul.f32 %v140, %v33
  %v145 = vmul.f32 %v141, %v34
  %v146 = vmul.f32 %v142, %v35
  %v147 = vadd.f32 %v55, %v143
  %v148 = vadd.f32 %v56, %v144
  %v149 = vadd.f32 %v57, %v145
  %v150 = vadd.f32 %v58, %v146
  %v151 = vmax.f32 %v67, 0.0
  %v152 = vmax.f32 %v64, 0.0
  %v153 = vmax.f32 %v75, 0.0
  %v154 = vmax.f32 %v72, 0.0
  %v155 = vmax.f32 %v55, 0.0
  %v156 = vmax.f32 %v56, 0.0
  %v157 = vmax.f32 %v57, 0.0
  %v158 = vmax.f32 %v58, 0.0
  %v159 = vmax.f32 %v79, 0.0
  %v160 = vmax.f32 %v82, 0.0
  %v161 = vmax.f32 %v85, 0.0
  %v162 = vmax.f32 %v88, 0.0
  %v163 = vld [vmem:[%s1] sm:$0xff]
  %v164 = vld [vmem:[%s1 + $0x8] sm:$0xff]
  %v165 = vld [vmem:[%s1 + $0x10] sm:$0xff]
  %v166 = vld [vmem:[%s1 + $0x18] sm:$0xff]
  %v167 = vld [vmem:[%s1 + $0x20] sm:$0xff]
  %v168 = vld [vmem:[%s1 + $0x28] sm:$0xff]
  %v169 = vld [vmem:[%s1 + $0x60] sm:$0xff]
  %v170 = vld [vmem:[%s1 + $0x68] sm:$0xff]
  %v171 = vld [vmem:[%s1 + $0x70] sm:$0xff]
  %v172 = vld [vmem:[%s1 + $0x78] sm:$0xff]
  %v173 = vld [vmem:[%s1 + $0x80] sm:$0xff]
  %v174 = vld [vmem:[%s1 + $0x88] sm:$0xff]
  %v175 = vld [vmem:[%s1 + $0xc0] sm:$0xff]
  %v176 = vld [vmem:[%s1 + $0xc8] sm:$0xff]
  %v177 = vld [vmem:[%s1 + $0xd0] sm:$0xff]
  %v178 = vld [vmem:[%s1 + $0xd8] sm:$0xff]
  %v179 = vld [vmem:[%s1 + $0xe0] sm:$0xff]
  %v180 = vld [vmem:[%s1 + $0xe8] sm:$0xff]
  %v181 = vld [vmem:[%s1 + $0x120] sm:$0xff]
  %v182 = vld [vmem:[%s1 + $0x128] sm:$0xff]
  %v183 = vld [vmem:[%s1 + $0x130] sm:$0xff]
  %v184 = vld [vmem:[%s1 + $0x138] sm:$0xff]
  %v185 = vld [vmem:[%s1 + $0x140] sm:$0xff]
  %v186 = vld [vmem:[%s1 + $0x148] sm:$0xff]
  %v187 = vld [vmem:[%s1 + $0x180] sm:$0xff]
  %v188 = vld [vmem:[%s1 + $0x188] sm:$0xff]
  %v189 = vld [vmem:[%s1 + $0x190] sm:$0xff]
  %v190 = vld [vmem:[%s1 + $0x198] sm:$0xff]
  %v191 = vld [vmem:[%s1 + $0x1a0] sm:$0xff]
  %v192 = vld [vmem:[%s1 + $0x1a8] sm:$0xff]
  %v193 = vld [vmem:[%s1 + $0x1e0] sm:$0xff]
  %v194 = vld [vmem:[%s1 + $0x1e8] sm:$0xff]
  %v195 = vld [vmem:[%s1 + $0x1f0] sm:$0xff]
  %v196 = vld [vmem:[%s1 + $0x1f8] sm:$0xff]
  %v197 = vld [vmem:[%s1 + $0x200] sm:$0xff]
  %v198 = vld [vmem:[%s1 + $0x208] sm:$0xff]
  %v199 = vld [vmem:[%s1 + $0x240] sm:$0xff]
  %v200 = vld [vmem:[%s1 + $0x248] sm:$0xff]
  %v201 = vld [vmem:[%s1 + $0x250] sm:$0xff]
  %v202 = vld [vmem:[%s1 + $0x258] sm:$0xff]
  %v203 = vld [vmem:[%s1 + $0x260] sm:$0xff]
  %v204 = vld [vmem:[%s1 + $0x268] sm:$0xff]
  %v205 = vld [vmem:[%s1 + $0x2a0] sm:$0xff]
  %v206 = vld [vmem:[%s1 + $0x2a8] sm:$0xff]
  %v207 = vld [vmem:[%s1 + $0x2b0] sm:$0xff]
  %v208 = vld [vmem:[%s1 + $0x2b8] sm:$0xff]
  %v209 = vld [vmem:[%s1 + $0x2c0] sm:$0xff]
  %v210 = vld [vmem:[%s1 + $0x2c8] sm:$0xff]
  %v211 = vld [vmem:[%s1 + $0x300] sm:$0xff]
  %v212 = vld [vmem:[%s1 + $0x308] sm:$0xff]
  %v213 = vld [vmem:[%s1 + $0x310] sm:$0xff]
  %v214 = vld [vmem:[%s1 + $0x318] sm:$0xff]
  %v215 = vld [vmem:[%s1 + $0x320] sm:$0xff]
  %v216 = vld [vmem:[%s1 + $0x328] sm:$0xff]
  %v217 = vld [vmem:[%s1 + $0x360] sm:$0xff]
  %v218 = vld [vmem:[%s1 + $0x368] sm:$0xff]
  %v219 = vld [vmem:[%s1 + $0x370] sm:$0xff]
  %v220 = vld [vmem:[%s1 + $0x378] sm:$0xff]
  %v221 = vld [vmem:[%s1 + $0x380] sm:$0xff]
  %v222 = vld [vmem:[%s1 + $0x388] sm:$0xff]
  %v223 = vld [vmem:[%s1 + $0x3c0] sm:$0xff]
  %v224 = vld [vmem:[%s1 + $0x3c8] sm:$0xff]
  %v225 = vld [vmem:[%s1 + $0x3d0] sm:$0xff]
  %v226 = vld [vmem:[%s1 + $0x3d8] sm:$0xff]
  %v227 = vld [vmem:[%s1 + $0x3e0] sm:$0xff]
  %v228 = vld [vmem:[%s1 + $0x3e8] sm:$0xff]
  %v229 = vld [vmem:[%s1 + $0x420] sm:$0xff]
  %v230 = vld [vmem:[%s1 + $0x428] sm:$0xff]
  %v231 = vld [vmem:[%s1 + $0x430] sm:$0xff]
  %v232 = vld [vmem:[%s1 + $0x438] sm:$0xff]
  %v233 = vld [vmem:[%s1 + $0x440] sm:$0xff]
  %v234 = vld [vmem:[%s1 + $0x448] sm:$0xff]
  %v235 = vld [vmem:[%s1 + $0x480] sm:$0xff]
  %v236 = vld [vmem:[%s1 + $0x488] sm:$0xff]
  %v237 = vld [vmem:[%s1 + $0x490] sm:$0xff]
  %v238 = vld [vmem:[%s1 + $0x498] sm:$0xff]
  %v239 = vld [vmem:[%s1 + $0x4a0] sm:$0xff]
  %v240 = vld [vmem:[%s1 + $0x4a8] sm:$0xff]
  %v241 = vld [vmem:[%s1 + $0x4e0] sm:$0xff]
  %v242 = vld [vmem:[%s1 + $0x4e8] sm:$0xff]
  %v243 = vld [vmem:[%s1 + $0x4f0] sm:$0xff]
  %v244 = vld [vmem:[%s1 + $0x4f8] sm:$0xff]
  %v245 = vld [vmem:[%s1 + $0x500] sm:$0xff]
  %v246 = vld [vmem:[%s1 + $0x508] sm:$0xff]
  %v247 = vld [vmem:[%s1 + $0x540] sm:$0xff]
  %v248 = vld [vmem:[%s1 + $0x548] sm:$0xff]
  %v249 = vld [vmem:[%s1 + $0x550] sm:$0xff]
  %v250 = vld [vmem:[%s1 + $0x558] sm:$0xff]
  %v251 = vld [vmem:[%s1 + $0x560] sm:$0xff]
  %v252 = vld [vmem:[%s1 + $0x568] sm:$0xff]
  %v253 = vld [vmem:[%s1 + $0x5a0] sm:$0xff]
  %v254 = vld [vmem:[%s1 + $0x5a8] sm:$0xff]
  %v255 = vld [vmem:[%s1 + $0x5b0] sm:$0xff]
  %v256 = vld [vmem:[%s1 + $0x5b8] sm:$0xff]
  %v257 = vld [vmem:[%s1 + $0x5c0] sm:$0xff]
  %v258 = vld [vmem:[%s1 + $0x5c8] sm:$0xff]
  %v259 = vld [vmem:[%s1 + $0x600] sm:$0xff]
  %v260 = vld [vmem:[%s1 + $0x608] sm:$0xff]
  %v261 = vld [vmem:[%s1 + $0x610] sm:$0xff]
  %v262 = vld [vmem:[%s1 + $0x618] sm:$0xff]
  %v263 = vld [vmem:[%s1 + $0x620] sm:$0xff]
  %v264 = vld [vmem:[%s1 + $0x628] sm:$0xff]
  %v265 = vld [vmem:[%s1 + $0x660] sm:$0xff]
  %v266 = vld [vmem:[%s1 + $0x668] sm:$0xff]
  %v267 = vld [vmem:[%s1 + $0x670] sm:$0xff]
  %v268 = vld [vmem:[%s1 + $0x678] sm:$0xff]
  %v269 = vld [vmem:[%s1 + $0x680] sm:$0xff]
  %v270 = vld [vmem:[%s1 + $0x688] sm:$0xff]
  %v271 = vld [vmem:[%s1 + $0x6c0] sm:$0xff]
  %v272 = vld [vmem:[%s1 + $0x6c8] sm:$0xff]
  %v273 = vld [vmem:[%s1 + $0x6d0] sm:$0xff]
  %v274 = vld [vmem:[%s1 + $0x6d8] sm:$0xff]
  %v275 = vld [vmem:[%s1 + $0x6e0] sm:$0xff]
  %v276 = vld [vmem:[%s1 + $0x6e8] sm:$0xff]
  %v277 = vld [vmem:[%s1 + $0x720] sm:$0xff]
  %v278 = vld [vmem:[%s1 + $0x728] sm:$0xff]
  %v279 = vld [vmem:[%s1 + $0x730] sm:$0xff]
  %v280 = vld [vmem:[%s1 + $0x738] sm:$0xff]
  %v281 = vld [vmem:[%s1 + $0x740] sm:$0xff]
  %v282 = vld [vmem:[%s1 + $0x748] sm:$0xff]
  %v283 = vld [vmem:[%s1 + $0x780] sm:$0xff]
  %v284 = vld [vmem:[%s1 + $0x788] sm:$0xff]
  %v285 = vld [vmem:[%s1 + $0x790] sm:$0xff]
  %v286 = vld [vmem:[%s1 + $0x798] sm:$0xff]
  %v287 = vld [vmem:[%s1 + $0x7a0] sm:$0xff]
  %v288 = vld [vmem:[%s1 + $0x7a8] sm:$0xff]
  %v289 = vld [vmem:[%s1 + $0x7e0] sm:$0xff]
  %v290 = vld [vmem:[%s1 + $0x7e8] sm:$0xff]
  %v291 = vld [vmem:[%s1 + $0x7f0] sm:$0xff]
  %v292 = vld [vmem:[%s1 + $0x7f8] sm:$0xff]
  %v293 = vld [vmem:[%s1 + $0x800] sm:$0xff]
  %v294 = vld [vmem:[%s1 + $0x808] sm:$0xff]
  %v295 = vld [vmem:[%s1 + $0x840] sm:$0xff]
  %v296 = vld [vmem:[%s1 + $0x848] sm:$0xff]
  %v297 = vld [vmem:[%s1 + $0x850] sm:$0xff]
  %v298 = vld [vmem:[%s1 + $0x858] sm:$0xff]
  %v299 = vld [vmem:[%s1 + $0x860] sm:$0xff]
  %v300 = vld [vmem:[%s1 + $0x868] sm:$0xff]
  %v301 = vld [vmem:[%s1 + $0x8a0] sm:$0xff]
  %v302 = vld [vmem:[%s1 + $0x8a8] sm:$0xff]
  %v303 = vld [vmem:[%s1 + $0x8b0] sm:$0xff]
  %v304 = vld [vmem:[%s1 + $0x8b8] sm:$0xff]
  %v305 = vld [vmem:[%s1 + $0x8c0] sm:$0xff]
  %v306 = vld [vmem:[%s1 + $0x8c8] sm:$0xff]
  %v307 = vld [vmem:[%s1 + $0x900] sm:$0xff]
  %v308 = vld [vmem:[%s1 + $0x908] sm:$0xff]
  %v309 = vld [vmem:[%s1 + $0x910] sm:$0xff]
  %v310 = vld [vmem:[%s1 + $0x918] sm:$0xff]
  %v311 = vld [vmem:[%s1 + $0x920] sm:$0xff]
  %v312 = vld [vmem:[%s1 + $0x928] sm:$0xff]
  %v313 = vld [vmem:[%s1 + $0x960] sm:$0xff]
  %v314 = vld [vmem:[%s1 + $0x968] sm:$0xff]
  %v315 = vld [vmem:[%s1 + $0x970] sm:$0xff]
  %v316 = vld [vmem:[%s1 + $0x978] sm:$0xff]
  %v317 = vld [vmem:[%s1 + $0x980] sm:$0xff]
  %v318 = vld [vmem:[%s1 + $0x988] sm:$0xff]
  %v319 = vld [vmem:[%s1 + $0x9c0] sm:$0xff]
  %v320 = vld [vmem:[%s1 + $0x9c8] sm:$0xff]
  %v321 = vld [vmem:[%s1 + $0x9d0] sm:$0xff]
  %v322 = vld [vmem:[%s1 + $0x9d8] sm:$0xff]
  %v323 = vld [vmem:[%s1 + $0x9e0] sm:$0xff]
  %v324 = vld [vmem:[%s1 + $0x9e8] sm:$0xff]
  %v325 = vld [vmem:[%s1 + $0xa20] sm:$0xff]
  %v326 = vld [vmem:[%s1 + $0xa28] sm:$0xff]
  %v327 = vld [vmem:[%s1 + $0xa30] sm:$0xff]
  %v328 = vld [vmem:[%s1 + $0xa38] sm:$0xff]
  %v329 = vld [vmem:[%s1 + $0xa40] sm:$0xff]
  %v330 = vld [vmem:[%s1 + $0xa48] sm:$0xff]
  %v331 = vld [vmem:[%s1 + $0xa80] sm:$0xff]
  %v332 = vld [vmem:[%s1 + $0xa88] sm:$0xff]
  %v333 = vld [vmem:[%s1 + $0xa90] sm:$0xff]
  %v334 = vld [vmem:[%s1 + $0xa98] sm:$0xff]
  %v335 = vld [vmem:[%s1 + $0xaa0] sm:$0xff]
  %v336 = vld [vmem:[%s1 + $0xaa8] sm:$0xff]
  %v337 = vld [vmem:[%s1 + $0xae0] sm:$0xff]
  %v338 = vld [vmem:[%s1 + $0xae8] sm:$0xff]
  %v339 = vld [vmem:[%s1 + $0xaf0] sm:$0xff]
  %v340 = vld [vmem:[%s1 + $0xaf8] sm:$0xff]
  %v341 = vld [vmem:[%s1 + $0xb00] sm:$0xff]
  %v342 = vld [vmem:[%s1 + $0xb08] sm:$0xff]
  %v343 = vld [vmem:[%s1 + $0xb40] sm:$0xff]
  %v344 = vld [vmem:[%s1 + $0xb48] sm:$0xff]
  %v345 = vld [vmem:[%s1 + $0xb50] sm:$0xff]
  %v346 = vld [vmem:[%s1 + $0xb58] sm:$0xff]
  %v347 = vld [vmem:[%s1 + $0xb60] sm:$0xff]
  %v348 = vld [vmem:[%s1 + $0xb68] sm:$0xff]
  %v349 = vld [vmem:[%s1 + $0xba0] sm:$0xff]
  %v350 = vld [vmem:[%s1 + $0xba8] sm:$0xff]
  %v351 = vld [vmem:[%s1 + $0xbb0] sm:$0xff]
  %v352 = vld [vmem:[%s1 + $0xbb8] sm:$0xff]
  %v353 = vld [vmem:[%s1 + $0xbc0] sm:$0xff]
  %v354 = vld [vmem:[%s1 + $0xbc8] sm:$0xff]
  %v355 = vld [vmem:[%s1 + $0xc00] sm:$0xff]
  %v356 = vld [vmem:[%s1 + $0xc08] sm:$0xff]
  %v357 = vld [vmem:[%s1 + $0xc10] sm:$0xff]
  %v358 = vld [vmem:[%s1 + $0xc18] sm:$0xff]
  %v359 = vld [vmem:[%s1 + $0xc20] sm:$0xff]
  %v360 = vld [vmem:[%s1 + $0xc28] sm:$0xff]
  %v361 = vld [vmem:[%s1 + $0xc60] sm:$0xff]
  %v362 = vld [vmem:[%s1 + $0xc68] sm:$0xff]
  %v363 = vld [vmem:[%s1 + $0xc70] sm:$0xff]
  %v364 = vld [vmem:[%s1 + $0xc78] sm:$0xff]
  %v365 = vld [vmem:[%s1 + $0xc80] sm:$0xff]
  %v366 = vld [vmem:[%s1 + $0xc88] sm:$0xff]
  %v367 = vld [vmem:[%s1 + $0xcc0] sm:$0xff]
  %v368 = vld [vmem:[%s1 + $0xcc8] sm:$0xff]
  %v369 = vld [vmem:[%s1 + $0xcd0] sm:$0xff]
  %v370 = vld [vmem:[%s1 + $0xcd8] sm:$0xff]
  %v371 = vld [vmem:[%s1 + $0xce0] sm:$0xff]
  %v372 = vld [vmem:[%s1 + $0xce8] sm:$0xff]
  %v373 = vld [vmem:[%s1 + $0xd20] sm:$0xff]
  %v374 = vld [vmem:[%s1 + $0xd28] sm:$0xff]
  %v375 = vld [vmem:[%s1 + $0xd30] sm:$0xff]
  %v376 = vld [vmem:[%s1 + $0xd38] sm:$0xff]
  %v377 = vld [vmem:[%s1 + $0xd40] sm:$0xff]
  %v378 = vld [vmem:[%s1 + $0xd48] sm:$0xff]
  %v379 = vld [vmem:[%s1 + $0xd80] sm:$0xff]
  %v380 = vld [vmem:[%s1 + $0xd88] sm:$0xff]
  %v381 = vld [vmem:[%s1 + $0xd90] sm:$0xff]
  %v382 = vld [vmem:[%s1 + $0xd98] sm:$0xff]
  %v383 = vld [vmem:[%s1 + $0xda0] sm:$0xff]
  %v384 = vld [vmem:[%s1 + $0xda8] sm:$0xff]
  %v385 = vld [vmem:[%s1 + $0xde0] sm:$0xff]
  %v386 = vld [vmem:[%s1 + $0xde8] sm:$0xff]
  %v387 = vld [vmem:[%s1 + $0xdf0] sm:$0xff]
  %v388 = vld [vmem:[%s1 + $0xdf8] sm:$0xff]
  %v389 = vld [vmem:[%s1 + $0xe00] sm:$0xff]
  %v390 = vld [vmem:[%s1 + $0xe08] sm:$0xff]
  %v391 = vld [vmem:[%s1 + $0xe40] sm:$0xff]
  %v392 = vld [vmem:[%s1 + $0xe48] sm:$0xff]
  %v393 = vld [vmem:[%s1 + $0xe50] sm:$0xff]
  %v394 = vld [vmem:[%s1 + $0xe58] sm:$0xff]
  %v395 = vld [vmem:[%s1 + $0xe60] sm:$0xff]
  %v396 = vld [vmem:[%s1 + $0xe68] sm:$0xff]
  %v397 = vld [vmem:[%s1 + $0xea0] sm:$0xff]
  %v398 = vld [vmem:[%s1 + $0xea8] sm:$0xff]
  %v399 = vld [vmem:[%s1 + $0xeb0] sm:$0xff]
  %v400 = vld [vmem:[%s1 + $0xeb8] sm:$0xff]
  %v401 = vld [vmem:[%s1 + $0xec0] sm:$0xff]
  %v402 = vld [vmem:[%s1 + $0xec8] sm:$0xff]
  %v403 = vld [vmem:[%s1 + $0xf00] sm:$0xff]
  %v404 = vld [vmem:[%s1 + $0xf08] sm:$0xff]
  %v405 = vld [vmem:[%s1 + $0xf10] sm:$0xff]
  %v406 = vld [vmem:[%s1 + $0xf18] sm:$0xff]
  %v407 = vld [vmem:[%s1 + $0xf20] sm:$0xff]
  %v408 = vld [vmem:[%s1 + $0xf28] sm:$0xff]
  %v409 = vld [vmem:[%s1 + $0xf60] sm:$0xff]
  %v410 = vld [vmem:[%s1 + $0xf68] sm:$0xff]
  %v411 = vld [vmem:[%s1 + $0xf70] sm:$0xff]
  %v412 = vld [vmem:[%s1 + $0xf78] sm:$0xff]
  %v413 = vld [vmem:[%s1 + $0xf80] sm:$0xff]
  %v414 = vld [vmem:[%s1 + $0xf88] sm:$0xff]
  %v415 = vld [vmem:[%s1 + $0xfc0] sm:$0xff]
  %v416 = vld [vmem:[%s1 + $0xfc8] sm:$0xff]
  %v417 = vld [vmem:[%s1 + $0xfd0] sm:$0xff]
  %v418 = vld [vmem:[%s1 + $0xfd8] sm:$0xff]
  %v419 = vld [vmem:[%s1 + $0xfe0] sm:$0xff]
  %v420 = vld [vmem:[%s1 + $0xfe8] sm:$0xff]
  %v421 = vld [vmem:[%s1 + $0x1020] sm:$0xff]
  %v422 = vld [vmem:[%s1 + $0x1028] sm:$0xff]
  %v423 = vld [vmem:[%s1 + $0x1030] sm:$0xff]
  %v424 = vld [vmem:[%s1 + $0x1038] sm:$0xff]
  %v425 = vld [vmem:[%s1 + $0x1040] sm:$0xff]
  %v426 = vld [vmem:[%s1 + $0x1048] sm:$0xff]
  %v427 = vld [vmem:[%s1 + $0x1080] sm:$0xff]
  %v428 = vld [vmem:[%s1 + $0x1088] sm:$0xff]
  %v429 = vld [vmem:[%s1 + $0x1090] sm:$0xff]
  %v430 = vld [vmem:[%s1 + $0x1098] sm:$0xff]
  %v431 = vld [vmem:[%s1 + $0x10a0] sm:$0xff]
  %v432 = vld [vmem:[%s1 + $0x10a8] sm:$0xff]
  %v433 = vld [vmem:[%s1 + $0x10e0] sm:$0xff]
  %v434 = vld [vmem:[%s1 + $0x10e8] sm:$0xff]
  %v435 = vld [vmem:[%s1 + $0x10f0] sm:$0xff]
  %v436 = vld [vmem:[%s1 + $0x10f8] sm:$0xff]
  %v437 = vld [vmem:[%s1 + $0x1100] sm:$0xff]
  %v438 = vld [vmem:[%s1 + $0x1108] sm:$0xff]
  %v439 = vld [vmem:[%s1 + $0x1140] sm:$0xff]
  %v440 = vld [vmem:[%s1 + $0x1148] sm:$0xff]
  %v441 = vld [vmem:[%s1 + $0x1150] sm:$0xff]
  %v442 = vld [vmem:[%s1 + $0x1158] sm:$0xff]
  %v443 = vld [vmem:[%s1 + $0x1160] sm:$0xff]
  %v444 = vld [vmem:[%s1 + $0x1168] sm:$0xff]
  %v445 = vld [vmem:[%s1 + $0x11a0] sm:$0xff]
  %v446 = vld [vmem:[%s1 + $0x11a8] sm:$0xff]
  %v447 = vld [vmem:[%s1 + $0x11b0] sm:$0xff]
  %v448 = vld [vmem:[%s1 + $0x11b8] sm:$0xff]
  %v449 = vld [vmem:[%s1 + $0x11c0] sm:$0xff]
  %v450 = vld [vmem:[%s1 + $0x11c8] sm:$0xff]
  %451 = vmatprep.subr.mxu0 %v164
  %452 = vmatpush1.msra.mxu0 %v163
  %453 = vmatprep.subr.mxu0 %v170
  %454 = vmatpush1.msra.mxu0 %v169
  %455 = vmatprep.subr.mxu0 %v176
  %456 = vmatpush1.msra.mxu0 %v175
  %457 = vmatprep.subr.mxu0 %v182
  %458 = vmatpush1.msra.mxu0 %v181
  %459 = vmatprep.subr.mxu0 %v188
  %460 = vmatpush1.msra.mxu0 %v187
  %461 = vmatprep.subr.mxu0 %v194
  %462 = vmatpush1.msra.mxu0 %v193
  %463 = vmatprep.subr.mxu0 %v200
  %464 = vmatpush1.msra.mxu0 %v199
  %465 = vmatprep.subr.mxu0 %v206
  %466 = vmatpush1.msra.mxu0 %v205
  %467 = vmatprep.subr.mxu0 %v212
  %468 = vmatpush1.msra.mxu0 %v211
  %469 = vmatprep.subr.mxu0 %v218
  %470 = vmatpush1.msra.mxu0 %v217
  %471 = vmatprep.subr.mxu0 %v224
  %472 = vmatpush1.msra.mxu0 %v223
  %473 = vmatprep.subr.mxu0 %v230
  %474 = vmatpush1.msra.mxu0 %v229
  %475 = vmatprep.subr.mxu0 %v236
  %476 = vmatpush1.msra.mxu0 %v235
  %477 = vmatprep.subr.mxu0 %v242
  %478 = vmatpush1.msra.mxu0 %v241
  %479 = vmatprep.subr.mxu0 %v248
  %480 = vmatpush1.msra.mxu0 %v247
  %481 = vmatprep.subr.mxu0 %v254
  %482 = vmatpush1.msra.mxu0 %v253
  %483 = vmatprep.subr.mxu0 %v260
  %484 = vmatpush1.msra.mxu0 %v259
  %485 = vmatprep.subr.mxu0 %v266
  %486 = vmatpush1.msra.mxu0 %v265
  %487 = vmatprep.subr.mxu0 %v272
  %488 = vmatpush1.msra.mxu0 %v271
  %489 = vmatprep.subr.mxu0 %v278
  %490 = vmatpush1.msra.mxu0 %v277
  %491 = vmatprep.subr.mxu0 %v284
  %492 = vmatpush1.msra.mxu0 %v283
  %493 = vmatprep.subr.mxu0 %v290
  %494 = vmatpush1.msra.mxu0 %v289
  %495 = vmatprep.subr.mxu0 %v296
  %496 = vmatpush1.msra.mxu0 %v295
  %497 = vmatprep.subr.mxu0 %v302
  %498 = vmatpush1.msra.mxu0 %v301
  %499 = vmatprep.subr.mxu0 %v308
  %500 = vmatpush1.msra.mxu0 %v307
  %501 = vmatprep.subr.mxu0 %v314
  %502 = vmatpush1.msra.mxu0 %v313
  %503 = vmatprep.subr.mxu0 %v320
  %504 = vmatpush1.msra.mxu0 %v319
  %505 = vmatprep.subr.mxu0 %v326
  %506 = vmatpush1.msra.mxu0 %v325
  %507 = vmatprep.subr.mxu0 %v332
  %508 = vmatpush1.msra.mxu0 %v331
  %509 = vmatprep.subr.mxu0 %v338
  %510 = vmatpush1.msra.mxu0 %v337
  %511 = vmatprep.subr.mxu0 %v344
  %512 = vmatpush1.msra.mxu0 %v343
  %513 = vmatprep.subr.mxu0 %v350
  %514 = vmatpush1.msra.mxu0 %v349
  %515 = vmatprep.mubr.f32.mxu0 %v155
  %516 = vmatmul.mubr.f32.gmra.mrb[0].mxu0 %v151
  %v517 = vpop.f32.mrb[0].mxu0
  %v518 = vadd.f32 0.0, %v517
  %v519 = vpop.f32.mrb[0].mxu0
  %v520 = vadd.f32 0.0, %v519
  %521 = vmatprep.mubr.f32.mxu0 %v156
  %522 = vmatmul.mubr.f32.gmra.mrb[0].mxu0 %v152
  %v523 = vpop.f32.mrb[0].mxu0
  %v524 = vadd.f32 0.0, %v523
  %v525 = vpop.f32.mrb[0].mxu0
  %v526 = vadd.f32 0.0, %v525
  %527 = vmatprep.mubr.f32.mxu0 %v157
  %528 = vmatmul.mubr.f32.gmra.mrb[0].mxu0 %v153
  %v529 = vpop.f32.mrb[0].mxu0
  %v530 = vadd.f32 0.0, %v529
  %v531 = vpop.f32.mrb[0].mxu0
  %v532 = vadd.f32 0.0, %v531
  %533 = vmatprep.mubr.f32.mxu0 %v158
  %534 = vmatmul.mubr.f32.gmra.mrb[0].mxu0 %v154
  %v535 = vpop.f32.mrb[0].mxu0
  %v536 = vadd.f32 0.0, %v535
  %v537 = vpop.f32.mrb[0].mxu0
  %v538 = vadd.f32 0.0, %v537
  %539 = vdwg.mxu0
  %540 = vmatprep.subr.mxu0 %v356
  %541 = vmatpush1.msra.mxu0 %v355
  %542 = vmatprep.subr.mxu0 %v362
  %543 = vmatpush1.msra.mxu0 %v361
  %544 = vmatprep.subr.mxu0 %v368
  %545 = vmatpush1.msra.mxu0 %v367
  %546 = vmatprep.subr.mxu0 %v374
  %547 = vmatpush1.msra.mxu0 %v373
  %548 = vmatprep.subr.mxu0 %v380
  %549 = vmatpush1.msra.mxu0 %v379
  %550 = vmatprep.subr.mxu0 %v386
  %551 = vmatpush1.msra.mxu0 %v385
  %552 = vmatprep.subr.mxu0 %v392
  %553 = vmatpush1.msra.mxu0 %v391
  %554 = vmatprep.subr.mxu0 %v398
  %555 = vmatpush1.msra.mxu0 %v397
  %556 = vmatprep.subr.mxu0 %v404
  %557 = vmatpush1.msra.mxu0 %v403
  %558 = vmatprep.subr.mxu0 %v410
  %559 = vmatpush1.msra.mxu0 %v409
  %560 = vmatprep.subr.mxu0 %v416
  %561 = vmatpush1.msra.mxu0 %v415
  %562 = vmatprep.subr.mxu0 %v422
  %563 = vmatpush1.msra.mxu0 %v421
  %564 = vmatprep.subr.mxu0 %v428
  %565 = vmatpush1.msra.mxu0 %v427
  %566 = vmatprep.subr.mxu0 %v434
  %567 = vmatpush1.msra.mxu0 %v433
  %568 = vmatprep.subr.mxu0 %v440
  %569 = vmatpush1.msra.mxu0 %v439
  %570 = vmatprep.subr.mxu0 %v446
  %571 = vmatpush1.msra.mxu0 %v445
  %572 = vmatprep.subr.mxu0 0.0
  %573 = vmatpush1.msra.mxu0 0.0
  %574 = vmatprep.subr.mxu0 0.0
  %575 = vmatpush1.msra.mxu0 0.0
  %576 = vmatprep.subr.mxu0 0.0
  %577 = vmatpush1.msra.mxu0 0.0
  %578 = vmatprep.subr.mxu0 0.0
  %579 = vmatpush1.msra.mxu0 0.0
  %580 = vmatprep.subr.mxu0 0.0
  %581 = vmatpush1.msra.mxu0 0.0
  %582 = vmatprep.subr.mxu0 0.0
  %583 = vmatpush1.msra.mxu0 0.0
  %584 = vmatprep.subr.mxu0 0.0
  %585 = vmatpush1.msra.mxu0 0.0
  %586 = vmatprep.subr.mxu0 0.0
  %587 = vmatpush1.msra.mxu0 0.0
  %588 = vmatprep.subr.mxu0 0.0
  %589 = vmatpush1.msra.mxu0 0.0
  %590 = vmatprep.subr.mxu0 0.0
  %591 = vmatpush1.msra.mxu0 0.0
  %592 = vmatprep.subr.mxu0 0.0
  %593 = vmatpush1.msra.mxu0 0.0
  %594 = vmatprep.subr.mxu0 0.0
  %595 = vmatpush1.msra.mxu0 0.0
  %596 = vmatprep.subr.mxu0 0.0
  %597 = vmatpush1.msra.mxu0 0.0
  %598 = vmatprep.subr.mxu0 0.0
  %599 = vmatpush1.msra.mxu0 0.0
  %600 = vmatprep.subr.mxu0 0.0
  %601 = vmatpush1.msra.mxu0 0.0
  %602 = vmatprep.subr.mxu0 0.0
  %603 = vmatpush1.msra.mxu0 0.0
  %604 = vmatprep.mubr.f32.mxu0 0.0
  %605 = vmatmul.mubr.f32.gmra.mrb[0].mxu0 %v159
  %v606 = vpop.f32.mrb[0].mxu0
  %v607 = vadd.f32 %v518, %v606
  %v608 = vpop.f32.mrb[0].mxu0
  %v609 = vadd.f32 %v520, %v608
  %610 = vmatprep.mubr.f32.mxu0 0.0
  %611 = vmatmul.mubr.f32.gmra.mrb[0].mxu0 %v160
  %v612 = vpop.f32.mrb[0].mxu0
  %v613 = vadd.f32 %v524, %v612
  %v614 = vpop.f32.mrb[0].mxu0
  %v615 = vadd.f32 %v526, %v614
  %616 = vmatprep.mubr.f32.mxu0 0.0
  %617 = vmatmul.mubr.f32.gmra.mrb[0].mxu0 %v161
  %v618 = vpop.f32.mrb[0].mxu0
  %v619 = vadd.f32 %v530, %v618
  %v620 = vpop.f32.mrb[0].mxu0
  %v621 = vadd.f32 %v532, %v620
  %622 = vmatprep.mubr.f32.mxu0 0.0
  %623 = vmatmul.mubr.f32.gmra.mrb[0].mxu0 %v162
  %v624 = vpop.f32.mrb[0].mxu0
  %v625 = vadd.f32 %v536, %v624
  %v626 = vpop.f32.mrb[0].mxu0
  %v627 = vadd.f32 %v538, %v626
  %628 = vdwg.mxu0
  %629 = vmatprep.subr.mxu0 %v166
  %630 = vmatpush1.msra.mxu0 %v165
  %631 = vmatprep.subr.mxu0 %v172
  %632 = vmatpush1.msra.mxu0 %v171
  %633 = vmatprep.subr.mxu0 %v178
  %634 = vmatpush1.msra.mxu0 %v177
  %635 = vmatprep.subr.mxu0 %v184
  %636 = vmatpush1.msra.mxu0 %v183
  %637 = vmatprep.subr.mxu0 %v190
  %638 = vmatpush1.msra.mxu0 %v189
  %639 = vmatprep.subr.mxu0 %v196
  %640 = vmatpush1.msra.mxu0 %v195
  %641 = vmatprep.subr.mxu0 %v202
  %642 = vmatpush1.msra.mxu0 %v201
  %643 = vmatprep.subr.mxu0 %v208
  %644 = vmatpush1.msra.mxu0 %v207
  %645 = vmatprep.subr.mxu0 %v214
  %646 = vmatpush1.msra.mxu0 %v213
  %647 = vmatprep.subr.mxu0 %v220
  %648 = vmatpush1.msra.mxu0 %v219
  %649 = vmatprep.subr.mxu0 %v226
  %650 = vmatpush1.msra.mxu0 %v225
  %651 = vmatprep.subr.mxu0 %v232
  %652 = vmatpush1.msra.mxu0 %v231
  %653 = vmatprep.subr.mxu0 %v238
  %654 = vmatpush1.msra.mxu0 %v237
  %655 = vmatprep.subr.mxu0 %v244
  %656 = vmatpush1.msra.mxu0 %v243
  %657 = vmatprep.subr.mxu0 %v250
  %658 = vmatpush1.msra.mxu0 %v249
  %659 = vmatprep.subr.mxu0 %v256
  %660 = vmatpush1.msra.mxu0 %v255
  %661 = vmatprep.subr.mxu0 %v262
  %662 = vmatpush1.msra.mxu0 %v261
  %663 = vmatprep.subr.mxu0 %v268
  %664 = vmatpush1.msra.mxu0 %v267
  %665 = vmatprep.subr.mxu0 %v274
  %666 = vmatpush1.msra.mxu0 %v273
  %667 = vmatprep.subr.mxu0 %v280
  %668 = vmatpush1.msra.mxu0 %v279
  %669 = vmatprep.subr.mxu0 %v286
  %670 = vmatpush1.msra.mxu0 %v285
  %671 = vmatprep.subr.mxu0 %v292
  %672 = vmatpush1.msra.mxu0 %v291
  %673 = vmatprep.subr.mxu0 %v298
  %674 = vmatpush1.msra.mxu0 %v297
  %675 = vmatprep.subr.mxu0 %v304
  %676 = vmatpush1.msra.mxu0 %v303
  %677 = vmatprep.subr.mxu0 %v310
  %678 = vmatpush1.msra.mxu0 %v309
  %679 = vmatprep.subr.mxu0 %v316
  %680 = vmatpush1.msra.mxu0 %v315
  %681 = vmatprep.subr.mxu0 %v322
  %682 = vmatpush1.msra.mxu0 %v321
  %683 = vmatprep.subr.mxu0 %v328
  %684 = vmatpush1.msra.mxu0 %v327
  %685 = vmatprep.subr.mxu0 %v334
  %686 = vmatpush1.msra.mxu0 %v333
  %687 = vmatprep.subr.mxu0 %v340
  %688 = vmatpush1.msra.mxu0 %v339
  %689 = vmatprep.subr.mxu0 %v346
  %690 = vmatpush1.msra.mxu0 %v345
  %691 = vmatprep.subr.mxu0 %v352
  %692 = vmatpush1.msra.mxu0 %v351
  %693 = vmatprep.mubr.f32.mxu0 %v155
  %694 = vmatmul.mubr.f32.gmra.mrb[0].mxu0 %v151
  %v695 = vpop.f32.mrb[0].mxu0
  %v696 = vadd.f32 0.0, %v695
  %v697 = vpop.f32.mrb[0].mxu0
  %v698 = vadd.f32 0.0, %v697
  %699 = vmatprep.mubr.f32.mxu0 %v156
  %700 = vmatmul.mubr.f32.gmra.mrb[0].mxu0 %v152
  %v701 = vpop.f32.mrb[0].mxu0
  %v702 = vadd.f32 0.0, %v701
  %v703 = vpop.f32.mrb[0].mxu0
  %v704 = vadd.f32 0.0, %v703
  %705 = vmatprep.mubr.f32.mxu0 %v157
  %706 = vmatmul.mubr.f32.gmra.mrb[0].mxu0 %v153
  %v707 = vpop.f32.mrb[0].mxu0
  %v708 = vadd.f32 0.0, %v707
  %v709 = vpop.f32.mrb[0].mxu0
  %v710 = vadd.f32 0.0, %v709
  %711 = vmatprep.mubr.f32.mxu0 %v158
  %712 = vmatmul.mubr.f32.gmra.mrb[0].mxu0 %v154
  %v713 = vpop.f32.mrb[0].mxu0
  %v714 = vadd.f32 0.0, %v713
  %v715 = vpop.f32.mrb[0].mxu0
  %v716 = vadd.f32 0.0, %v715
  %717 = vdwg.mxu0
  %718 = vmatprep.subr.mxu0 %v358
  %719 = vmatpush1.msra.mxu0 %v357
  %720 = vmatprep.subr.mxu0 %v364
  %721 = vmatpush1.msra.mxu0 %v363
  %722 = vmatprep.subr.mxu0 %v370
  %723 = vmatpush1.msra.mxu0 %v369
  %724 = vmatprep.subr.mxu0 %v376
  %725 = vmatpush1.msra.mxu0 %v375
  %726 = vmatprep.subr.mxu0 %v382
  %727 = vmatpush1.msra.mxu0 %v381
  %728 = vmatprep.subr.mxu0 %v388
  %729 = vmatpush1.msra.mxu0 %v387
  %730 = vmatprep.subr.mxu0 %v394
  %731 = vmatpush1.msra.mxu0 %v393
  %732 = vmatprep.subr.mxu0 %v400
  %733 = vmatpush1.msra.mxu0 %v399
  %734 = vmatprep.subr.mxu0 %v406
  %735 = vmatpush1.msra.mxu0 %v405
  %736 = vmatprep.subr.mxu0 %v412
  %737 = vmatpush1.msra.mxu0 %v411
  %738 = vmatprep.subr.mxu0 %v418
  %739 = vmatpush1.msra.mxu0 %v417
  %740 = vmatprep.subr.mxu0 %v424
  %741 = vmatpush1.msra.mxu0 %v423
  %742 = vmatprep.subr.mxu0 %v430
  %743 = vmatpush1.msra.mxu0 %v429
  %744 = vmatprep.subr.mxu0 %v436
  %745 = vmatpush1.msra.mxu0 %v435
  %746 = vmatprep.subr.mxu0 %v442
  %747 = vmatpush1.msra.mxu0 %v441
  %748 = vmatprep.subr.mxu0 %v448
  %749 = vmatpush1.msra.mxu0 %v447
  %750 = vmatprep.subr.mxu0 0.0
  %751 = vmatpush1.msra.mxu0 0.0
  %752 = vmatprep.subr.mxu0 0.0
  %753 = vmatpush1.msra.mxu0 0.0
  %754 = vmatprep.subr.mxu0 0.0
  %755 = vmatpush1.msra.mxu0 0.0
  %756 = vmatprep.subr.mxu0 0.0
  %757 = vmatpush1.msra.mxu0 0.0
  %758 = vmatprep.subr.mxu0 0.0
  %759 = vmatpush1.msra.mxu0 0.0
  %760 = vmatprep.subr.mxu0 0.0
  %761 = vmatpush1.msra.mxu0 0.0
  %762 = vmatprep.subr.mxu0 0.0
  %763 = vmatpush1.msra.mxu0 0.0
  %764 = vmatprep.subr.mxu0 0.0
  %765 = vmatpush1.msra.mxu0 0.0
  %766 = vmatprep.subr.mxu0 0.0
  %767 = vmatpush1.msra.mxu0 0.0
  %768 = vmatprep.subr.mxu0 0.0
  %769 = vmatpush1.msra.mxu0 0.0
  %770 = vmatprep.subr.mxu0 0.0
  %771 = vmatpush1.msra.mxu0 0.0
  %772 = vmatprep.subr.mxu0 0.0
  %773 = vmatpush1.msra.mxu0 0.0
  %774 = vmatprep.subr.mxu0 0.0
  %775 = vmatpush1.msra.mxu0 0.0
  %776 = vmatprep.subr.mxu0 0.0
  %777 = vmatpush1.msra.mxu0 0.0
  %778 = vmatprep.subr.mxu0 0.0
  %779 = vmatpush1.msra.mxu0 0.0
  %780 = vmatprep.subr.mxu0 0.0
  %781 = vmatpush1.msra.mxu0 0.0
  %782 = vmatprep.mubr.f32.mxu0 0.0
  %783 = vmatmul.mubr.f32.gmra.mrb[0].mxu0 %v159
  %v784 = vpop.f32.mrb[0].mxu0
  %v785 = vadd.f32 %v696, %v784
  %v786 = vpop.f32.mrb[0].mxu0
  %v787 = vadd.f32 %v698, %v786
  %788 = vmatprep.mubr.f32.mxu0 0.0
  %789 = vmatmul.mubr.f32.gmra.mrb[0].mxu0 %v160
  %v790 = vpop.f32.mrb[0].mxu0
  %v791 = vadd.f32 %v702, %v790
  %v792 = vpop.f32.mrb[0].mxu0
  %v793 = vadd.f32 %v704, %v792
  %794 = vmatprep.mubr.f32.mxu0 0.0
  %795 = vmatmul.mubr.f32.gmra.mrb[0].mxu0 %v161
  %v796 = vpop.f32.mrb[0].mxu0
  %v797 = vadd.f32 %v708, %v796
  %v798 = vpop.f32.mrb[0].mxu0
  %v799 = vadd.f32 %v710, %v798
  %800 = vmatprep.mubr.f32.mxu0 0.0
  %801 = vmatmul.mubr.f32.gmra.mrb[0].mxu0 %v162
  %v802 = vpop.f32.mrb[0].mxu0
  %v803 = vadd.f32 %v714, %v802
  %v804 = vpop.f32.mrb[0].mxu0
  %v805 = vadd.f32 %v716, %v804
  %806 = vdwg.mxu0
  %807 = vmatprep.subr.mxu0 %v168
  %808 = vmatpush1.msra.mxu0 %v167
  %809 = vmatprep.subr.mxu0 %v174
  %810 = vmatpush1.msra.mxu0 %v173
  %811 = vmatprep.subr.mxu0 %v180
  %812 = vmatpush1.msra.mxu0 %v179
  %813 = vmatprep.subr.mxu0 %v186
  %814 = vmatpush1.msra.mxu0 %v185
  %815 = vmatprep.subr.mxu0 %v192
  %816 = vmatpush1.msra.mxu0 %v191
  %817 = vmatprep.subr.mxu0 %v198
  %818 = vmatpush1.msra.mxu0 %v197
  %819 = vmatprep.subr.mxu0 %v204
  %820 = vmatpush1.msra.mxu0 %v203
  %821 = vmatprep.subr.mxu0 %v210
  %822 = vmatpush1.msra.mxu0 %v209
  %823 = vmatprep.subr.mxu0 %v216
  %824 = vmatpush1.msra.mxu0 %v215
  %825 = vmatprep.subr.mxu0 %v222
  %826 = vmatpush1.msra.mxu0 %v221
  %827 = vmatprep.subr.mxu0 %v228
  %828 = vmatpush1.msra.mxu0 %v227
  %829 = vmatprep.subr.mxu0 %v234
  %830 = vmatpush1.msra.mxu0 %v233
  %831 = vmatprep.subr.mxu0 %v240
  %832 = vmatpush1.msra.mxu0 %v239
  %833 = vmatprep.subr.mxu0 %v246
  %834 = vmatpush1.msra.mxu0 %v245
  %835 = vmatprep.subr.mxu0 %v252
  %836 = vmatpush1.msra.mxu0 %v251
  %837 = vmatprep.subr.mxu0 %v258
  %838 = vmatpush1.msra.mxu0 %v257
  %839 = vmatprep.subr.mxu0 %v264
  %840 = vmatpush1.msra.mxu0 %v263
  %841 = vmatprep.subr.mxu0 %v270
  %842 = vmatpush1.msra.mxu0 %v269
  %843 = vmatprep.subr.mxu0 %v276
  %844 = vmatpush1.msra.mxu0 %v275
  %845 = vmatprep.subr.mxu0 %v282
  %846 = vmatpush1.msra.mxu0 %v281
  %847 = vmatprep.subr.mxu0 %v288
  %848 = vmatpush1.msra.mxu0 %v287
  %849 = vmatprep.subr.mxu0 %v294
  %850 = vmatpush1.msra.mxu0 %v293
  %851 = vmatprep.subr.mxu0 %v300
  %852 = vmatpush1.msra.mxu0 %v299
  %853 = vmatprep.subr.mxu0 %v306
  %854 = vmatpush1.msra.mxu0 %v305
  %855 = vmatprep.subr.mxu0 %v312
  %856 = vmatpush1.msra.mxu0 %v311
  %857 = vmatprep.subr.mxu0 %v318
  %858 = vmatpush1.msra.mxu0 %v317
  %859 = vmatprep.subr.mxu0 %v324
  %860 = vmatpush1.msra.mxu0 %v323
  %861 = vmatprep.subr.mxu0 %v330
  %862 = vmatpush1.msra.mxu0 %v329
  %863 = vmatprep.subr.mxu0 %v336
  %864 = vmatpush1.msra.mxu0 %v335
  %865 = vmatprep.subr.mxu0 %v342
  %866 = vmatpush1.msra.mxu0 %v341
  %867 = vmatprep.subr.mxu0 %v348
  %868 = vmatpush1.msra.mxu0 %v347
  %869 = vmatprep.subr.mxu0 %v354
  %870 = vmatpush1.msra.mxu0 %v353
  %871 = vmatprep.mubr.f32.mxu0 %v155
  %872 = vmatmul.mubr.f32.gmra.mrb[0].mxu0 %v151
  %v873 = vpop.f32.mrb[0].mxu0
  %v874 = vadd.f32 0.0, %v873
  %v875 = vpop.f32.mrb[0].mxu0
  %v876 = vadd.f32 0.0, %v875
  %877 = vmatprep.mubr.f32.mxu0 %v156
  %878 = vmatmul.mubr.f32.gmra.mrb[0].mxu0 %v152
  %v879 = vpop.f32.mrb[0].mxu0
  %v880 = vadd.f32 0.0, %v879
  %v881 = vpop.f32.mrb[0].mxu0
  %v882 = vadd.f32 0.0, %v881
  %883 = vmatprep.mubr.f32.mxu0 %v157
  %884 = vmatmul.mubr.f32.gmra.mrb[0].mxu0 %v153
  %v885 = vpop.f32.mrb[0].mxu0
  %v886 = vadd.f32 0.0, %v885
  %v887 = vpop.f32.mrb[0].mxu0
  %v888 = vadd.f32 0.0, %v887
  %889 = vmatprep.mubr.f32.mxu0 %v158
  %890 = vmatmul.mubr.f32.gmra.mrb[0].mxu0 %v154
  %v891 = vpop.f32.mrb[0].mxu0
  %v892 = vadd.f32 0.0, %v891
  %v893 = vpop.f32.mrb[0].mxu0
  %v894 = vadd.f32 0.0, %v893
  %895 = vdwg.mxu0
  %896 = vmatprep.subr.mxu0 %v360
  %897 = vmatpush1.msra.mxu0 %v359
  %898 = vmatprep.subr.mxu0 %v366
  %899 = vmatpush1.msra.mxu0 %v365
  %900 = vmatprep.subr.mxu0 %v372
  %901 = vmatpush1.msra.mxu0 %v371
  %902 = vmatprep.subr.mxu0 %v378
  %903 = vmatpush1.msra.mxu0 %v377
  %904 = vmatprep.subr.mxu0 %v384
  %905 = vmatpush1.msra.mxu0 %v383
  %906 = vmatprep.subr.mxu0 %v390
  %907 = vmatpush1.msra.mxu0 %v389
  %908 = vmatprep.subr.mxu0 %v396
  %909 = vmatpush1.msra.mxu0 %v395
  %910 = vmatprep.subr.mxu0 %v402
  %911 = vmatpush1.msra.mxu0 %v401
  %912 = vmatprep.subr.mxu0 %v408
  %913 = vmatpush1.msra.mxu0 %v407
  %914 = vmatprep.subr.mxu0 %v414
  %915 = vmatpush1.msra.mxu0 %v413
  %916 = vmatprep.subr.mxu0 %v420
  %917 = vmatpush1.msra.mxu0 %v419
  %918 = vmatprep.subr.mxu0 %v426
  %919 = vmatpush1.msra.mxu0 %v425
  %920 = vmatprep.subr.mxu0 %v432
  %921 = vmatpush1.msra.mxu0 %v431
  %922 = vmatprep.subr.mxu0 %v438
  %923 = vmatpush1.msra.mxu0 %v437
  %924 = vmatprep.subr.mxu0 %v444
  %925 = vmatpush1.msra.mxu0 %v443
  %926 = vmatprep.subr.mxu0 %v450
  %927 = vmatpush1.msra.mxu0 %v449
  %928 = vmatprep.subr.mxu0 0.0
  %929 = vmatpush1.msra.mxu0 0.0
  %930 = vmatprep.subr.mxu0 0.0
  %931 = vmatpush1.msra.mxu0 0.0
  %932 = vmatprep.subr.mxu0 0.0
  %933 = vmatpush1.msra.mxu0 0.0
  %934 = vmatprep.subr.mxu0 0.0
  %935 = vmatpush1.msra.mxu0 0.0
  %936 = vmatprep.subr.mxu0 0.0
  %937 = vmatpush1.msra.mxu0 0.0
  %938 = vmatprep.subr.mxu0 0.0
  %939 = vmatpush1.msra.mxu0 0.0
  %940 = vmatprep.subr.mxu0 0.0
  %941 = vmatpush1.msra.mxu0 0.0
  %942 = vmatprep.subr.mxu0 0.0
  %943 = vmatpush1.msra.mxu0 0.0
  %944 = vmatprep.subr.mxu0 0.0
  %945 = vmatpush1.msra.mxu0 0.0
  %946 = vmatprep.subr.mxu0 0.0
  %947 = vmatpush1.msra.mxu0 0.0
  %948 = vmatprep.subr.mxu0 0.0
  %949 = vmatpush1.msra.mxu0 0.0
  %950 = vmatprep.subr.mxu0 0.0
  %951 = vmatpush1.msra.mxu0 0.0
  %952 = vmatprep.subr.mxu0 0.0
  %953 = vmatpush1.msra.mxu0 0.0
  %954 = vmatprep.subr.mxu0 0.0
  %955 = vmatpush1.msra.mxu0 0.0
  %956 = vmatprep.subr.mxu0 0.0
  %957 = vmatpush1.msra.mxu0 0.0
  %958 = vmatprep.subr.mxu0 0.0
  %959 = vmatpush1.msra.mxu0 0.0
  %960 = vmatprep.mubr.f32.mxu0 0.0
  %961 = vmatmul.mubr.f32.gmra.mrb[0].mxu0 %v159
  %v962 = vpop.f32.mrb[0].mxu0
  %v963 = vadd.f32 %v874, %v962
  %v964 = vpop.f32.mrb[0].mxu0
  %v965 = vadd.f32 %v876, %v964
  %966 = vmatprep.mubr.f32.mxu0 0.0
  %967 = vmatmul.mubr.f32.gmra.mrb[0].mxu0 %v160
  %v968 = vpop.f32.mrb[0].mxu0
  %v969 = vadd.f32 %v880, %v968
  %v970 = vpop.f32.mrb[0].mxu0
  %v971 = vadd.f32 %v882, %v970
  %972 = vmatprep.mubr.f32.mxu0 0.0
  %973 = vmatmul.mubr.f32.gmra.mrb[0].mxu0 %v161
  %v974 = vpop.f32.mrb[0].mxu0
  %v975 = vadd.f32 %v886, %v974
  %v976 = vpop.f32.mrb[0].mxu0
  %v977 = vadd.f32 %v888, %v976
  %978 = vmatprep.mubr.f32.mxu0 0.0
  %979 = vmatmul.mubr.f32.gmra.mrb[0].mxu0 %v162
  %v980 = vpop.f32.mrb[0].mxu0
  %v981 = vadd.f32 %v892, %v980
  %v982 = vpop.f32.mrb[0].mxu0
  %v983 = vadd.f32 %v894, %v982
  %984 = vdwg.mxu0
  %v985 = vadd.f32 %v607, %v613
  %v986 = vadd.f32 %v985, %v619
  %v987 = vadd.f32 %v986, %v625
  %v988 = vrot.slane %v987, 4
  %v989 = vadd.f32 %v987, %v988
  %v990 = vrot.slane %v989, 2
  %v991 = vadd.f32 %v989, %v990
  %v992 = vrot.slane %v991, 1
  %v993 = vadd.f32 %v991, %v992
  %v994 = vadd.f32 %v609, %v615
  %v995 = vadd.f32 %v994, %v621
  %v996 = vadd.f32 %v995, %v627
  %v997 = vrot.slane %v996, 4
  %v998 = vadd.f32 %v996, %v997
  %v999 = vrot.slane %v998, 2
  %v1000 = vadd.f32 %v998, %v999
  %v1001 = vrot.slane %v1000, 1
  %v1002 = vadd.f32 %v1000, %v1001
  %v1003 = vadd.f32 %v785, %v791
  %v1004 = vadd.f32 %v1003, %v797
  %v1005 = vadd.f32 %v1004, %v803
  %v1006 = vrot.slane %v1005, 4
  %v1007 = vadd.f32 %v1005, %v1006
  %v1008 = vrot.slane %v1007, 2
  %v1009 = vadd.f32 %v1007, %v1008
  %v1010 = vrot.slane %v1009, 1
  %v1011 = vadd.f32 %v1009, %v1010
  %v1012 = vadd.f32 %v787, %v793
  %v1013 = vadd.f32 %v1012, %v799
  %v1014 = vadd.f32 %v1013, %v805
  %v1015 = vrot.slane %v1014, 4
  %v1016 = vadd.f32 %v1014, %v1015
  %v1017 = vrot.slane %v1016, 2
  %v1018 = vadd.f32 %v1016, %v1017
  %v1019 = vrot.slane %v1018, 1
  %v1020 = vadd.f32 %v1018, %v1019
  %v1021 = vadd.f32 %v963, %v969
  %v1022 = vadd.f32 %v1021, %v975
  %v1023 = vadd.f32 %v1022, %v981
  %v1024 = vrot.slane %v1023, 4
  %v1025 = vadd.f32 %v1023, %v1024
  %v1026 = vrot.slane %v1025, 2
  %v1027 = vadd.f32 %v1025, %v1026
  %v1028 = vrot.slane %v1027, 1
  %v1029 = vadd.f32 %v1027, %v1028
  %v1030 = vadd.f32 %v965, %v971
  %v1031 = vadd.f32 %v1030, %v977
  %v1032 = vadd.f32 %v1031, %v983
  %v1033 = vrot.slane %v1032, 4
  %v1034 = vadd.f32 %v1032, %v1033
  %v1035 = vrot.slane %v1034, 2
  %v1036 = vadd.f32 %v1034, %v1035
  %v1037 = vrot.slane %v1036, 1
  %v1038 = vadd.f32 %v1036, %v1037
  %v1039 = vmul.f32 %v607, %v607
  %v1040 = vmul.f32 %v609, %v609
  %v1041 = vmul.f32 %v785, %v785
  %v1042 = vmul.f32 %v787, %v787
  %v1043 = vmul.f32 %v963, %v963
  %v1044 = vmul.f32 %v965, %v965
  %v1045 = vmul.f32 %v613, %v613
  %v1046 = vmul.f32 %v615, %v615
  %v1047 = vmul.f32 %v791, %v791
  %v1048 = vmul.f32 %v793, %v793
  %v1049 = vmul.f32 %v969, %v969
  %v1050 = vmul.f32 %v971, %v971
  %v1051 = vmul.f32 %v619, %v619
  %v1052 = vmul.f32 %v621, %v621
  %v1053 = vmul.f32 %v797, %v797
  %v1054 = vmul.f32 %v799, %v799
  %v1055 = vmul.f32 %v975, %v975
  %v1056 = vmul.f32 %v977, %v977
  %v1057 = vmul.f32 %v625, %v625
  %v1058 = vmul.f32 %v627, %v627
  %v1059 = vmul.f32 %v803, %v803
  %v1060 = vmul.f32 %v805, %v805
  %v1061 = vmul.f32 %v981, %v981
  %v1062 = vmul.f32 %v983, %v983
  %v1063 = vadd.f32 %v1039, %v1045
  %v1064 = vadd.f32 %v1063, %v1051
  %v1065 = vadd.f32 %v1064, %v1057
  %v1066 = vrot.slane %v1065, 4
  %v1067 = vadd.f32 %v1065, %v1066
  %v1068 = vrot.slane %v1067, 2
  %v1069 = vadd.f32 %v1067, %v1068
  %v1070 = vrot.slane %v1069, 1
  %v1071 = vadd.f32 %v1069, %v1070
  %v1072 = vadd.f32 %v1040, %v1046
  %v1073 = vadd.f32 %v1072, %v1052
  %v1074 = vadd.f32 %v1073, %v1058
  %v1075 = vrot.slane %v1074, 4
  %v1076 = vadd.f32 %v1074, %v1075
  %v1077 = vrot.slane %v1076, 2
  %v1078 = vadd.f32 %v1076, %v1077
  %v1079 = vrot.slane %v1078, 1
  %v1080 = vadd.f32 %v1078, %v1079
  %v1081 = vadd.f32 %v1041, %v1047
  %v1082 = vadd.f32 %v1081, %v1053
  %v1083 = vadd.f32 %v1082, %v1059
  %v1084 = vrot.slane %v1083, 4
  %v1085 = vadd.f32 %v1083, %v1084
  %v1086 = vrot.slane %v1085, 2
  %v1087 = vadd.f32 %v1085, %v1086
  %v1088 = vrot.slane %v1087, 1
  %v1089 = vadd.f32 %v1087, %v1088
  %v1090 = vadd.f32 %v1042, %v1048
  %v1091 = vadd.f32 %v1090, %v1054
  %v1092 = vadd.f32 %v1091, %v1060
  %v1093 = vrot.slane %v1092, 4
  %v1094 = vadd.f32 %v1092, %v1093
  %v1095 = vrot.slane %v1094, 2
  %v1096 = vadd.f32 %v1094, %v1095
  %v1097 = vrot.slane %v1096, 1
  %v1098 = vadd.f32 %v1096, %v1097
  %v1099 = vadd.f32 %v1043, %v1049
  %v1100 = vadd.f32 %v1099, %v1055
  %v1101 = vadd.f32 %v1100, %v1061
  %v1102 = vrot.slane %v1101, 4
  %v1103 = vadd.f32 %v1101, %v1102
  %v1104 = vrot.slane %v1103, 2
  %v1105 = vadd.f32 %v1103, %v1104
  %v1106 = vrot.slane %v1105, 1
  %v1107 = vadd.f32 %v1105, %v1106
  %v1108 = vadd.f32 %v1044, %v1050
  %v1109 = vadd.f32 %v1108, %v1056
  %v1110 = vadd.f32 %v1109, %v1062
  %v1111 = vrot.slane %v1110, 4
  %v1112 = vadd.f32 %v1110, %v1111
  %v1113 = vrot.slane %v1112, 2
  %v1114 = vadd.f32 %v1112, %v1113
  %v1115 = vrot.slane %v1114, 1
  %v1116 = vadd.f32 %v1114, %v1115
  %v1117 = vsel %vm61, %v993, %v1002
  %vm1118 = vcmask 1041408
  %v1119 = vsel %vm1118, %v1117, %v1011
  %vm1120 = vcmask 1042432
  %v1121 = vsel %vm1120, %v1119, %v1020
  %vm1122 = vcmask 1043456
  %v1123 = vsel %vm1122, %v1121, %v1029
  %vm1124 = vcmask 1044480
  %v1125 = vsel %vm1124, %v1123, %v1038
  %vm1126 = vcmask 1045504
  %v1127 = vsel %vm1126, %v1125, %v1071
  %v1128 = vsel %vm76, %v1127, %v1080
  %v1129 = vsel %vm61, %v1089, %v1098
  %v1130 = vsel %vm1118, %v1129, %v1107
  %v1131 = vsel %vm1120, %v1130, %v1116
  %1132 = vmatprep.subr.mxu0 0.0
  %1133 = vmatpush1.msra.mxu0 %v36
  %1134 = vmatprep.subr.mxu0 0.0
  %1135 = vmatpush1.msra.mxu0 %v37
  %1136 = vmatprep.subr.mxu0 0.0
  %1137 = vmatpush1.msra.mxu0 %v38
  %1138 = vmatprep.subr.mxu0 0.0
  %1139 = vmatpush1.msra.mxu0 %v39
  %1140 = vmatprep.subr.mxu0 0.0
  %1141 = vmatpush1.msra.mxu0 %v40
  %1142 = vmatprep.subr.mxu0 0.0
  %1143 = vmatpush1.msra.mxu0 %v41
  %1144 = vmatprep.subr.mxu0 0.0
  %1145 = vmatpush1.msra.mxu0 %v42
  %1146 = vmatprep.subr.mxu0 0.0
  %1147 = vmatpush1.msra.mxu0 %v43
  %1148 = vmatprep.subr.mxu0 0.0
  %1149 = vmatpush1.msra.mxu0 %v44
  %1150 = vmatprep.subr.mxu0 0.0
  %1151 = vmatpush1.msra.mxu0 %v45
  %1152 = vmatprep.subr.mxu0 0.0
  %1153 = vmatpush1.msra.mxu0 %v46
  %1154 = vmatprep.subr.mxu0 0.0
  %1155 = vmatpush1.msra.mxu0 %v47
  %1156 = vmatprep.subr.mxu0 0.0
  %1157 = vmatpush1.msra.mxu0 %v48
  %1158 = vmatprep.subr.mxu0 0.0
  %1159 = vmatpush1.msra.mxu0 %v49
  %1160 = vmatprep.subr.mxu0 0.0
  %1161 = vmatpush1.msra.mxu0 %v50
  %1162 = vmatprep.subr.mxu0 0.0
  %1163 = vmatpush1.msra.mxu0 %v51
  %1164 = vmatprep.subr.mxu0 0.0
  %1165 = vmatpush1.msra.mxu0 0.0
  %1166 = vmatprep.subr.mxu0 0.0
  %1167 = vmatpush1.msra.mxu0 0.0
  %1168 = vmatprep.subr.mxu0 0.0
  %1169 = vmatpush1.msra.mxu0 0.0
  %1170 = vmatprep.subr.mxu0 0.0
  %1171 = vmatpush1.msra.mxu0 0.0
  %1172 = vmatprep.subr.mxu0 0.0
  %1173 = vmatpush1.msra.mxu0 0.0
  %1174 = vmatprep.subr.mxu0 0.0
  %1175 = vmatpush1.msra.mxu0 0.0
  %1176 = vmatprep.subr.mxu0 0.0
  %1177 = vmatpush1.msra.mxu0 0.0
  %1178 = vmatprep.subr.mxu0 0.0
  %1179 = vmatpush1.msra.mxu0 0.0
  %1180 = vmatprep.subr.mxu0 0.0
  %1181 = vmatpush1.msra.mxu0 0.0
  %1182 = vmatprep.subr.mxu0 0.0
  %1183 = vmatpush1.msra.mxu0 0.0
  %1184 = vmatprep.subr.mxu0 0.0
  %1185 = vmatpush1.msra.mxu0 0.0
  %1186 = vmatprep.subr.mxu0 0.0
  %1187 = vmatpush1.msra.mxu0 0.0
  %1188 = vmatprep.subr.mxu0 0.0
  %1189 = vmatpush1.msra.mxu0 0.0
  %1190 = vmatprep.subr.mxu0 0.0
  %1191 = vmatpush1.msra.mxu0 0.0
  %1192 = vmatprep.subr.mxu0 0.0
  %1193 = vmatpush1.msra.mxu0 0.0
  %1194 = vmatprep.subr.mxu0 0.0
  %1195 = vmatpush1.msra.mxu0 0.0
  %1196 = vmatprep.mubr.f32.mxu0 0.0
  %1197 = vmatmul.mubr.f32.gmra.mrb[0].mxu0 %v1128
  %v1198 = vpop.f32.mrb[0].mxu0
  %v1199 = vadd.f32 0.0, %v1198
  %v1200 = vpop.f32.mrb[0].mxu0
  %1201 = vmatprep.mubr.f32.mxu0 0.0
  %1202 = vmatmul.mubr.f32.gmra.mrb[0].mxu0 %v1131
  %v1203 = vpop.f32.mrb[0].mxu0
  %v1204 = vadd.f32 0.0, %v1203
  %v1205 = vpop.f32.mrb[0].mxu0
  %1206 = vdwg.mxu0
  %v1208 = vrot.slane %v1199, 1
  %v1210 = vrot.slane %v1199, 2
  %v1212 = vrot.slane %v1199, 3
  %v1214 = vrot.slane %v1199, 4
  %v1216 = vrot.slane %v1199, 5
  %v1218 = vmul.f32 %v1199, 0.001953125
  %v1219 = vmul.f32 %v1208, 0.001953125
  %v1220 = vmul.f32 %v1210, 0.001953125
  %v1221 = vmul.f32 %v1212, 0.001953125
  %v1222 = vmul.f32 %v1214, 0.001953125
  %v1223 = vmul.f32 %v1216, 0.001953125
  %v1225 = vrot.slane %v1204, 2
  %v1227 = vrot.slane %v1204, 3
  %v1229 = vrot.slane %v1204, 4
  %v1231 = vrot.slane %v1204, 5
  %v1233 = vmul.f32 %v1225, 0.001953125
  %v1234 = vmul.f32 %v1227, 0.001953125
  %v1235 = vmul.f32 %v1229, 0.001953125
  %v1236 = vmul.f32 %v1231, 0.001953125
  %v1237 = vmul.f32 %v1218, %v1218
  %v1238 = vmul.f32 %v1219, %v1219
  %v1239 = vmul.f32 %v1220, %v1220
  %v1240 = vmul.f32 %v1221, %v1221
  %v1241 = vmul.f32 %v1222, %v1222
  %v1242 = vmul.f32 %v1223, %v1223
  %v1249 = vrot.slane %v1237, 2
  %v1250 = vrot.slane %v1238, 2
  %v1251 = vrot.slane %v1239, 2
  %v1252 = vrot.slane %v1240, 2
  %v1253 = vrot.slane %v1241, 2
  %v1254 = vrot.slane %v1242, 2
  %v1261 = vsub.f32 %v1218, %v1249
  %v1262 = vsub.f32 %v1219, %v1250
  %v1263 = vsub.f32 %v1233, %v1251
  %v1264 = vsub.f32 %v1234, %v1252
  %v1265 = vsub.f32 %v1235, %v1253
  %v1266 = vsub.f32 %v1236, %v1254
  %v1267 = vmax.f32 %v1261, 0.0
  %v1268 = vmax.f32 %v1262, 0.0
  %v1269 = vmax.f32 %v1263, 0.0
  %v1270 = vmax.f32 %v1264, 0.0
  %v1271 = vmax.f32 %v1265, 0.0
  %v1272 = vmax.f32 %v1266, 0.0
  %v1273 = vadd.f32 %v1267, 1e-05
  %v1274 = vadd.f32 %v1268, 1e-05
  %v1275 = vadd.f32 %v1269, 1e-05
  %v1276 = vadd.f32 %v1270, 1e-05
  %v1277 = vadd.f32 %v1271, 1e-05
  %v1278 = vadd.f32 %v1272, 1e-05
  %v1279 = vrsqrt.pop %v1273
  %v1280 = vrsqrt.pop %v1274
  %v1281 = vrsqrt.pop %v1275
  %v1282 = vrsqrt.pop %v1276
  %v1283 = vrsqrt.pop %v1277
  %v1284 = vrsqrt.pop %v1278
  %v1291 = vcombine.high %v1279, %v1280
  %v1292 = vcombine.high %v1281, %v1282
  %v1294 = vunpack.c.l.s4 1983009808
  %v1295 = vunpack.c.0.s8 %v1294
  %v1296 = vlaneseq
  %v1297 = vshrl.u32 %v1296, 7
  %v1298 = vsub.s32 %v1295, %v1297
  %v1299 = vrot.slane %v1291, %v1298
  %v1301 = vunpack.c.l.s4 1983009808
  %v1302 = vunpack.c.0.s8 %v1301
  %v1303 = vlaneseq
  %v1304 = vshrl.u32 %v1303, 7
  %v1305 = vsub.s32 %v1302, %v1304
  %v1306 = vrot.slane %v1292, %v1305
  %v1307 = vcombine.high %v1299, %v1306
  %v1308 = vcombine.high %v1283, %v1284
  %v1310 = vunpack.c.l.s4 1983009808
  %v1311 = vunpack.c.0.s8 %v1310
  %v1312 = vlaneseq
  %v1313 = vshrl.u32 %v1312, 7
  %v1314 = vsub.s32 %v1311, %v1313
  %v1315 = vrot.slane %v1308, %v1314
  %v1316 = vcombine.high %v1315, %v1315
  %v1319 = vmul.f32 %v52, %v1307
  %v1320 = vmul.f32 %v53, %v1316
  %v1323 = vlaneseq
  %v1324 = vshrl.u32 %v1323, 7
  %v1325 = vsub.s32 0, %v1324
  %v1326 = vrot.slane %v1319, %v1325
  %v1327 = vlaneseq
  %v1328 = vshrl.u32 %v1327, 7
  %v1329 = vsub.s32 2, %v1328
  %v1330 = vrot.slane %v1319, %v1329
  %v1331 = vlaneseq
  %v1332 = vshrl.u32 %v1331, 7
  %v1333 = vsub.s32 4, %v1332
  %v1334 = vrot.slane %v1319, %v1333
  %v1335 = vlaneseq
  %v1336 = vshrl.u32 %v1335, 7
  %v1337 = vsub.s32 6, %v1336
  %v1338 = vrot.slane %v1319, %v1337
  %v1339 = vlaneseq
  %v1340 = vshrl.u32 %v1339, 7
  %v1341 = vsub.s32 0, %v1340
  %v1342 = vrot.slane %v1320, %v1341
  %v1343 = vlaneseq
  %v1344 = vshrl.u32 %v1343, 7
  %v1345 = vsub.s32 2, %v1344
  %v1346 = vrot.slane %v1320, %v1345
  %v1353 = vmul.f32 %v1218, %v1326
  %v1354 = vmul.f32 %v1219, %v1330
  %v1355 = vmul.f32 %v1220, %v1334
  %v1356 = vmul.f32 %v1221, %v1338
  %v1357 = vmul.f32 %v1222, %v1342
  %v1358 = vmul.f32 %v1223, %v1346
  %v1365 = vcombine.low %v1353, %v1354
  %v1366 = vcombine.low %v1355, %v1356
  %v1368 = vunpack.c.l.s4 1983009808
  %v1369 = vunpack.c.0.s8 %v1368
  %v1370 = vlaneseq
  %v1371 = vshrl.u32 %v1370, 7
  %v1372 = vsub.s32 %v1369, %v1371
  %v1373 = vrot.slane %v1365, %v1372
  %v1375 = vunpack.c.l.s4 1983009808
  %v1376 = vunpack.c.0.s8 %v1375
  %v1377 = vlaneseq
  %v1378 = vshrl.u32 %v1377, 7
  %v1379 = vsub.s32 %v1376, %v1378
  %v1380 = vrot.slane %v1366, %v1379
  %v1381 = vcombine.low %v1373, %v1380
  %v1382 = vcombine.low %v1357, %v1358
  %v1384 = vunpack.c.l.s4 1983009808
  %v1385 = vunpack.c.0.s8 %v1384
  %v1386 = vlaneseq
  %v1387 = vshrl.u32 %v1386, 7
  %v1388 = vsub.s32 %v1385, %v1387
  %v1389 = vrot.slane %v1382, %v1388
  %v1390 = vrot.slane %v1381, 7
  %v1391 = vrot.slane %v1389, 7
  %v1394 = vsub.f32 %v52, %v1390
  %v1395 = vsub.f32 %v53, %v1391
  %v1396 = vlaneseq
  %v1397 = vshrl.u32 %v1396, 7
  %v1398 = vsub.s32 0, %v1397
  %v1399 = vrot.slane %v1326, %v1398
  %v1400 = vlaneseq
  %v1401 = vshrl.u32 %v1400, 7
  %v1402 = vsub.s32 0, %v1401
  %v1403 = vrot.slane %v1330, %v1402
  %v1404 = vlaneseq
  %v1405 = vshrl.u32 %v1404, 7
  %v1406 = vsub.s32 0, %v1405
  %v1407 = vrot.slane %v1334, %v1406
  %v1408 = vlaneseq
  %v1409 = vshrl.u32 %v1408, 7
  %v1410 = vsub.s32 0, %v1409
  %v1411 = vrot.slane %v1338, %v1410
  %v1412 = vlaneseq
  %v1413 = vshrl.u32 %v1412, 7
  %v1414 = vsub.s32 0, %v1413
  %v1415 = vrot.slane %v1342, %v1414
  %v1416 = vlaneseq
  %v1417 = vshrl.u32 %v1416, 7
  %v1418 = vsub.s32 0, %v1417
  %v1419 = vrot.slane %v1346, %v1418
  %v1420 = vmul.f32 %v607, %v1399
  %v1421 = vmul.f32 %v609, %v1403
  %v1422 = vmul.f32 %v785, %v1407
  %v1423 = vmul.f32 %v787, %v1411
  %v1424 = vmul.f32 %v963, %v1415
  %v1425 = vmul.f32 %v965, %v1419
  %v1426 = vmul.f32 %v613, %v1399
  %v1427 = vmul.f32 %v615, %v1403
  %v1428 = vmul.f32 %v791, %v1407
  %v1429 = vmul.f32 %v793, %v1411
  %v1430 = vmul.f32 %v969, %v1415
  %v1431 = vmul.f32 %v971, %v1419
  %v1432 = vmul.f32 %v619, %v1399
  %v1433 = vmul.f32 %v621, %v1403
  %v1434 = vmul.f32 %v797, %v1407
  %v1435 = vmul.f32 %v799, %v1411
  %v1436 = vmul.f32 %v975, %v1415
  %v1437 = vmul.f32 %v977, %v1419
  %v1438 = vmul.f32 %v625, %v1399
  %v1439 = vmul.f32 %v627, %v1403
  %v1440 = vmul.f32 %v803, %v1407
  %v1441 = vmul.f32 %v805, %v1411
  %v1442 = vmul.f32 %v981, %v1415
  %v1443 = vmul.f32 %v983, %v1419
  %v1446 = vlaneseq
  %v1447 = vshrl.u32 %v1446, 7
  %v1448 = vsub.s32 1, %v1447
  %v1449 = vrot.slane %v1394, %v1448
  %v1450 = vlaneseq
  %v1451 = vshrl.u32 %v1450, 7
  %v1452 = vsub.s32 3, %v1451
  %v1453 = vrot.slane %v1394, %v1452
  %v1454 = vlaneseq
  %v1455 = vshrl.u32 %v1454, 7
  %v1456 = vsub.s32 5, %v1455
  %v1457 = vrot.slane %v1394, %v1456
  %v1458 = vlaneseq
  %v1459 = vshrl.u32 %v1458, 7
  %v1460 = vsub.s32 7, %v1459
  %v1461 = vrot.slane %v1394, %v1460
  %v1462 = vlaneseq
  %v1463 = vshrl.u32 %v1462, 7
  %v1464 = vsub.s32 1, %v1463
  %v1465 = vrot.slane %v1395, %v1464
  %v1466 = vlaneseq
  %v1467 = vshrl.u32 %v1466, 7
  %v1468 = vsub.s32 3, %v1467
  %v1469 = vrot.slane %v1395, %v1468
  %v1476 = vlaneseq
  %v1477 = vshrl.u32 %v1476, 7
  %v1478 = vsub.s32 1, %v1477
  %v1479 = vrot.slane %v1449, %v1478
  %v1480 = vlaneseq
  %v1481 = vshrl.u32 %v1480, 7
  %v1482 = vsub.s32 1, %v1481
  %v1483 = vrot.slane %v1453, %v1482
  %v1484 = vlaneseq
  %v1485 = vshrl.u32 %v1484, 7
  %v1486 = vsub.s32 1, %v1485
  %v1487 = vrot.slane %v1457, %v1486
  %v1488 = vlaneseq
  %v1489 = vshrl.u32 %v1488, 7
  %v1490 = vsub.s32 1, %v1489
  %v1491 = vrot.slane %v1461, %v1490
  %v1492 = vlaneseq
  %v1493 = vshrl.u32 %v1492, 7
  %v1494 = vsub.s32 1, %v1493
  %v1495 = vrot.slane %v1465, %v1494
  %v1496 = vlaneseq
  %v1497 = vshrl.u32 %v1496, 7
  %v1498 = vsub.s32 1, %v1497
  %v1499 = vrot.slane %v1469, %v1498
  %v1500 = vadd.f32 %v1420, %v1479
  %v1501 = vadd.f32 %v1421, %v1483
  %v1502 = vadd.f32 %v1422, %v1487
  %v1503 = vadd.f32 %v1423, %v1491
  %v1504 = vadd.f32 %v1424, %v1495
  %v1505 = vadd.f32 %v1425, %v1499
  %v1506 = vadd.f32 %v1426, %v1479
  %v1507 = vadd.f32 %v1427, %v1483
  %v1508 = vadd.f32 %v1428, %v1487
  %v1509 = vadd.f32 %v1429, %v1491
  %v1510 = vadd.f32 %v1430, %v1495
  %v1511 = vadd.f32 %v1431, %v1499
  %v1512 = vadd.f32 %v1432, %v1479
  %v1513 = vadd.f32 %v1433, %v1483
  %v1514 = vadd.f32 %v1434, %v1487
  %v1515 = vadd.f32 %v1435, %v1491
  %v1516 = vadd.f32 %v1436, %v1495
  %v1517 = vadd.f32 %v1437, %v1499
  %v1518 = vadd.f32 %v1438, %v1479
  %v1519 = vadd.f32 %v1439, %v1483
  %v1520 = vadd.f32 %v1440, %v1487
  %v1521 = vadd.f32 %v1441, %v1491
  %v1522 = vadd.f32 %v1442, %v1495
  %v1523 = vadd.f32 %v1443, %v1499
  %v1524 = vld [vmem:[#allocation2] sm:$0xff]
  %v1525 = vld [vmem:[#allocation2 + $0x8] sm:$0xff]
  %v1526 = vld [vmem:[#allocation2 + $0x10] sm:$0xff]
  %v1527 = vld [vmem:[#allocation2 + $0x18] sm:$0xff]
  %v1528 = vadd.f32 %v1524, %v147
  %v1529 = vadd.f32 %v1525, %v148
  %v1530 = vadd.f32 %v1526, %v149
  %v1531 = vadd.f32 %v1527, %v150
  %v1532 = vadd.f32 %v1528, %v1500
  %v1533 = vadd.f32 %v1529, %v1506
  %v1534 = vadd.f32 %v1530, %v1512
  %v1535 = vadd.f32 %v1531, %v1518
  %v1536 = vadd.f32 %v1532, %v1501
  %v1537 = vadd.f32 %v1533, %v1507
  %v1538 = vadd.f32 %v1534, %v1513
  %v1539 = vadd.f32 %v1535, %v1519
  %1540 = vst [vmem:[#allocation2] sm:$0xff] %v1536
  %1541 = vst [vmem:[#allocation2 + $0x8] sm:$0xff] %v1537
  %1542 = vst [vmem:[#allocation2 + $0x10] sm:$0xff] %v1538
  %1543 = vst [vmem:[#allocation2 + $0x18] sm:$0xff] %v1539
  %v1544 = vld [vmem:[#allocation3] sm:$0xff]
  %v1545 = vld [vmem:[#allocation3 + $0x8] sm:$0xff]
  %v1546 = vld [vmem:[#allocation3 + $0x10] sm:$0xff]
  %v1547 = vld [vmem:[#allocation3 + $0x18] sm:$0xff]
  %v1548 = vadd.f32 %v1544, %v147
  %v1549 = vadd.f32 %v1545, %v148
  %v1550 = vadd.f32 %v1546, %v149
  %v1551 = vadd.f32 %v1547, %v150
  %v1552 = vadd.f32 %v1548, %v1502
  %v1553 = vadd.f32 %v1549, %v1508
  %v1554 = vadd.f32 %v1550, %v1514
  %v1555 = vadd.f32 %v1551, %v1520
  %v1556 = vadd.f32 %v1552, %v1503
  %v1557 = vadd.f32 %v1553, %v1509
  %v1558 = vadd.f32 %v1554, %v1515
  %v1559 = vadd.f32 %v1555, %v1521
  %1560 = vst [vmem:[#allocation3] sm:$0xff] %v1556
  %1561 = vst [vmem:[#allocation3 + $0x8] sm:$0xff] %v1557
  %1562 = vst [vmem:[#allocation3 + $0x10] sm:$0xff] %v1558
  %1563 = vst [vmem:[#allocation3 + $0x18] sm:$0xff] %v1559
  %v1564 = vld [vmem:[%s5] sm:$0xff]
  %v1565 = vld [vmem:[%s5 + $0x8] sm:$0xff]
  %v1566 = vld [vmem:[%s5 + $0x10] sm:$0xff]
  %v1567 = vld [vmem:[%s5 + $0x18] sm:$0xff]
  %v1568 = vadd.f32 %v1564, %v147
  %v1569 = vadd.f32 %v1565, %v148
  %v1570 = vadd.f32 %v1566, %v149
  %v1571 = vadd.f32 %v1567, %v150
  %v1572 = vadd.f32 %v1568, %v1504
  %v1573 = vadd.f32 %v1569, %v1510
  %v1574 = vadd.f32 %v1570, %v1516
  %v1575 = vadd.f32 %v1571, %v1522
  %v1576 = vadd.f32 %v1572, %v1505
  %v1577 = vadd.f32 %v1573, %v1511
  %v1578 = vadd.f32 %v1574, %v1517
  %v1579 = vadd.f32 %v1575, %v1523
  %1580 = vst [vmem:[%s5] sm:$0xff] %v1576
  %1581 = vst [vmem:[%s5 + $0x8] sm:$0xff] %v1577
  %1582 = vst [vmem:[%s5 + $0x10] sm:$0xff] %v1578
  %1583 = vst [vmem:[%s5 + $0x18] sm:$0xff] %v1579
  %v1584 = vld [vmem:[#allocation2] sm:$0xff]
  %v1585 = vld [vmem:[#allocation2 + $0x8] sm:$0xff]
  %v1586 = vld [vmem:[#allocation2 + $0x10] sm:$0xff]
  %v1587 = vld [vmem:[#allocation2 + $0x18] sm:$0xff]
  %v1590 = vrot.slane %v1584, 7
  %v1591 = vrot.slane %v1585, 7
  %v1592 = vsel %vm61, %v1590, %v1591
  %v1595 = vsel %vm61, 0.0, %v1590
  %v1598 = vrot.slane %v1586, 7
  %v1599 = vrot.slane %v1587, 7
  %v1600 = vsel %vm61, %v1598, %v1599
  %v1603 = vsel %vm61, 0.0, %v1598
  %v1604 = vrot.slane %v1584, 1
  %v1605 = vrot.slane %v1585, 1
  %v1606 = vsel %vm76, %v1604, %v1605
  %v1609 = vsel %vm76, %v1605, 0.0
  %v1610 = vrot.slane %v1586, 1
  %v1611 = vrot.slane %v1587, 1
  %v1612 = vsel %vm76, %v1610, %v1611
  %v1615 = vsel %vm76, %v1611, 0.0
  %v1616 = vadd.f32 %v1595, %v1584
  %v1617 = vadd.f32 %v1592, %v1585
  %v1618 = vadd.f32 %v1603, %v1586
  %v1619 = vadd.f32 %v1600, %v1587
  %v1620 = vadd.f32 %v1616, %v1606
  %v1621 = vadd.f32 %v1617, %v1609
  %v1622 = vadd.f32 %v1618, %v1612
  %v1623 = vadd.f32 %v1619, %v1615
  %1628 = vrot.lane.b32.xlu0 %v1620, 8
  %v1629 = vpop.permute.xlu0 %1628
  %1630 = vrot.lane.b32.xlu0 %v1621, 8
  %v1631 = vpop.permute.xlu0 %1630
  %1632 = vrot.lane.b32.xlu0 %v1622, 8
  %v1633 = vpop.permute.xlu0 %1632
  %1634 = vrot.lane.b32.xlu0 %v1623, 8
  %v1635 = vpop.permute.xlu0 %1634
  %v1640 = vsel %vm113, 0.0, %v1629
  %v1641 = vsel %vm113, 0.0, %v1631
  %v1642 = vsel %vm113, 0.0, %v1633
  %v1643 = vsel %vm113, 0.0, %v1635
  %1644 = vrot.lane.b32.xlu0 %v1620, 120
  %v1645 = vpop.permute.xlu0 %1644
  %1646 = vrot.lane.b32.xlu0 %v1621, 120
  %v1647 = vpop.permute.xlu0 %1646
  %1648 = vrot.lane.b32.xlu0 %v1622, 120
  %v1649 = vpop.permute.xlu0 %1648
  %1650 = vrot.lane.b32.xlu0 %v1623, 120
  %v1651 = vpop.permute.xlu0 %1650
  %v1656 = vsel %vm130, %v1645, 0.0
  %v1657 = vsel %vm130, %v1647, 0.0
  %v1658 = vsel %vm130, %v1649, 0.0
  %v1659 = vsel %vm130, %v1651, 0.0
  %v1660 = vadd.f32 %v1640, %v1620
  %v1661 = vadd.f32 %v1641, %v1621
  %v1662 = vadd.f32 %v1642, %v1622
  %v1663 = vadd.f32 %v1643, %v1623
  %v1664 = vadd.f32 %v1660, %v1656
  %v1665 = vadd.f32 %v1661, %v1657
  %v1666 = vadd.f32 %v1662, %v1658
  %v1667 = vadd.f32 %v1663, %v1659
  %v1668 = vmul.f32 %v1664, %v32
  %v1669 = vmul.f32 %v1665, %v33
  %v1670 = vmul.f32 %v1666, %v34
  %v1671 = vmul.f32 %v1667, %v35
  %v1672 = vadd.f32 %v1584, %v1668
  %v1673 = vadd.f32 %v1585, %v1669
  %v1674 = vadd.f32 %v1586, %v1670
  %v1675 = vadd.f32 %v1587, %v1671
  %v1676 = vmax.f32 %v1595, 0.0
  %v1677 = vmax.f32 %v1592, 0.0
  %v1678 = vmax.f32 %v1603, 0.0
  %v1679 = vmax.f32 %v1600, 0.0
  %v1680 = vmax.f32 %v1584, 0.0
  %v1681 = vmax.f32 %v1585, 0.0
  %v1682 = vmax.f32 %v1586, 0.0
  %v1683 = vmax.f32 %v1587, 0.0
  %v1684 = vmax.f32 %v1606, 0.0
  %v1685 = vmax.f32 %v1609, 0.0
  %v1686 = vmax.f32 %v1612, 0.0
  %v1687 = vmax.f32 %v1615, 0.0
  %v1688 = vld [vmem:[%s1 + $0x30] sm:$0xff]
  %v1689 = vld [vmem:[%s1 + $0x38] sm:$0xff]
  %v1690 = vld [vmem:[%s1 + $0x40] sm:$0xff]
  %v1691 = vld [vmem:[%s1 + $0x48] sm:$0xff]
  %v1692 = vld [vmem:[%s1 + $0x90] sm:$0xff]
  %v1693 = vld [vmem:[%s1 + $0x98] sm:$0xff]
  %v1694 = vld [vmem:[%s1 + $0xa0] sm:$0xff]
  %v1695 = vld [vmem:[%s1 + $0xa8] sm:$0xff]
  %v1696 = vld [vmem:[%s1 + $0xf0] sm:$0xff]
  %v1697 = vld [vmem:[%s1 + $0xf8] sm:$0xff]
  %v1698 = vld [vmem:[%s1 + $0x100] sm:$0xff]
  %v1699 = vld [vmem:[%s1 + $0x108] sm:$0xff]
  %v1700 = vld [vmem:[%s1 + $0x150] sm:$0xff]
  %v1701 = vld [vmem:[%s1 + $0x158] sm:$0xff]
  %v1702 = vld [vmem:[%s1 + $0x160] sm:$0xff]
  %v1703 = vld [vmem:[%s1 + $0x168] sm:$0xff]
  %v1704 = vld [vmem:[%s1 + $0x1b0] sm:$0xff]
  %v1705 = vld [vmem:[%s1 + $0x1b8] sm:$0xff]
  %v1706 = vld [vmem:[%s1 + $0x1c0] sm:$0xff]
  %v1707 = vld [vmem:[%s1 + $0x1c8] sm:$0xff]
  %v1708 = vld [vmem:[%s1 + $0x210] sm:$0xff]
  %v1709 = vld [vmem:[%s1 + $0x218] sm:$0xff]
  %v1710 = vld [vmem:[%s1 + $0x220] sm:$0xff]
  %v1711 = vld [vmem:[%s1 + $0x228] sm:$0xff]
  %v1712 = vld [vmem:[%s1 + $0x270] sm:$0xff]
  %v1713 = vld [vmem:[%s1 + $0x278] sm:$0xff]
  %v1714 = vld [vmem:[%s1 + $0x280] sm:$0xff]
  %v1715 = vld [vmem:[%s1 + $0x288] sm:$0xff]
  %v1716 = vld [vmem:[%s1 + $0x2d0] sm:$0xff]
  %v1717 = vld [vmem:[%s1 + $0x2d8] sm:$0xff]
  %v1718 = vld [vmem:[%s1 + $0x2e0] sm:$0xff]
  %v1719 = vld [vmem:[%s1 + $0x2e8] sm:$0xff]
  %v1720 = vld [vmem:[%s1 + $0x330] sm:$0xff]
  %v1721 = vld [vmem:[%s1 + $0x338] sm:$0xff]
  %v1722 = vld [vmem:[%s1 + $0x340] sm:$0xff]
  %v1723 = vld [vmem:[%s1 + $0x348] sm:$0xff]
  %v1724 = vld [vmem:[%s1 + $0x390] sm:$0xff]
  %v1725 = vld [vmem:[%s1 + $0x398] sm:$0xff]
  %v1726 = vld [vmem:[%s1 + $0x3a0] sm:$0xff]
  %v1727 = vld [vmem:[%s1 + $0x3a8] sm:$0xff]
  %v1728 = vld [vmem:[%s1 + $0x3f0] sm:$0xff]
  %v1729 = vld [vmem:[%s1 + $0x3f8] sm:$0xff]
  %v1730 = vld [vmem:[%s1 + $0x400] sm:$0xff]
  %v1731 = vld [vmem:[%s1 + $0x408] sm:$0xff]
  %v1732 = vld [vmem:[%s1 + $0x450] sm:$0xff]
  %v1733 = vld [vmem:[%s1 + $0x458] sm:$0xff]
  %v1734 = vld [vmem:[%s1 + $0x460] sm:$0xff]
  %v1735 = vld [vmem:[%s1 + $0x468] sm:$0xff]
  %v1736 = vld [vmem:[%s1 + $0x4b0] sm:$0xff]
  %v1737 = vld [vmem:[%s1 + $0x4b8] sm:$0xff]
  %v1738 = vld [vmem:[%s1 + $0x4c0] sm:$0xff]
  %v1739 = vld [vmem:[%s1 + $0x4c8] sm:$0xff]
  %v1740 = vld [vmem:[%s1 + $0x510] sm:$0xff]
  %v1741 = vld [vmem:[%s1 + $0x518] sm:$0xff]
  %v1742 = vld [vmem:[%s1 + $0x520] sm:$0xff]
  %v1743 = vld [vmem:[%s1 + $0x528] sm:$0xff]
  %v1744 = vld [vmem:[%s1 + $0x570] sm:$0xff]
  %v1745 = vld [vmem:[%s1 + $0x578] sm:$0xff]
  %v1746 = vld [vmem:[%s1 + $0x580] sm:$0xff]
  %v1747 = vld [vmem:[%s1 + $0x588] sm:$0xff]
  %v1748 = vld [vmem:[%s1 + $0x5d0] sm:$0xff]
  %v1749 = vld [vmem:[%s1 + $0x5d8] sm:$0xff]
  %v1750 = vld [vmem:[%s1 + $0x5e0] sm:$0xff]
  %v1751 = vld [vmem:[%s1 + $0x5e8] sm:$0xff]
  %v1752 = vld [vmem:[%s1 + $0x630] sm:$0xff]
  %v1753 = vld [vmem:[%s1 + $0x638] sm:$0xff]
  %v1754 = vld [vmem:[%s1 + $0x640] sm:$0xff]
  %v1755 = vld [vmem:[%s1 + $0x648] sm:$0xff]
  %v1756 = vld [vmem:[%s1 + $0x690] sm:$0xff]
  %v1757 = vld [vmem:[%s1 + $0x698] sm:$0xff]
  %v1758 = vld [vmem:[%s1 + $0x6a0] sm:$0xff]
  %v1759 = vld [vmem:[%s1 + $0x6a8] sm:$0xff]
  %v1760 = vld [vmem:[%s1 + $0x6f0] sm:$0xff]
  %v1761 = vld [vmem:[%s1 + $0x6f8] sm:$0xff]
  %v1762 = vld [vmem:[%s1 + $0x700] sm:$0xff]
  %v1763 = vld [vmem:[%s1 + $0x708] sm:$0xff]
  %v1764 = vld [vmem:[%s1 + $0x750] sm:$0xff]
  %v1765 = vld [vmem:[%s1 + $0x758] sm:$0xff]
  %v1766 = vld [vmem:[%s1 + $0x760] sm:$0xff]
  %v1767 = vld [vmem:[%s1 + $0x768] sm:$0xff]
  %v1768 = vld [vmem:[%s1 + $0x7b0] sm:$0xff]
  %v1769 = vld [vmem:[%s1 + $0x7b8] sm:$0xff]
  %v1770 = vld [vmem:[%s1 + $0x7c0] sm:$0xff]
  %v1771 = vld [vmem:[%s1 + $0x7c8] sm:$0xff]
  %v1772 = vld [vmem:[%s1 + $0x810] sm:$0xff]
  %v1773 = vld [vmem:[%s1 + $0x818] sm:$0xff]
  %v1774 = vld [vmem:[%s1 + $0x820] sm:$0xff]
  %v1775 = vld [vmem:[%s1 + $0x828] sm:$0xff]
  %v1776 = vld [vmem:[%s1 + $0x870] sm:$0xff]
  %v1777 = vld [vmem:[%s1 + $0x878] sm:$0xff]
  %v1778 = vld [vmem:[%s1 + $0x880] sm:$0xff]
  %v1779 = vld [vmem:[%s1 + $0x888] sm:$0xff]
  %v1780 = vld [vmem:[%s1 + $0x8d0] sm:$0xff]
  %v1781 = vld [vmem:[%s1 + $0x8d8] sm:$0xff]
  %v1782 = vld [vmem:[%s1 + $0x8e0] sm:$0xff]
  %v1783 = vld [vmem:[%s1 + $0x8e8] sm:$0xff]
  %v1784 = vld [vmem:[%s1 + $0x930] sm:$0xff]
  %v1785 = vld [vmem:[%s1 + $0x938] sm:$0xff]
  %v1786 = vld [vmem:[%s1 + $0x940] sm:$0xff]
  %v1787 = vld [vmem:[%s1 + $0x948] sm:$0xff]
  %v1788 = vld [vmem:[%s1 + $0x990] sm:$0xff]
  %v1789 = vld [vmem:[%s1 + $0x998] sm:$0xff]
  %v1790 = vld [vmem:[%s1 + $0x9a0] sm:$0xff]
  %v1791 = vld [vmem:[%s1 + $0x9a8] sm:$0xff]
  %v1792 = vld [vmem:[%s1 + $0x9f0] sm:$0xff]
  %v1793 = vld [vmem:[%s1 + $0x9f8] sm:$0xff]
  %v1794 = vld [vmem:[%s1 + $0xa00] sm:$0xff]
  %v1795 = vld [vmem:[%s1 + $0xa08] sm:$0xff]
  %v1796 = vld [vmem:[%s1 + $0xa50] sm:$0xff]
  %v1797 = vld [vmem:[%s1 + $0xa58] sm:$0xff]
  %v1798 = vld [vmem:[%s1 + $0xa60] sm:$0xff]
  %v1799 = vld [vmem:[%s1 + $0xa68] sm:$0xff]
  %v1800 = vld [vmem:[%s1 + $0xab0] sm:$0xff]
  %v1801 = vld [vmem:[%s1 + $0xab8] sm:$0xff]
  %v1802 = vld [vmem:[%s1 + $0xac0] sm:$0xff]
  %v1803 = vld [vmem:[%s1 + $0xac8] sm:$0xff]
  %v1804 = vld [vmem:[%s1 + $0xb10] sm:$0xff]
  %v1805 = vld [vmem:[%s1 + $0xb18] sm:$0xff]
  %v1806 = vld [vmem:[%s1 + $0xb20] sm:$0xff]
  %v1807 = vld [vmem:[%s1 + $0xb28] sm:$0xff]
  %v1808 = vld [vmem:[%s1 + $0xb70] sm:$0xff]
  %v1809 = vld [vmem:[%s1 + $0xb78] sm:$0xff]
  %v1810 = vld [vmem:[%s1 + $0xb80] sm:$0xff]
  %v1811 = vld [vmem:[%s1 + $0xb88] sm:$0xff]
  %v1812 = vld [vmem:[%s1 + $0xbd0] sm:$0xff]
  %v1813 = vld [vmem:[%s1 + $0xbd8] sm:$0xff]
  %v1814 = vld [vmem:[%s1 + $0xbe0] sm:$0xff]
  %v1815 = vld [vmem:[%s1 + $0xbe8] sm:$0xff]
  %v1816 = vld [vmem:[%s1 + $0xc30] sm:$0xff]
  %v1817 = vld [vmem:[%s1 + $0xc38] sm:$0xff]
  %v1818 = vld [vmem:[%s1 + $0xc40] sm:$0xff]
  %v1819 = vld [vmem:[%s1 + $0xc48] sm:$0xff]
  %v1820 = vld [vmem:[%s1 + $0xc90] sm:$0xff]
  %v1821 = vld [vmem:[%s1 + $0xc98] sm:$0xff]
  %v1822 = vld [vmem:[%s1 + $0xca0] sm:$0xff]
  %v1823 = vld [vmem:[%s1 + $0xca8] sm:$0xff]
  %v1824 = vld [vmem:[%s1 + $0xcf0] sm:$0xff]
  %v1825 = vld [vmem:[%s1 + $0xcf8] sm:$0xff]
  %v1826 = vld [vmem:[%s1 + $0xd00] sm:$0xff]
  %v1827 = vld [vmem:[%s1 + $0xd08] sm:$0xff]
  %v1828 = vld [vmem:[%s1 + $0xd50] sm:$0xff]
  %v1829 = vld [vmem:[%s1 + $0xd58] sm:$0xff]
  %v1830 = vld [vmem:[%s1 + $0xd60] sm:$0xff]
  %v1831 = vld [vmem:[%s1 + $0xd68] sm:$0xff]
  %v1832 = vld [vmem:[%s1 + $0xdb0] sm:$0xff]
  %v1833 = vld [vmem:[%s1 + $0xdb8] sm:$0xff]
  %v1834 = vld [vmem:[%s1 + $0xdc0] sm:$0xff]
  %v1835 = vld [vmem:[%s1 + $0xdc8] sm:$0xff]
  %v1836 = vld [vmem:[%s1 + $0xe10] sm:$0xff]
  %v1837 = vld [vmem:[%s1 + $0xe18] sm:$0xff]
  %v1838 = vld [vmem:[%s1 + $0xe20] sm:$0xff]
  %v1839 = vld [vmem:[%s1 + $0xe28] sm:$0xff]
  %v1840 = vld [vmem:[%s1 + $0xe70] sm:$0xff]
  %v1841 = vld [vmem:[%s1 + $0xe78] sm:$0xff]
  %v1842 = vld [vmem:[%s1 + $0xe80] sm:$0xff]
  %v1843 = vld [vmem:[%s1 + $0xe88] sm:$0xff]
  %v1844 = vld [vmem:[%s1 + $0xed0] sm:$0xff]
  %v1845 = vld [vmem:[%s1 + $0xed8] sm:$0xff]
  %v1846 = vld [vmem:[%s1 + $0xee0] sm:$0xff]
  %v1847 = vld [vmem:[%s1 + $0xee8] sm:$0xff]
  %v1848 = vld [vmem:[%s1 + $0xf30] sm:$0xff]
  %v1849 = vld [vmem:[%s1 + $0xf38] sm:$0xff]
  %v1850 = vld [vmem:[%s1 + $0xf40] sm:$0xff]
  %v1851 = vld [vmem:[%s1 + $0xf48] sm:$0xff]
  %v1852 = vld [vmem:[%s1 + $0xf90] sm:$0xff]
  %v1853 = vld [vmem:[%s1 + $0xf98] sm:$0xff]
  %v1854 = vld [vmem:[%s1 + $0xfa0] sm:$0xff]
  %v1855 = vld [vmem:[%s1 + $0xfa8] sm:$0xff]
  %v1856 = vld [vmem:[%s1 + $0xff0] sm:$0xff]
  %v1857 = vld [vmem:[%s1 + $0xff8] sm:$0xff]
  %v1858 = vld [vmem:[%s1 + $0x1000] sm:$0xff]
  %v1859 = vld [vmem:[%s1 + $0x1008] sm:$0xff]
  %v1860 = vld [vmem:[%s1 + $0x1050] sm:$0xff]
  %v1861 = vld [vmem:[%s1 + $0x1058] sm:$0xff]
  %v1862 = vld [vmem:[%s1 + $0x1060] sm:$0xff]
  %v1863 = vld [vmem:[%s1 + $0x1068] sm:$0xff]
  %v1864 = vld [vmem:[%s1 + $0x10b0] sm:$0xff]
  %v1865 = vld [vmem:[%s1 + $0x10b8] sm:$0xff]
  %v1866 = vld [vmem:[%s1 + $0x10c0] sm:$0xff]
  %v1867 = vld [vmem:[%s1 + $0x10c8] sm:$0xff]
  %v1868 = vld [vmem:[%s1 + $0x1110] sm:$0xff]
  %v1869 = vld [vmem:[%s1 + $0x1118] sm:$0xff]
  %v1870 = vld [vmem:[%s1 + $0x1120] sm:$0xff]
  %v1871 = vld [vmem:[%s1 + $0x1128] sm:$0xff]
  %v1872 = vld [vmem:[%s1 + $0x1170] sm:$0xff]
  %v1873 = vld [vmem:[%s1 + $0x1178] sm:$0xff]
  %v1874 = vld [vmem:[%s1 + $0x1180] sm:$0xff]
  %v1875 = vld [vmem:[%s1 + $0x1188] sm:$0xff]
  %v1876 = vld [vmem:[%s1 + $0x11d0] sm:$0xff]
  %v1877 = vld [vmem:[%s1 + $0x11d8] sm:$0xff]
  %v1878 = vld [vmem:[%s1 + $0x11e0] sm:$0xff]
  %v1879 = vld [vmem:[%s1 + $0x11e8] sm:$0xff]
  %1880 = vmatprep.subr.mxu0 %v1689
  %1881 = vmatpush1.msra.mxu0 %v1688
  %1882 = vmatprep.subr.mxu0 %v1693
  %1883 = vmatpush1.msra.mxu0 %v1692
  %1884 = vmatprep.subr.mxu0 %v1697
  %1885 = vmatpush1.msra.mxu0 %v1696
  %1886 = vmatprep.subr.mxu0 %v1701
  %1887 = vmatpush1.msra.mxu0 %v1700
  %1888 = vmatprep.subr.mxu0 %v1705
  %1889 = vmatpush1.msra.mxu0 %v1704
  %1890 = vmatprep.subr.mxu0 %v1709
  %1891 = vmatpush1.msra.mxu0 %v1708
  %1892 = vmatprep.subr.mxu0 %v1713
  %1893 = vmatpush1.msra.mxu0 %v1712
  %1894 = vmatprep.subr.mxu0 %v1717
  %1895 = vmatpush1.msra.mxu0 %v1716
  %1896 = vmatprep.subr.mxu0 %v1721
  %1897 = vmatpush1.msra.mxu0 %v1720
  %1898 = vmatprep.subr.mxu0 %v1725
  %1899 = vmatpush1.msra.mxu0 %v1724
  %1900 = vmatprep.subr.mxu0 %v1729
  %1901 = vmatpush1.msra.mxu0 %v1728
  %1902 = vmatprep.subr.mxu0 %v1733
  %1903 = vmatpush1.msra.mxu0 %v1732
  %1904 = vmatprep.subr.mxu0 %v1737
  %1905 = vmatpush1.msra.mxu0 %v1736
  %1906 = vmatprep.subr.mxu0 %v1741
  %1907 = vmatpush1.msra.mxu0 %v1740
  %1908 = vmatprep.subr.mxu0 %v1745
  %1909 = vmatpush1.msra.mxu0 %v1744
  %1910 = vmatprep.subr.mxu0 %v1749
  %1911 = vmatpush1.msra.mxu0 %v1748
  %1912 = vmatprep.subr.mxu0 %v1753
  %1913 = vmatpush1.msra.mxu0 %v1752
  %1914 = vmatprep.subr.mxu0 %v1757
  %1915 = vmatpush1.msra.mxu0 %v1756
  %1916 = vmatprep.subr.mxu0 %v1761
  %1917 = vmatpush1.msra.mxu0 %v1760
  %1918 = vmatprep.subr.mxu0 %v1765
  %1919 = vmatpush1.msra.mxu0 %v1764
  %1920 = vmatprep.subr.mxu0 %v1769
  %1921 = vmatpush1.msra.mxu0 %v1768
  %1922 = vmatprep.subr.mxu0 %v1773
  %1923 = vmatpush1.msra.mxu0 %v1772
  %1924 = vmatprep.subr.mxu0 %v1777
  %1925 = vmatpush1.msra.mxu0 %v1776
  %1926 = vmatprep.subr.mxu0 %v1781
  %1927 = vmatpush1.msra.mxu0 %v1780
  %1928 = vmatprep.subr.mxu0 %v1785
  %1929 = vmatpush1.msra.mxu0 %v1784
  %1930 = vmatprep.subr.mxu0 %v1789
  %1931 = vmatpush1.msra.mxu0 %v1788
  %1932 = vmatprep.subr.mxu0 %v1793
  %1933 = vmatpush1.msra.mxu0 %v1792
  %1934 = vmatprep.subr.mxu0 %v1797
  %1935 = vmatpush1.msra.mxu0 %v1796
  %1936 = vmatprep.subr.mxu0 %v1801
  %1937 = vmatpush1.msra.mxu0 %v1800
  %1938 = vmatprep.subr.mxu0 %v1805
  %1939 = vmatpush1.msra.mxu0 %v1804
  %1940 = vmatprep.subr.mxu0 %v1809
  %1941 = vmatpush1.msra.mxu0 %v1808
  %1942 = vmatprep.subr.mxu0 %v1813
  %1943 = vmatpush1.msra.mxu0 %v1812
  %1944 = vmatprep.mubr.f32.mxu0 %v1680
  %1945 = vmatmul.mubr.f32.gmra.mrb[0].mxu0 %v1676
  %v1946 = vpop.f32.mrb[0].mxu0
  %v1947 = vadd.f32 0.0, %v1946
  %v1948 = vpop.f32.mrb[0].mxu0
  %v1949 = vadd.f32 0.0, %v1948
  %1950 = vmatprep.mubr.f32.mxu0 %v1681
  %1951 = vmatmul.mubr.f32.gmra.mrb[0].mxu0 %v1677
  %v1952 = vpop.f32.mrb[0].mxu0
  %v1953 = vadd.f32 0.0, %v1952
  %v1954 = vpop.f32.mrb[0].mxu0
  %v1955 = vadd.f32 0.0, %v1954
  %1956 = vmatprep.mubr.f32.mxu0 %v1682
  %1957 = vmatmul.mubr.f32.gmra.mrb[0].mxu0 %v1678
  %v1958 = vpop.f32.mrb[0].mxu0
  %v1959 = vadd.f32 0.0, %v1958
  %v1960 = vpop.f32.mrb[0].mxu0
  %v1961 = vadd.f32 0.0, %v1960
  %1962 = vmatprep.mubr.f32.mxu0 %v1683
  %1963 = vmatmul.mubr.f32.gmra.mrb[0].mxu0 %v1679
  %v1964 = vpop.f32.mrb[0].mxu0
  %v1965 = vadd.f32 0.0, %v1964
  %v1966 = vpop.f32.mrb[0].mxu0
  %v1967 = vadd.f32 0.0, %v1966
  %1968 = vdwg.mxu0
  %1969 = vmatprep.subr.mxu0 %v1817
  %1970 = vmatpush1.msra.mxu0 %v1816
  %1971 = vmatprep.subr.mxu0 %v1821
  %1972 = vmatpush1.msra.mxu0 %v1820
  %1973 = vmatprep.subr.mxu0 %v1825
  %1974 = vmatpush1.msra.mxu0 %v1824
  %1975 = vmatprep.subr.mxu0 %v1829
  %1976 = vmatpush1.msra.mxu0 %v1828
  %1977 = vmatprep.subr.mxu0 %v1833
  %1978 = vmatpush1.msra.mxu0 %v1832
  %1979 = vmatprep.subr.mxu0 %v1837
  %1980 = vmatpush1.msra.mxu0 %v1836
  %1981 = vmatprep.subr.mxu0 %v1841
  %1982 = vmatpush1.msra.mxu0 %v1840
  %1983 = vmatprep.subr.mxu0 %v1845
  %1984 = vmatpush1.msra.mxu0 %v1844
  %1985 = vmatprep.subr.mxu0 %v1849
  %1986 = vmatpush1.msra.mxu0 %v1848
  %1987 = vmatprep.subr.mxu0 %v1853
  %1988 = vmatpush1.msra.mxu0 %v1852
  %1989 = vmatprep.subr.mxu0 %v1857
  %1990 = vmatpush1.msra.mxu0 %v1856
  %1991 = vmatprep.subr.mxu0 %v1861
  %1992 = vmatpush1.msra.mxu0 %v1860
  %1993 = vmatprep.subr.mxu0 %v1865
  %1994 = vmatpush1.msra.mxu0 %v1864
  %1995 = vmatprep.subr.mxu0 %v1869
  %1996 = vmatpush1.msra.mxu0 %v1868
  %1997 = vmatprep.subr.mxu0 %v1873
  %1998 = vmatpush1.msra.mxu0 %v1872
  %1999 = vmatprep.subr.mxu0 %v1877
  %2000 = vmatpush1.msra.mxu0 %v1876
  %2001 = vmatprep.subr.mxu0 0.0
  %2002 = vmatpush1.msra.mxu0 0.0
  %2003 = vmatprep.subr.mxu0 0.0
  %2004 = vmatpush1.msra.mxu0 0.0
  %2005 = vmatprep.subr.mxu0 0.0
  %2006 = vmatpush1.msra.mxu0 0.0
  %2007 = vmatprep.subr.mxu0 0.0
  %2008 = vmatpush1.msra.mxu0 0.0
  %2009 = vmatprep.subr.mxu0 0.0
  %2010 = vmatpush1.msra.mxu0 0.0
  %2011 = vmatprep.subr.mxu0 0.0
  %2012 = vmatpush1.msra.mxu0 0.0
  %2013 = vmatprep.subr.mxu0 0.0
  %2014 = vmatpush1.msra.mxu0 0.0
  %2015 = vmatprep.subr.mxu0 0.0
  %2016 = vmatpush1.msra.mxu0 0.0
  %2017 = vmatprep.subr.mxu0 0.0
  %2018 = vmatpush1.msra.mxu0 0.0
  %2019 = vmatprep.subr.mxu0 0.0
  %2020 = vmatpush1.msra.mxu0 0.0
  %2021 = vmatprep.subr.mxu0 0.0
  %2022 = vmatpush1.msra.mxu0 0.0
  %2023 = vmatprep.subr.mxu0 0.0
  %2024 = vmatpush1.msra.mxu0 0.0
  %2025 = vmatprep.subr.mxu0 0.0
  %2026 = vmatpush1.msra.mxu0 0.0
  %2027 = vmatprep.subr.mxu0 0.0
  %2028 = vmatpush1.msra.mxu0 0.0
  %2029 = vmatprep.subr.mxu0 0.0
  %2030 = vmatpush1.msra.mxu0 0.0
  %2031 = vmatprep.subr.mxu0 0.0
  %2032 = vmatpush1.msra.mxu0 0.0
  %2033 = vmatprep.mubr.f32.mxu0 0.0
  %2034 = vmatmul.mubr.f32.gmra.mrb[0].mxu0 %v1684
  %v2035 = vpop.f32.mrb[0].mxu0
  %v2036 = vadd.f32 %v1947, %v2035
  %v2037 = vpop.f32.mrb[0].mxu0
  %v2038 = vadd.f32 %v1949, %v2037
  %2039 = vmatprep.mubr.f32.mxu0 0.0
  %2040 = vmatmul.mubr.f32.gmra.mrb[0].mxu0 %v1685
  %v2041 = vpop.f32.mrb[0].mxu0
  %v2042 = vadd.f32 %v1953, %v2041
  %v2043 = vpop.f32.mrb[0].mxu0
  %v2044 = vadd.f32 %v1955, %v2043
  %2045 = vmatprep.mubr.f32.mxu0 0.0
  %2046 = vmatmul.mubr.f32.gmra.mrb[0].mxu0 %v1686
  %v2047 = vpop.f32.mrb[0].mxu0
  %v2048 = vadd.f32 %v1959, %v2047
  %v2049 = vpop.f32.mrb[0].mxu0
  %v2050 = vadd.f32 %v1961, %v2049
  %2051 = vmatprep.mubr.f32.mxu0 0.0
  %2052 = vmatmul.mubr.f32.gmra.mrb[0].mxu0 %v1687
  %v2053 = vpop.f32.mrb[0].mxu0
  %v2054 = vadd.f32 %v1965, %v2053
  %v2055 = vpop.f32.mrb[0].mxu0
  %v2056 = vadd.f32 %v1967, %v2055
  %2057 = vdwg.mxu0
  %2058 = vmatprep.subr.mxu0 %v1691
  %2059 = vmatpush1.msra.mxu0 %v1690
  %2060 = vmatprep.subr.mxu0 %v1695
  %2061 = vmatpush1.msra.mxu0 %v1694
  %2062 = vmatprep.subr.mxu0 %v1699
  %2063 = vmatpush1.msra.mxu0 %v1698
  %2064 = vmatprep.subr.mxu0 %v1703
  %2065 = vmatpush1.msra.mxu0 %v1702
  %2066 = vmatprep.subr.mxu0 %v1707
  %2067 = vmatpush1.msra.mxu0 %v1706
  %2068 = vmatprep.subr.mxu0 %v1711
  %2069 = vmatpush1.msra.mxu0 %v1710
  %2070 = vmatprep.subr.mxu0 %v1715
  %2071 = vmatpush1.msra.mxu0 %v1714
  %2072 = vmatprep.subr.mxu0 %v1719
  %2073 = vmatpush1.msra.mxu0 %v1718
  %2074 = vmatprep.subr.mxu0 %v1723
  %2075 = vmatpush1.msra.mxu0 %v1722
  %2076 = vmatprep.subr.mxu0 %v1727
  %2077 = vmatpush1.msra.mxu0 %v1726
  %2078 = vmatprep.subr.mxu0 %v1731
  %2079 = vmatpush1.msra.mxu0 %v1730
  %2080 = vmatprep.subr.mxu0 %v1735
  %2081 = vmatpush1.msra.mxu0 %v1734
  %2082 = vmatprep.subr.mxu0 %v1739
  %2083 = vmatpush1.msra.mxu0 %v1738
  %2084 = vmatprep.subr.mxu0 %v1743
  %2085 = vmatpush1.msra.mxu0 %v1742
  %2086 = vmatprep.subr.mxu0 %v1747
  %2087 = vmatpush1.msra.mxu0 %v1746
  %2088 = vmatprep.subr.mxu0 %v1751
  %2089 = vmatpush1.msra.mxu0 %v1750
  %2090 = vmatprep.subr.mxu0 %v1755
  %2091 = vmatpush1.msra.mxu0 %v1754
  %2092 = vmatprep.subr.mxu0 %v1759
  %2093 = vmatpush1.msra.mxu0 %v1758
  %2094 = vmatprep.subr.mxu0 %v1763
  %2095 = vmatpush1.msra.mxu0 %v1762
  %2096 = vmatprep.subr.mxu0 %v1767
  %2097 = vmatpush1.msra.mxu0 %v1766
  %2098 = vmatprep.subr.mxu0 %v1771
  %2099 = vmatpush1.msra.mxu0 %v1770
  %2100 = vmatprep.subr.mxu0 %v1775
  %2101 = vmatpush1.msra.mxu0 %v1774
  %2102 = vmatprep.subr.mxu0 %v1779
  %2103 = vmatpush1.msra.mxu0 %v1778
  %2104 = vmatprep.subr.mxu0 %v1783
  %2105 = vmatpush1.msra.mxu0 %v1782
  %2106 = vmatprep.subr.mxu0 %v1787
  %2107 = vmatpush1.msra.mxu0 %v1786
  %2108 = vmatprep.subr.mxu0 %v1791
  %2109 = vmatpush1.msra.mxu0 %v1790
  %2110 = vmatprep.subr.mxu0 %v1795
  %2111 = vmatpush1.msra.mxu0 %v1794
  %2112 = vmatprep.subr.mxu0 %v1799
  %2113 = vmatpush1.msra.mxu0 %v1798
  %2114 = vmatprep.subr.mxu0 %v1803
  %2115 = vmatpush1.msra.mxu0 %v1802
  %2116 = vmatprep.subr.mxu0 %v1807
  %2117 = vmatpush1.msra.mxu0 %v1806
  %2118 = vmatprep.subr.mxu0 %v1811
  %2119 = vmatpush1.msra.mxu0 %v1810
  %2120 = vmatprep.subr.mxu0 %v1815
  %2121 = vmatpush1.msra.mxu0 %v1814
  %2122 = vmatprep.mubr.f32.mxu0 %v1680
  %2123 = vmatmul.mubr.f32.gmra.mrb[0].mxu0 %v1676
  %v2124 = vpop.f32.mrb[0].mxu0
  %v2125 = vadd.f32 0.0, %v2124
  %v2126 = vpop.f32.mrb[0].mxu0
  %v2127 = vadd.f32 0.0, %v2126
  %2128 = vmatprep.mubr.f32.mxu0 %v1681
  %2129 = vmatmul.mubr.f32.gmra.mrb[0].mxu0 %v1677
  %v2130 = vpop.f32.mrb[0].mxu0
  %v2131 = vadd.f32 0.0, %v2130
  %v2132 = vpop.f32.mrb[0].mxu0
  %v2133 = vadd.f32 0.0, %v2132
  %2134 = vmatprep.mubr.f32.mxu0 %v1682
  %2135 = vmatmul.mubr.f32.gmra.mrb[0].mxu0 %v1678
  %v2136 = vpop.f32.mrb[0].mxu0
  %v2137 = vadd.f32 0.0, %v2136
  %v2138 = vpop.f32.mrb[0].mxu0
  %v2139 = vadd.f32 0.0, %v2138
  %2140 = vmatprep.mubr.f32.mxu0 %v1683
  %2141 = vmatmul.mubr.f32.gmra.mrb[0].mxu0 %v1679
  %v2142 = vpop.f32.mrb[0].mxu0
  %v2143 = vadd.f32 0.0, %v2142
  %v2144 = vpop.f32.mrb[0].mxu0
  %v2145 = vadd.f32 0.0, %v2144
  %2146 = vdwg.mxu0
  %2147 = vmatprep.subr.mxu0 %v1819
  %2148 = vmatpush1.msra.mxu0 %v1818
  %2149 = vmatprep.subr.mxu0 %v1823
  %2150 = vmatpush1.msra.mxu0 %v1822
  %2151 = vmatprep.subr.mxu0 %v1827
  %2152 = vmatpush1.msra.mxu0 %v1826
  %2153 = vmatprep.subr.mxu0 %v1831
  %2154 = vmatpush1.msra.mxu0 %v1830
  %2155 = vmatprep.subr.mxu0 %v1835
  %2156 = vmatpush1.msra.mxu0 %v1834
  %2157 = vmatprep.subr.mxu0 %v1839
  %2158 = vmatpush1.msra.mxu0 %v1838
  %2159 = vmatprep.subr.mxu0 %v1843
  %2160 = vmatpush1.msra.mxu0 %v1842
  %2161 = vmatprep.subr.mxu0 %v1847
  %2162 = vmatpush1.msra.mxu0 %v1846
  %2163 = vmatprep.subr.mxu0 %v1851
  %2164 = vmatpush1.msra.mxu0 %v1850
  %2165 = vmatprep.subr.mxu0 %v1855
  %2166 = vmatpush1.msra.mxu0 %v1854
  %2167 = vmatprep.subr.mxu0 %v1859
  %2168 = vmatpush1.msra.mxu0 %v1858
  %2169 = vmatprep.subr.mxu0 %v1863
  %2170 = vmatpush1.msra.mxu0 %v1862
  %2171 = vmatprep.subr.mxu0 %v1867
  %2172 = vmatpush1.msra.mxu0 %v1866
  %2173 = vmatprep.subr.mxu0 %v1871
  %2174 = vmatpush1.msra.mxu0 %v1870
  %2175 = vmatprep.subr.mxu0 %v1875
  %2176 = vmatpush1.msra.mxu0 %v1874
  %2177 = vmatprep.subr.mxu0 %v1879
  %2178 = vmatpush1.msra.mxu0 %v1878
  %2179 = vmatprep.subr.mxu0 0.0
  %2180 = vmatpush1.msra.mxu0 0.0
  %2181 = vmatprep.subr.mxu0 0.0
  %2182 = vmatpush1.msra.mxu0 0.0
  %2183 = vmatprep.subr.mxu0 0.0
  %2184 = vmatpush1.msra.mxu0 0.0
  %2185 = vmatprep.subr.mxu0 0.0
  %2186 = vmatpush1.msra.mxu0 0.0
  %2187 = vmatprep.subr.mxu0 0.0
  %2188 = vmatpush1.msra.mxu0 0.0
  %2189 = vmatprep.subr.mxu0 0.0
  %2190 = vmatpush1.msra.mxu0 0.0
  %2191 = vmatprep.subr.mxu0 0.0
  %2192 = vmatpush1.msra.mxu0 0.0
  %2193 = vmatprep.subr.mxu0 0.0
  %2194 = vmatpush1.msra.mxu0 0.0
  %2195 = vmatprep.subr.mxu0 0.0
  %2196 = vmatpush1.msra.mxu0 0.0
  %2197 = vmatprep.subr.mxu0 0.0
  %2198 = vmatpush1.msra.mxu0 0.0
  %2199 = vmatprep.subr.mxu0 0.0
  %2200 = vmatpush1.msra.mxu0 0.0
  %2201 = vmatprep.subr.mxu0 0.0
  %2202 = vmatpush1.msra.mxu0 0.0
  %2203 = vmatprep.subr.mxu0 0.0
  %2204 = vmatpush1.msra.mxu0 0.0
  %2205 = vmatprep.subr.mxu0 0.0
  %2206 = vmatpush1.msra.mxu0 0.0
  %2207 = vmatprep.subr.mxu0 0.0
  %2208 = vmatpush1.msra.mxu0 0.0
  %2209 = vmatprep.subr.mxu0 0.0
  %2210 = vmatpush1.msra.mxu0 0.0
  %2211 = vmatprep.mubr.f32.mxu0 0.0
  %2212 = vmatmul.mubr.f32.gmra.mrb[0].mxu0 %v1684
  %v2213 = vpop.f32.mrb[0].mxu0
  %v2214 = vadd.f32 %v2125, %v2213
  %v2215 = vpop.f32.mrb[0].mxu0
  %v2216 = vadd.f32 %v2127, %v2215
  %2217 = vmatprep.mubr.f32.mxu0 0.0
  %2218 = vmatmul.mubr.f32.gmra.mrb[0].mxu0 %v1685
  %v2219 = vpop.f32.mrb[0].mxu0
  %v2220 = vadd.f32 %v2131, %v2219
  %v2221 = vpop.f32.mrb[0].mxu0
  %v2222 = vadd.f32 %v2133, %v2221
  %2223 = vmatprep.mubr.f32.mxu0 0.0
  %2224 = vmatmul.mubr.f32.gmra.mrb[0].mxu0 %v1686
  %v2225 = vpop.f32.mrb[0].mxu0
  %v2226 = vadd.f32 %v2137, %v2225
  %v2227 = vpop.f32.mrb[0].mxu0
  %v2228 = vadd.f32 %v2139, %v2227
  %2229 = vmatprep.mubr.f32.mxu0 0.0
  %2230 = vmatmul.mubr.f32.gmra.mrb[0].mxu0 %v1687
  %v2231 = vpop.f32.mrb[0].mxu0
  %v2232 = vadd.f32 %v2143, %v2231
  %v2233 = vpop.f32.mrb[0].mxu0
  %v2234 = vadd.f32 %v2145, %v2233
  %2235 = vdwg.mxu0
  %v2236 = vadd.f32 %v2036, %v2042
  %v2237 = vadd.f32 %v2236, %v2048
  %v2238 = vadd.f32 %v2237, %v2054
  %v2239 = vrot.slane %v2238, 4
  %v2240 = vadd.f32 %v2238, %v2239
  %v2241 = vrot.slane %v2240, 2
  %v2242 = vadd.f32 %v2240, %v2241
  %v2243 = vrot.slane %v2242, 1
  %v2244 = vadd.f32 %v2242, %v2243
  %v2245 = vadd.f32 %v2038, %v2044
  %v2246 = vadd.f32 %v2245, %v2050
  %v2247 = vadd.f32 %v2246, %v2056
  %v2248 = vrot.slane %v2247, 4
  %v2249 = vadd.f32 %v2247, %v2248
  %v2250 = vrot.slane %v2249, 2
  %v2251 = vadd.f32 %v2249, %v2250
  %v2252 = vrot.slane %v2251, 1
  %v2253 = vadd.f32 %v2251, %v2252
  %v2254 = vadd.f32 %v2214, %v2220
  %v2255 = vadd.f32 %v2254, %v2226
  %v2256 = vadd.f32 %v2255, %v2232
  %v2257 = vrot.slane %v2256, 4
  %v2258 = vadd.f32 %v2256, %v2257
  %v2259 = vrot.slane %v2258, 2
  %v2260 = vadd.f32 %v2258, %v2259
  %v2261 = vrot.slane %v2260, 1
  %v2262 = vadd.f32 %v2260, %v2261
  %v2263 = vadd.f32 %v2216, %v2222
  %v2264 = vadd.f32 %v2263, %v2228
  %v2265 = vadd.f32 %v2264, %v2234
  %v2266 = vrot.slane %v2265, 4
  %v2267 = vadd.f32 %v2265, %v2266
  %v2268 = vrot.slane %v2267, 2
  %v2269 = vadd.f32 %v2267, %v2268
  %v2270 = vrot.slane %v2269, 1
  %v2271 = vadd.f32 %v2269, %v2270
  %v2272 = vmul.f32 %v2036, %v2036
  %v2273 = vmul.f32 %v2038, %v2038
  %v2274 = vmul.f32 %v2214, %v2214
  %v2275 = vmul.f32 %v2216, %v2216
  %v2276 = vmul.f32 %v2042, %v2042
  %v2277 = vmul.f32 %v2044, %v2044
  %v2278 = vmul.f32 %v2220, %v2220
  %v2279 = vmul.f32 %v2222, %v2222
  %v2280 = vmul.f32 %v2048, %v2048
  %v2281 = vmul.f32 %v2050, %v2050
  %v2282 = vmul.f32 %v2226, %v2226
  %v2283 = vmul.f32 %v2228, %v2228
  %v2284 = vmul.f32 %v2054, %v2054
  %v2285 = vmul.f32 %v2056, %v2056
  %v2286 = vmul.f32 %v2232, %v2232
  %v2287 = vmul.f32 %v2234, %v2234
  %v2288 = vadd.f32 %v2272, %v2276
  %v2289 = vadd.f32 %v2288, %v2280
  %v2290 = vadd.f32 %v2289, %v2284
  %v2291 = vrot.slane %v2290, 4
  %v2292 = vadd.f32 %v2290, %v2291
  %v2293 = vrot.slane %v2292, 2
  %v2294 = vadd.f32 %v2292, %v2293
  %v2295 = vrot.slane %v2294, 1
  %v2296 = vadd.f32 %v2294, %v2295
  %v2297 = vadd.f32 %v2273, %v2277
  %v2298 = vadd.f32 %v2297, %v2281
  %v2299 = vadd.f32 %v2298, %v2285
  %v2300 = vrot.slane %v2299, 4
  %v2301 = vadd.f32 %v2299, %v2300
  %v2302 = vrot.slane %v2301, 2
  %v2303 = vadd.f32 %v2301, %v2302
  %v2304 = vrot.slane %v2303, 1
  %v2305 = vadd.f32 %v2303, %v2304
  %v2306 = vadd.f32 %v2274, %v2278
  %v2307 = vadd.f32 %v2306, %v2282
  %v2308 = vadd.f32 %v2307, %v2286
  %v2309 = vrot.slane %v2308, 4
  %v2310 = vadd.f32 %v2308, %v2309
  %v2311 = vrot.slane %v2310, 2
  %v2312 = vadd.f32 %v2310, %v2311
  %v2313 = vrot.slane %v2312, 1
  %v2314 = vadd.f32 %v2312, %v2313
  %v2315 = vadd.f32 %v2275, %v2279
  %v2316 = vadd.f32 %v2315, %v2283
  %v2317 = vadd.f32 %v2316, %v2287
  %v2318 = vrot.slane %v2317, 4
  %v2319 = vadd.f32 %v2317, %v2318
  %v2320 = vrot.slane %v2319, 2
  %v2321 = vadd.f32 %v2319, %v2320
  %v2322 = vrot.slane %v2321, 1
  %v2323 = vadd.f32 %v2321, %v2322
  %v2324 = vsel %vm61, %v2244, %v2253
  %v2325 = vsel %vm1118, %v2324, %v2262
  %v2326 = vsel %vm1120, %v2325, %v2271
  %v2327 = vsel %vm1122, %v2326, %v2296
  %v2328 = vsel %vm1124, %v2327, %v2305
  %v2329 = vsel %vm1126, %v2328, %v2314
  %v2330 = vsel %vm76, %v2329, %v2323
  %2331 = vmatprep.subr.mxu0 0.0
  %2332 = vmatpush1.msra.mxu0 %v36
  %2333 = vmatprep.subr.mxu0 0.0
  %2334 = vmatpush1.msra.mxu0 %v37
  %2335 = vmatprep.subr.mxu0 0.0
  %2336 = vmatpush1.msra.mxu0 %v38
  %2337 = vmatprep.subr.mxu0 0.0
  %2338 = vmatpush1.msra.mxu0 %v39
  %2339 = vmatprep.subr.mxu0 0.0
  %2340 = vmatpush1.msra.mxu0 %v40
  %2341 = vmatprep.subr.mxu0 0.0
  %2342 = vmatpush1.msra.mxu0 %v41
  %2343 = vmatprep.subr.mxu0 0.0
  %2344 = vmatpush1.msra.mxu0 %v42
  %2345 = vmatprep.subr.mxu0 0.0
  %2346 = vmatpush1.msra.mxu0 %v43
  %2347 = vmatprep.subr.mxu0 0.0
  %2348 = vmatpush1.msra.mxu0 %v44
  %2349 = vmatprep.subr.mxu0 0.0
  %2350 = vmatpush1.msra.mxu0 %v45
  %2351 = vmatprep.subr.mxu0 0.0
  %2352 = vmatpush1.msra.mxu0 %v46
  %2353 = vmatprep.subr.mxu0 0.0
  %2354 = vmatpush1.msra.mxu0 %v47
  %2355 = vmatprep.subr.mxu0 0.0
  %2356 = vmatpush1.msra.mxu0 %v48
  %2357 = vmatprep.subr.mxu0 0.0
  %2358 = vmatpush1.msra.mxu0 %v49
  %2359 = vmatprep.subr.mxu0 0.0
  %2360 = vmatpush1.msra.mxu0 %v50
  %2361 = vmatprep.subr.mxu0 0.0
  %2362 = vmatpush1.msra.mxu0 %v51
  %2363 = vmatprep.subr.mxu0 0.0
  %2364 = vmatpush1.msra.mxu0 0.0
  %2365 = vmatprep.subr.mxu0 0.0
  %2366 = vmatpush1.msra.mxu0 0.0
  %2367 = vmatprep.subr.mxu0 0.0
  %2368 = vmatpush1.msra.mxu0 0.0
  %2369 = vmatprep.subr.mxu0 0.0
  %2370 = vmatpush1.msra.mxu0 0.0
  %2371 = vmatprep.subr.mxu0 0.0
  %2372 = vmatpush1.msra.mxu0 0.0
  %2373 = vmatprep.subr.mxu0 0.0
  %2374 = vmatpush1.msra.mxu0 0.0
  %2375 = vmatprep.subr.mxu0 0.0
  %2376 = vmatpush1.msra.mxu0 0.0
  %2377 = vmatprep.subr.mxu0 0.0
  %2378 = vmatpush1.msra.mxu0 0.0
  %2379 = vmatprep.subr.mxu0 0.0
  %2380 = vmatpush1.msra.mxu0 0.0
  %2381 = vmatprep.subr.mxu0 0.0
  %2382 = vmatpush1.msra.mxu0 0.0
  %2383 = vmatprep.subr.mxu0 0.0
  %2384 = vmatpush1.msra.mxu0 0.0
  %2385 = vmatprep.subr.mxu0 0.0
  %2386 = vmatpush1.msra.mxu0 0.0
  %2387 = vmatprep.subr.mxu0 0.0
  %2388 = vmatpush1.msra.mxu0 0.0
  %2389 = vmatprep.subr.mxu0 0.0
  %2390 = vmatpush1.msra.mxu0 0.0
  %2391 = vmatprep.subr.mxu0 0.0
  %2392 = vmatpush1.msra.mxu0 0.0
  %2393 = vmatprep.subr.mxu0 0.0
  %2394 = vmatpush1.msra.mxu0 0.0
  %2395 = vmatprep.mubr.f32.mxu0 0.0
  %2396 = vmatmul.mubr.f32.gmra.mrb[0].mxu0 %v2330
  %v2397 = vpop.f32.mrb[0].mxu0
  %v2398 = vadd.f32 0.0, %v2397
  %v2399 = vpop.f32.mrb[0].mxu0
  %2400 = vdwg.mxu0
  %v2402 = vrot.slane %v2398, 1
  %v2404 = vrot.slane %v2398, 2
  %v2406 = vrot.slane %v2398, 3
  %v2408 = vmul.f32 %v2398, 0.001953125
  %v2409 = vmul.f32 %v2402, 0.001953125
  %v2410 = vmul.f32 %v2404, 0.001953125
  %v2411 = vmul.f32 %v2406, 0.001953125
  %v2412 = vmul.f32 %v2408, %v2408
  %v2413 = vmul.f32 %v2409, %v2409
  %v2414 = vmul.f32 %v2410, %v2410
  %v2415 = vmul.f32 %v2411, %v2411
  %v2420 = vrot.slane %v2412, 4
  %v2421 = vrot.slane %v2413, 4
  %v2422 = vrot.slane %v2414, 4
  %v2423 = vrot.slane %v2415, 4
  %v2428 = vsub.f32 %v2408, %v2420
  %v2429 = vsub.f32 %v2409, %v2421
  %v2430 = vsub.f32 %v2410, %v2422
  %v2431 = vsub.f32 %v2411, %v2423
  %v2432 = vmax.f32 %v2428, 0.0
  %v2433 = vmax.f32 %v2429, 0.0
  %v2434 = vmax.f32 %v2430, 0.0
  %v2435 = vmax.f32 %v2431, 0.0
  %v2436 = vadd.f32 %v2432, 1e-05
  %v2437 = vadd.f32 %v2433, 1e-05
  %v2438 = vadd.f32 %v2434, 1e-05
  %v2439 = vadd.f32 %v2435, 1e-05
  %v2440 = vrsqrt.pop %v2436
  %v2441 = vrsqrt.pop %v2437
  %v2442 = vrsqrt.pop %v2438
  %v2443 = vrsqrt.pop %v2439
  %v2446 = vrot.slane %v53, 4
  %v2447 = vrot.slane %v54, 4
  %v2448 = vsel %vm1122, %v2446, %v2447
  %v2454 = vcombine.high %v2440, %v2441
  %v2455 = vcombine.high %v2442, %v2443
  %v2457 = vunpack.c.l.s4 1983009808
  %v2458 = vunpack.c.0.s8 %v2457
  %v2459 = vlaneseq
  %v2460 = vshrl.u32 %v2459, 7
  %v2461 = vsub.s32 %v2458, %v2460
  %v2462 = vrot.slane %v2454, %v2461
  %v2464 = vunpack.c.l.s4 1983009808
  %v2465 = vunpack.c.0.s8 %v2464
  %v2466 = vlaneseq
  %v2467 = vshrl.u32 %v2466, 7
  %v2468 = vsub.s32 %v2465, %v2467
  %v2469 = vrot.slane %v2455, %v2468
  %v2470 = vcombine.low %v2462, %v2469
  %v2472 = vmul.f32 %v2448, %v2470
  %v2474 = vlaneseq
  %v2475 = vshrl.u32 %v2474, 7
  %v2476 = vsub.s32 0, %v2475
  %v2477 = vrot.slane %v2472, %v2476
  %v2478 = vlaneseq
  %v2479 = vshrl.u32 %v2478, 7
  %v2480 = vsub.s32 2, %v2479
  %v2481 = vrot.slane %v2472, %v2480
  %v2482 = vlaneseq
  %v2483 = vshrl.u32 %v2482, 7
  %v2484 = vsub.s32 4, %v2483
  %v2485 = vrot.slane %v2472, %v2484
  %v2486 = vlaneseq
  %v2487 = vshrl.u32 %v2486, 7
  %v2488 = vsub.s32 6, %v2487
  %v2489 = vrot.slane %v2472, %v2488
  %v2494 = vmul.f32 %v2408, %v2477
  %v2495 = vmul.f32 %v2409, %v2481
  %v2496 = vmul.f32 %v2410, %v2485
  %v2497 = vmul.f32 %v2411, %v2489
  %v2502 = vcombine.low %v2494, %v2495
  %v2503 = vcombine.low %v2496, %v2497
  %v2505 = vunpack.c.l.s4 1983009808
  %v2506 = vunpack.c.0.s8 %v2505
  %v2507 = vlaneseq
  %v2508 = vshrl.u32 %v2507, 7
  %v2509 = vsub.s32 %v2506, %v2508
  %v2510 = vrot.slane %v2502, %v2509
  %v2512 = vunpack.c.l.s4 1983009808
  %v2513 = vunpack.c.0.s8 %v2512
  %v2514 = vlaneseq
  %v2515 = vshrl.u32 %v2514, 7
  %v2516 = vsub.s32 %v2513, %v2515
  %v2517 = vrot.slane %v2503, %v2516
  %v2518 = vcombine.low %v2510, %v2517
  %v2519 = vrot.slane %v2518, 7
  %v2521 = vsub.f32 %v2448, %v2519
  %v2522 = vlaneseq
  %v2523 = vshrl.u32 %v2522, 7
  %v2524 = vsub.s32 0, %v2523
  %v2525 = vrot.slane %v2477, %v2524
  %v2526 = vlaneseq
  %v2527 = vshrl.u32 %v2526, 7
  %v2528 = vsub.s32 0, %v2527
  %v2529 = vrot.slane %v2481, %v2528
  %v2530 = vlaneseq
  %v2531 = vshrl.u32 %v2530, 7
  %v2532 = vsub.s32 0, %v2531
  %v2533 = vrot.slane %v2485, %v2532
  %v2534 = vlaneseq
  %v2535 = vshrl.u32 %v2534, 7
  %v2536 = vsub.s32 0, %v2535
  %v2537 = vrot.slane %v2489, %v2536
  %v2538 = vmul.f32 %v2036, %v2525
  %v2539 = vmul.f32 %v2038, %v2529
  %v2540 = vmul.f32 %v2214, %v2533
  %v2541 = vmul.f32 %v2216, %v2537
  %v2542 = vmul.f32 %v2042, %v2525
  %v2543 = vmul.f32 %v2044, %v2529
  %v2544 = vmul.f32 %v2220, %v2533
  %v2545 = vmul.f32 %v2222, %v2537
  %v2546 = vmul.f32 %v2048, %v2525
  %v2547 = vmul.f32 %v2050, %v2529
  %v2548 = vmul.f32 %v2226, %v2533
  %v2549 = vmul.f32 %v2228, %v2537
  %v2550 = vmul.f32 %v2054, %v2525
  %v2551 = vmul.f32 %v2056, %v2529
  %v2552 = vmul.f32 %v2232, %v2533
  %v2553 = vmul.f32 %v2234, %v2537
  %v2555 = vlaneseq
  %v2556 = vshrl.u32 %v2555, 7
  %v2557 = vsub.s32 1, %v2556
  %v2558 = vrot.slane %v2521, %v2557
  %v2559 = vlaneseq
  %v2560 = vshrl.u32 %v2559, 7
  %v2561 = vsub.s32 3, %v2560
  %v2562 = vrot.slane %v2521, %v2561
  %v2563 = vlaneseq
  %v2564 = vshrl.u32 %v2563, 7
  %v2565 = vsub.s32 5, %v2564
  %v2566 = vrot.slane %v2521, %v2565
  %v2567 = vlaneseq
  %v2568 = vshrl.u32 %v2567, 7
  %v2569 = vsub.s32 7, %v2568
  %v2570 = vrot.slane %v2521, %v2569
  %v2575 = vlaneseq
  %v2576 = vshrl.u32 %v2575, 7
  %v2577 = vsub.s32 1, %v2576
  %v2578 = vrot.slane %v2558, %v2577
  %v2579 = vlaneseq
  %v2580 = vshrl.u32 %v2579, 7
  %v2581 = vsub.s32 1, %v2580
  %v2582 = vrot.slane %v2562, %v2581
  %v2583 = vlaneseq
  %v2584 = vshrl.u32 %v2583, 7
  %v2585 = vsub.s32 1, %v2584
  %v2586 = vrot.slane %v2566, %v2585
  %v2587 = vlaneseq
  %v2588 = vshrl.u32 %v2587, 7
  %v2589 = vsub.s32 1, %v2588
  %v2590 = vrot.slane %v2570, %v2589
  %v2591 = vadd.f32 %v2538, %v2578
  %v2592 = vadd.f32 %v2539, %v2582
  %v2593 = vadd.f32 %v2540, %v2586
  %v2594 = vadd.f32 %v2541, %v2590
  %v2595 = vadd.f32 %v2542, %v2578
  %v2596 = vadd.f32 %v2543, %v2582
  %v2597 = vadd.f32 %v2544, %v2586
  %v2598 = vadd.f32 %v2545, %v2590
  %v2599 = vadd.f32 %v2546, %v2578
  %v2600 = vadd.f32 %v2547, %v2582
  %v2601 = vadd.f32 %v2548, %v2586
  %v2602 = vadd.f32 %v2549, %v2590
  %v2603 = vadd.f32 %v2550, %v2578
  %v2604 = vadd.f32 %v2551, %v2582
  %v2605 = vadd.f32 %v2552, %v2586
  %v2606 = vadd.f32 %v2553, %v2590
  %v2607 = vld [vmem:[#allocation3] sm:$0xff]
  %v2608 = vld [vmem:[#allocation3 + $0x8] sm:$0xff]
  %v2609 = vld [vmem:[#allocation3 + $0x10] sm:$0xff]
  %v2610 = vld [vmem:[#allocation3 + $0x18] sm:$0xff]
  %v2611 = vadd.f32 %v2607, %v1672
  %v2612 = vadd.f32 %v2608, %v1673
  %v2613 = vadd.f32 %v2609, %v1674
  %v2614 = vadd.f32 %v2610, %v1675
  %v2615 = vadd.f32 %v2611, %v2591
  %v2616 = vadd.f32 %v2612, %v2595
  %v2617 = vadd.f32 %v2613, %v2599
  %v2618 = vadd.f32 %v2614, %v2603
  %v2619 = vadd.f32 %v2615, %v2592
  %v2620 = vadd.f32 %v2616, %v2596
  %v2621 = vadd.f32 %v2617, %v2600
  %v2622 = vadd.f32 %v2618, %v2604
  %2623 = vst [vmem:[#allocation3] sm:$0xff] %v2619
  %2624 = vst [vmem:[#allocation3 + $0x8] sm:$0xff] %v2620
  %2625 = vst [vmem:[#allocation3 + $0x10] sm:$0xff] %v2621
  %2626 = vst [vmem:[#allocation3 + $0x18] sm:$0xff] %v2622
  %v2627 = vld [vmem:[%s5] sm:$0xff]
  %v2628 = vld [vmem:[%s5 + $0x8] sm:$0xff]
  %v2629 = vld [vmem:[%s5 + $0x10] sm:$0xff]
  %v2630 = vld [vmem:[%s5 + $0x18] sm:$0xff]
  %v2631 = vadd.f32 %v2627, %v1672
  %v2632 = vadd.f32 %v2628, %v1673
  %v2633 = vadd.f32 %v2629, %v1674
  %v2634 = vadd.f32 %v2630, %v1675
  %v2635 = vadd.f32 %v2631, %v2593
  %v2636 = vadd.f32 %v2632, %v2597
  %v2637 = vadd.f32 %v2633, %v2601
  %v2638 = vadd.f32 %v2634, %v2605
  %v2639 = vadd.f32 %v2635, %v2594
  %v2640 = vadd.f32 %v2636, %v2598
  %v2641 = vadd.f32 %v2637, %v2602
  %v2642 = vadd.f32 %v2638, %v2606
  %2643 = vst [vmem:[%s5] sm:$0xff] %v2639
  %2644 = vst [vmem:[%s5 + $0x8] sm:$0xff] %v2640
  %2645 = vst [vmem:[%s5 + $0x10] sm:$0xff] %v2641
  %2646 = vst [vmem:[%s5 + $0x18] sm:$0xff] %v2642
  %v2647 = vld [vmem:[#allocation3] sm:$0xff]
  %v2648 = vld [vmem:[#allocation3 + $0x8] sm:$0xff]
  %v2649 = vld [vmem:[#allocation3 + $0x10] sm:$0xff]
  %v2650 = vld [vmem:[#allocation3 + $0x18] sm:$0xff]
  %v2653 = vrot.slane %v2647, 7
  %v2654 = vrot.slane %v2648, 7
  %v2655 = vsel %vm61, %v2653, %v2654
  %v2658 = vsel %vm61, 0.0, %v2653
  %v2661 = vrot.slane %v2649, 7
  %v2662 = vrot.slane %v2650, 7
  %v2663 = vsel %vm61, %v2661, %v2662
  %v2666 = vsel %vm61, 0.0, %v2661
  %v2667 = vrot.slane %v2647, 1
  %v2668 = vrot.slane %v2648, 1
  %v2669 = vsel %vm76, %v2667, %v2668
  %v2672 = vsel %vm76, %v2668, 0.0
  %v2673 = vrot.slane %v2649, 1
  %v2674 = vrot.slane %v2650, 1
  %v2675 = vsel %vm76, %v2673, %v2674
  %v2678 = vsel %vm76, %v2674, 0.0
  %v2679 = vadd.f32 %v2658, %v2647
  %v2680 = vadd.f32 %v2655, %v2648
  %v2681 = vadd.f32 %v2666, %v2649
  %v2682 = vadd.f32 %v2663, %v2650
  %v2683 = vadd.f32 %v2679, %v2669
  %v2684 = vadd.f32 %v2680, %v2672
  %v2685 = vadd.f32 %v2681, %v2675
  %v2686 = vadd.f32 %v2682, %v2678
  %2691 = vrot.lane.b32.xlu0 %v2683, 8
  %v2692 = vpop.permute.xlu0 %2691
  %2693 = vrot.lane.b32.xlu0 %v2684, 8
  %v2694 = vpop.permute.xlu0 %2693
  %2695 = vrot.lane.b32.xlu0 %v2685, 8
  %v2696 = vpop.permute.xlu0 %2695
  %2697 = vrot.lane.b32.xlu0 %v2686, 8
  %v2698 = vpop.permute.xlu0 %2697
  %v2703 = vsel %vm113, 0.0, %v2692
  %v2704 = vsel %vm113, 0.0, %v2694
  %v2705 = vsel %vm113, 0.0, %v2696
  %v2706 = vsel %vm113, 0.0, %v2698
  %2707 = vrot.lane.b32.xlu0 %v2683, 120
  %v2708 = vpop.permute.xlu0 %2707
  %2709 = vrot.lane.b32.xlu0 %v2684, 120
  %v2710 = vpop.permute.xlu0 %2709
  %2711 = vrot.lane.b32.xlu0 %v2685, 120
  %v2712 = vpop.permute.xlu0 %2711
  %2713 = vrot.lane.b32.xlu0 %v2686, 120
  %v2714 = vpop.permute.xlu0 %2713
  %v2719 = vsel %vm130, %v2708, 0.0
  %v2720 = vsel %vm130, %v2710, 0.0
  %v2721 = vsel %vm130, %v2712, 0.0
  %v2722 = vsel %vm130, %v2714, 0.0
  %v2723 = vadd.f32 %v2703, %v2683
  %v2724 = vadd.f32 %v2704, %v2684
  %v2725 = vadd.f32 %v2705, %v2685
  %v2726 = vadd.f32 %v2706, %v2686
  %v2727 = vadd.f32 %v2723, %v2719
  %v2728 = vadd.f32 %v2724, %v2720
  %v2729 = vadd.f32 %v2725, %v2721
  %v2730 = vadd.f32 %v2726, %v2722
  %v2731 = vmul.f32 %v2727, %v32
  %v2732 = vmul.f32 %v2728, %v33
  %v2733 = vmul.f32 %v2729, %v34
  %v2734 = vmul.f32 %v2730, %v35
  %v2735 = vadd.f32 %v2647, %v2731
  %v2736 = vadd.f32 %v2648, %v2732
  %v2737 = vadd.f32 %v2649, %v2733
  %v2738 = vadd.f32 %v2650, %v2734
  %v2739 = vmax.f32 %v2658, 0.0
  %v2740 = vmax.f32 %v2655, 0.0
  %v2741 = vmax.f32 %v2666, 0.0
  %v2742 = vmax.f32 %v2663, 0.0
  %v2743 = vmax.f32 %v2647, 0.0
  %v2744 = vmax.f32 %v2648, 0.0
  %v2745 = vmax.f32 %v2649, 0.0
  %v2746 = vmax.f32 %v2650, 0.0
  %v2747 = vmax.f32 %v2669, 0.0
  %v2748 = vmax.f32 %v2672, 0.0
  %v2749 = vmax.f32 %v2675, 0.0
  %v2750 = vmax.f32 %v2678, 0.0
  %v2751 = vld [vmem:[%s1 + $0x50] sm:$0xff]
  %v2752 = vld [vmem:[%s1 + $0x58] sm:$0xff]
  %v2753 = vld [vmem:[%s1 + $0xb0] sm:$0xff]
  %v2754 = vld [vmem:[%s1 + $0xb8] sm:$0xff]
  %v2755 = vld [vmem:[%s1 + $0x110] sm:$0xff]
  %v2756 = vld [vmem:[%s1 + $0x118] sm:$0xff]
  %v2757 = vld [vmem:[%s1 + $0x170] sm:$0xff]
  %v2758 = vld [vmem:[%s1 + $0x178] sm:$0xff]
  %v2759 = vld [vmem:[%s1 + $0x1d0] sm:$0xff]
  %v2760 = vld [vmem:[%s1 + $0x1d8] sm:$0xff]
  %v2761 = vld [vmem:[%s1 + $0x230] sm:$0xff]
  %v2762 = vld [vmem:[%s1 + $0x238] sm:$0xff]
  %v2763 = vld [vmem:[%s1 + $0x290] sm:$0xff]
  %v2764 = vld [vmem:[%s1 + $0x298] sm:$0xff]
  %v2765 = vld [vmem:[%s1 + $0x2f0] sm:$0xff]
  %v2766 = vld [vmem:[%s1 + $0x2f8] sm:$0xff]
  %v2767 = vld [vmem:[%s1 + $0x350] sm:$0xff]
  %v2768 = vld [vmem:[%s1 + $0x358] sm:$0xff]
  %v2769 = vld [vmem:[%s1 + $0x3b0] sm:$0xff]
  %v2770 = vld [vmem:[%s1 + $0x3b8] sm:$0xff]
  %v2771 = vld [vmem:[%s1 + $0x410] sm:$0xff]
  %v2772 = vld [vmem:[%s1 + $0x418] sm:$0xff]
  %v2773 = vld [vmem:[%s1 + $0x470] sm:$0xff]
  %v2774 = vld [vmem:[%s1 + $0x478] sm:$0xff]
  %v2775 = vld [vmem:[%s1 + $0x4d0] sm:$0xff]
  %v2776 = vld [vmem:[%s1 + $0x4d8] sm:$0xff]
  %v2777 = vld [vmem:[%s1 + $0x530] sm:$0xff]
  %v2778 = vld [vmem:[%s1 + $0x538] sm:$0xff]
  %v2779 = vld [vmem:[%s1 + $0x590] sm:$0xff]
  %v2780 = vld [vmem:[%s1 + $0x598] sm:$0xff]
  %v2781 = vld [vmem:[%s1 + $0x5f0] sm:$0xff]
  %v2782 = vld [vmem:[%s1 + $0x5f8] sm:$0xff]
  %v2783 = vld [vmem:[%s1 + $0x650] sm:$0xff]
  %v2784 = vld [vmem:[%s1 + $0x658] sm:$0xff]
  %v2785 = vld [vmem:[%s1 + $0x6b0] sm:$0xff]
  %v2786 = vld [vmem:[%s1 + $0x6b8] sm:$0xff]
  %v2787 = vld [vmem:[%s1 + $0x710] sm:$0xff]
  %v2788 = vld [vmem:[%s1 + $0x718] sm:$0xff]
  %v2789 = vld [vmem:[%s1 + $0x770] sm:$0xff]
  %v2790 = vld [vmem:[%s1 + $0x778] sm:$0xff]
  %v2791 = vld [vmem:[%s1 + $0x7d0] sm:$0xff]
  %v2792 = vld [vmem:[%s1 + $0x7d8] sm:$0xff]
  %v2793 = vld [vmem:[%s1 + $0x830] sm:$0xff]
  %v2794 = vld [vmem:[%s1 + $0x838] sm:$0xff]
  %v2795 = vld [vmem:[%s1 + $0x890] sm:$0xff]
  %v2796 = vld [vmem:[%s1 + $0x898] sm:$0xff]
  %v2797 = vld [vmem:[%s1 + $0x8f0] sm:$0xff]
  %v2798 = vld [vmem:[%s1 + $0x8f8] sm:$0xff]
  %v2799 = vld [vmem:[%s1 + $0x950] sm:$0xff]
  %v2800 = vld [vmem:[%s1 + $0x958] sm:$0xff]
  %v2801 = vld [vmem:[%s1 + $0x9b0] sm:$0xff]
  %v2802 = vld [vmem:[%s1 + $0x9b8] sm:$0xff]
  %v2803 = vld [vmem:[%s1 + $0xa10] sm:$0xff]
  %v2804 = vld [vmem:[%s1 + $0xa18] sm:$0xff]
  %v2805 = vld [vmem:[%s1 + $0xa70] sm:$0xff]
  %v2806 = vld [vmem:[%s1 + $0xa78] sm:$0xff]
  %v2807 = vld [vmem:[%s1 + $0xad0] sm:$0xff]
  %v2808 = vld [vmem:[%s1 + $0xad8] sm:$0xff]
  %v2809 = vld [vmem:[%s1 + $0xb30] sm:$0xff]
  %v2810 = vld [vmem:[%s1 + $0xb38] sm:$0xff]
  %v2811 = vld [vmem:[%s1 + $0xb90] sm:$0xff]
  %v2812 = vld [vmem:[%s1 + $0xb98] sm:$0xff]
  %v2813 = vld [vmem:[%s1 + $0xbf0] sm:$0xff]
  %v2814 = vld [vmem:[%s1 + $0xbf8] sm:$0xff]
  %v2815 = vld [vmem:[%s1 + $0xc50] sm:$0xff]
  %v2816 = vld [vmem:[%s1 + $0xc58] sm:$0xff]
  %v2817 = vld [vmem:[%s1 + $0xcb0] sm:$0xff]
  %v2818 = vld [vmem:[%s1 + $0xcb8] sm:$0xff]
  %v2819 = vld [vmem:[%s1 + $0xd10] sm:$0xff]
  %v2820 = vld [vmem:[%s1 + $0xd18] sm:$0xff]
  %v2821 = vld [vmem:[%s1 + $0xd70] sm:$0xff]
  %v2822 = vld [vmem:[%s1 + $0xd78] sm:$0xff]
  %v2823 = vld [vmem:[%s1 + $0xdd0] sm:$0xff]
  %v2824 = vld [vmem:[%s1 + $0xdd8] sm:$0xff]
  %v2825 = vld [vmem:[%s1 + $0xe30] sm:$0xff]
  %v2826 = vld [vmem:[%s1 + $0xe38] sm:$0xff]
  %v2827 = vld [vmem:[%s1 + $0xe90] sm:$0xff]
  %v2828 = vld [vmem:[%s1 + $0xe98] sm:$0xff]
  %v2829 = vld [vmem:[%s1 + $0xef0] sm:$0xff]
  %v2830 = vld [vmem:[%s1 + $0xef8] sm:$0xff]
  %v2831 = vld [vmem:[%s1 + $0xf50] sm:$0xff]
  %v2832 = vld [vmem:[%s1 + $0xf58] sm:$0xff]
  %v2833 = vld [vmem:[%s1 + $0xfb0] sm:$0xff]
  %v2834 = vld [vmem:[%s1 + $0xfb8] sm:$0xff]
  %v2835 = vld [vmem:[%s1 + $0x1010] sm:$0xff]
  %v2836 = vld [vmem:[%s1 + $0x1018] sm:$0xff]
  %v2837 = vld [vmem:[%s1 + $0x1070] sm:$0xff]
  %v2838 = vld [vmem:[%s1 + $0x1078] sm:$0xff]
  %v2839 = vld [vmem:[%s1 + $0x10d0] sm:$0xff]
  %v2840 = vld [vmem:[%s1 + $0x10d8] sm:$0xff]
  %v2841 = vld [vmem:[%s1 + $0x1130] sm:$0xff]
  %v2842 = vld [vmem:[%s1 + $0x1138] sm:$0xff]
  %v2843 = vld [vmem:[%s1 + $0x1190] sm:$0xff]
  %v2844 = vld [vmem:[%s1 + $0x1198] sm:$0xff]
  %v2845 = vld [vmem:[%s1 + $0x11f0] sm:$0xff]
  %v2846 = vld [vmem:[%s1 + $0x11f8] sm:$0xff]
  %2847 = vmatprep.subr.mxu0 %v2752
  %2848 = vmatpush1.msra.mxu0 %v2751
  %2849 = vmatprep.subr.mxu0 %v2754
  %2850 = vmatpush1.msra.mxu0 %v2753
  %2851 = vmatprep.subr.mxu0 %v2756
  %2852 = vmatpush1.msra.mxu0 %v2755
  %2853 = vmatprep.subr.mxu0 %v2758
  %2854 = vmatpush1.msra.mxu0 %v2757
  %2855 = vmatprep.subr.mxu0 %v2760
  %2856 = vmatpush1.msra.mxu0 %v2759
  %2857 = vmatprep.subr.mxu0 %v2762
  %2858 = vmatpush1.msra.mxu0 %v2761
  %2859 = vmatprep.subr.mxu0 %v2764
  %2860 = vmatpush1.msra.mxu0 %v2763
  %2861 = vmatprep.subr.mxu0 %v2766
  %2862 = vmatpush1.msra.mxu0 %v2765
  %2863 = vmatprep.subr.mxu0 %v2768
  %2864 = vmatpush1.msra.mxu0 %v2767
  %2865 = vmatprep.subr.mxu0 %v2770
  %2866 = vmatpush1.msra.mxu0 %v2769
  %2867 = vmatprep.subr.mxu0 %v2772
  %2868 = vmatpush1.msra.mxu0 %v2771
  %2869 = vmatprep.subr.mxu0 %v2774
  %2870 = vmatpush1.msra.mxu0 %v2773
  %2871 = vmatprep.subr.mxu0 %v2776
  %2872 = vmatpush1.msra.mxu0 %v2775
  %2873 = vmatprep.subr.mxu0 %v2778
  %2874 = vmatpush1.msra.mxu0 %v2777
  %2875 = vmatprep.subr.mxu0 %v2780
  %2876 = vmatpush1.msra.mxu0 %v2779
  %2877 = vmatprep.subr.mxu0 %v2782
  %2878 = vmatpush1.msra.mxu0 %v2781
  %2879 = vmatprep.subr.mxu0 %v2784
  %2880 = vmatpush1.msra.mxu0 %v2783
  %2881 = vmatprep.subr.mxu0 %v2786
  %2882 = vmatpush1.msra.mxu0 %v2785
  %2883 = vmatprep.subr.mxu0 %v2788
  %2884 = vmatpush1.msra.mxu0 %v2787
  %2885 = vmatprep.subr.mxu0 %v2790
  %2886 = vmatpush1.msra.mxu0 %v2789
  %2887 = vmatprep.subr.mxu0 %v2792
  %2888 = vmatpush1.msra.mxu0 %v2791
  %2889 = vmatprep.subr.mxu0 %v2794
  %2890 = vmatpush1.msra.mxu0 %v2793
  %2891 = vmatprep.subr.mxu0 %v2796
  %2892 = vmatpush1.msra.mxu0 %v2795
  %2893 = vmatprep.subr.mxu0 %v2798
  %2894 = vmatpush1.msra.mxu0 %v2797
  %2895 = vmatprep.subr.mxu0 %v2800
  %2896 = vmatpush1.msra.mxu0 %v2799
  %2897 = vmatprep.subr.mxu0 %v2802
  %2898 = vmatpush1.msra.mxu0 %v2801
  %2899 = vmatprep.subr.mxu0 %v2804
  %2900 = vmatpush1.msra.mxu0 %v2803
  %2901 = vmatprep.subr.mxu0 %v2806
  %2902 = vmatpush1.msra.mxu0 %v2805
  %2903 = vmatprep.subr.mxu0 %v2808
  %2904 = vmatpush1.msra.mxu0 %v2807
  %2905 = vmatprep.subr.mxu0 %v2810
  %2906 = vmatpush1.msra.mxu0 %v2809
  %2907 = vmatprep.subr.mxu0 %v2812
  %2908 = vmatpush1.msra.mxu0 %v2811
  %2909 = vmatprep.subr.mxu0 %v2814
  %2910 = vmatpush1.msra.mxu0 %v2813
  %2911 = vmatprep.mubr.f32.mxu0 %v2743
  %2912 = vmatmul.mubr.f32.gmra.mrb[0].mxu0 %v2739
  %v2913 = vpop.f32.mrb[0].mxu0
  %v2914 = vadd.f32 0.0, %v2913
  %v2915 = vpop.f32.mrb[0].mxu0
  %v2916 = vadd.f32 0.0, %v2915
  %2917 = vmatprep.mubr.f32.mxu0 %v2744
  %2918 = vmatmul.mubr.f32.gmra.mrb[0].mxu0 %v2740
  %v2919 = vpop.f32.mrb[0].mxu0
  %v2920 = vadd.f32 0.0, %v2919
  %v2921 = vpop.f32.mrb[0].mxu0
  %v2922 = vadd.f32 0.0, %v2921
  %2923 = vmatprep.mubr.f32.mxu0 %v2745
  %2924 = vmatmul.mubr.f32.gmra.mrb[0].mxu0 %v2741
  %v2925 = vpop.f32.mrb[0].mxu0
  %v2926 = vadd.f32 0.0, %v2925
  %v2927 = vpop.f32.mrb[0].mxu0
  %v2928 = vadd.f32 0.0, %v2927
  %2929 = vmatprep.mubr.f32.mxu0 %v2746
  %2930 = vmatmul.mubr.f32.gmra.mrb[0].mxu0 %v2742
  %v2931 = vpop.f32.mrb[0].mxu0
  %v2932 = vadd.f32 0.0, %v2931
  %v2933 = vpop.f32.mrb[0].mxu0
  %v2934 = vadd.f32 0.0, %v2933
  %2935 = vdwg.mxu0
  %2936 = vmatprep.subr.mxu0 %v2816
  %2937 = vmatpush1.msra.mxu0 %v2815
  %2938 = vmatprep.subr.mxu0 %v2818
  %2939 = vmatpush1.msra.mxu0 %v2817
  %2940 = vmatprep.subr.mxu0 %v2820
  %2941 = vmatpush1.msra.mxu0 %v2819
  %2942 = vmatprep.subr.mxu0 %v2822
  %2943 = vmatpush1.msra.mxu0 %v2821
  %2944 = vmatprep.subr.mxu0 %v2824
  %2945 = vmatpush1.msra.mxu0 %v2823
  %2946 = vmatprep.subr.mxu0 %v2826
  %2947 = vmatpush1.msra.mxu0 %v2825
  %2948 = vmatprep.subr.mxu0 %v2828
  %2949 = vmatpush1.msra.mxu0 %v2827
  %2950 = vmatprep.subr.mxu0 %v2830
  %2951 = vmatpush1.msra.mxu0 %v2829
  %2952 = vmatprep.subr.mxu0 %v2832
  %2953 = vmatpush1.msra.mxu0 %v2831
  %2954 = vmatprep.subr.mxu0 %v2834
  %2955 = vmatpush1.msra.mxu0 %v2833
  %2956 = vmatprep.subr.mxu0 %v2836
  %2957 = vmatpush1.msra.mxu0 %v2835
  %2958 = vmatprep.subr.mxu0 %v2838
  %2959 = vmatpush1.msra.mxu0 %v2837
  %2960 = vmatprep.subr.mxu0 %v2840
  %2961 = vmatpush1.msra.mxu0 %v2839
  %2962 = vmatprep.subr.mxu0 %v2842
  %2963 = vmatpush1.msra.mxu0 %v2841
  %2964 = vmatprep.subr.mxu0 %v2844
  %2965 = vmatpush1.msra.mxu0 %v2843
  %2966 = vmatprep.subr.mxu0 %v2846
  %2967 = vmatpush1.msra.mxu0 %v2845
  %2968 = vmatprep.subr.mxu0 0.0
  %2969 = vmatpush1.msra.mxu0 0.0
  %2970 = vmatprep.subr.mxu0 0.0
  %2971 = vmatpush1.msra.mxu0 0.0
  %2972 = vmatprep.subr.mxu0 0.0
  %2973 = vmatpush1.msra.mxu0 0.0
  %2974 = vmatprep.subr.mxu0 0.0
  %2975 = vmatpush1.msra.mxu0 0.0
  %2976 = vmatprep.subr.mxu0 0.0
  %2977 = vmatpush1.msra.mxu0 0.0
  %2978 = vmatprep.subr.mxu0 0.0
  %2979 = vmatpush1.msra.mxu0 0.0
  %2980 = vmatprep.subr.mxu0 0.0
  %2981 = vmatpush1.msra.mxu0 0.0
  %2982 = vmatprep.subr.mxu0 0.0
  %2983 = vmatpush1.msra.mxu0 0.0
  %2984 = vmatprep.subr.mxu0 0.0
  %2985 = vmatpush1.msra.mxu0 0.0
  %2986 = vmatprep.subr.mxu0 0.0
  %2987 = vmatpush1.msra.mxu0 0.0
  %2988 = vmatprep.subr.mxu0 0.0
  %2989 = vmatpush1.msra.mxu0 0.0
  %2990 = vmatprep.subr.mxu0 0.0
  %2991 = vmatpush1.msra.mxu0 0.0
  %2992 = vmatprep.subr.mxu0 0.0
  %2993 = vmatpush1.msra.mxu0 0.0
  %2994 = vmatprep.subr.mxu0 0.0
  %2995 = vmatpush1.msra.mxu0 0.0
  %2996 = vmatprep.subr.mxu0 0.0
  %2997 = vmatpush1.msra.mxu0 0.0
  %2998 = vmatprep.subr.mxu0 0.0
  %2999 = vmatpush1.msra.mxu0 0.0
  %3000 = vmatprep.mubr.f32.mxu0 0.0
  %3001 = vmatmul.mubr.f32.gmra.mrb[0].mxu0 %v2747
  %v3002 = vpop.f32.mrb[0].mxu0
  %v3003 = vadd.f32 %v2914, %v3002
  %v3004 = vpop.f32.mrb[0].mxu0
  %v3005 = vadd.f32 %v2916, %v3004
  %3006 = vmatprep.mubr.f32.mxu0 0.0
  %3007 = vmatmul.mubr.f32.gmra.mrb[0].mxu0 %v2748
  %v3008 = vpop.f32.mrb[0].mxu0
  %v3009 = vadd.f32 %v2920, %v3008
  %v3010 = vpop.f32.mrb[0].mxu0
  %v3011 = vadd.f32 %v2922, %v3010
  %3012 = vmatprep.mubr.f32.mxu0 0.0
  %3013 = vmatmul.mubr.f32.gmra.mrb[0].mxu0 %v2749
  %v3014 = vpop.f32.mrb[0].mxu0
  %v3015 = vadd.f32 %v2926, %v3014
  %v3016 = vpop.f32.mrb[0].mxu0
  %v3017 = vadd.f32 %v2928, %v3016
  %3018 = vmatprep.mubr.f32.mxu0 0.0
  %3019 = vmatmul.mubr.f32.gmra.mrb[0].mxu0 %v2750
  %v3020 = vpop.f32.mrb[0].mxu0
  %v3021 = vadd.f32 %v2932, %v3020
  %v3022 = vpop.f32.mrb[0].mxu0
  %v3023 = vadd.f32 %v2934, %v3022
  %3024 = vdwg.mxu0
  %v3025 = vadd.f32 %v3003, %v3009
  %v3026 = vadd.f32 %v3025, %v3015
  %v3027 = vadd.f32 %v3026, %v3021
  %v3028 = vrot.slane %v3027, 4
  %v3029 = vadd.f32 %v3027, %v3028
  %v3030 = vrot.slane %v3029, 2
  %v3031 = vadd.f32 %v3029, %v3030
  %v3032 = vrot.slane %v3031, 1
  %v3033 = vadd.f32 %v3031, %v3032
  %v3034 = vadd.f32 %v3005, %v3011
  %v3035 = vadd.f32 %v3034, %v3017
  %v3036 = vadd.f32 %v3035, %v3023
  %v3037 = vrot.slane %v3036, 4
  %v3038 = vadd.f32 %v3036, %v3037
  %v3039 = vrot.slane %v3038, 2
  %v3040 = vadd.f32 %v3038, %v3039
  %v3041 = vrot.slane %v3040, 1
  %v3042 = vadd.f32 %v3040, %v3041
  %v3043 = vmul.f32 %v3003, %v3003
  %v3044 = vmul.f32 %v3005, %v3005
  %v3045 = vmul.f32 %v3009, %v3009
  %v3046 = vmul.f32 %v3011, %v3011
  %v3047 = vmul.f32 %v3015, %v3015
  %v3048 = vmul.f32 %v3017, %v3017
  %v3049 = vmul.f32 %v3021, %v3021
  %v3050 = vmul.f32 %v3023, %v3023
  %v3051 = vadd.f32 %v3043, %v3045
  %v3052 = vadd.f32 %v3051, %v3047
  %v3053 = vadd.f32 %v3052, %v3049
  %v3054 = vrot.slane %v3053, 4
  %v3055 = vadd.f32 %v3053, %v3054
  %v3056 = vrot.slane %v3055, 2
  %v3057 = vadd.f32 %v3055, %v3056
  %v3058 = vrot.slane %v3057, 1
  %v3059 = vadd.f32 %v3057, %v3058
  %v3060 = vadd.f32 %v3044, %v3046
  %v3061 = vadd.f32 %v3060, %v3048
  %v3062 = vadd.f32 %v3061, %v3050
  %v3063 = vrot.slane %v3062, 4
  %v3064 = vadd.f32 %v3062, %v3063
  %v3065 = vrot.slane %v3064, 2
  %v3066 = vadd.f32 %v3064, %v3065
  %v3067 = vrot.slane %v3066, 1
  %v3068 = vadd.f32 %v3066, %v3067
  %v3069 = vsel %vm61, %v3033, %v3042
  %v3070 = vsel %vm1118, %v3069, %v3059
  %v3071 = vsel %vm1120, %v3070, %v3068
  %3072 = vmatprep.subr.mxu0 0.0
  %3073 = vmatpush1.msra.mxu0 %v36
  %3074 = vmatprep.subr.mxu0 0.0
  %3075 = vmatpush1.msra.mxu0 %v37
  %3076 = vmatprep.subr.mxu0 0.0
  %3077 = vmatpush1.msra.mxu0 %v38
  %3078 = vmatprep.subr.mxu0 0.0
  %3079 = vmatpush1.msra.mxu0 %v39
  %3080 = vmatprep.subr.mxu0 0.0
  %3081 = vmatpush1.msra.mxu0 %v40
  %3082 = vmatprep.subr.mxu0 0.0
  %3083 = vmatpush1.msra.mxu0 %v41
  %3084 = vmatprep.subr.mxu0 0.0
  %3085 = vmatpush1.msra.mxu0 %v42
  %3086 = vmatprep.subr.mxu0 0.0
  %3087 = vmatpush1.msra.mxu0 %v43
  %3088 = vmatprep.subr.mxu0 0.0
  %3089 = vmatpush1.msra.mxu0 %v44
  %3090 = vmatprep.subr.mxu0 0.0
  %3091 = vmatpush1.msra.mxu0 %v45
  %3092 = vmatprep.subr.mxu0 0.0
  %3093 = vmatpush1.msra.mxu0 %v46
  %3094 = vmatprep.subr.mxu0 0.0
  %3095 = vmatpush1.msra.mxu0 %v47
  %3096 = vmatprep.subr.mxu0 0.0
  %3097 = vmatpush1.msra.mxu0 %v48
  %3098 = vmatprep.subr.mxu0 0.0
  %3099 = vmatpush1.msra.mxu0 %v49
  %3100 = vmatprep.subr.mxu0 0.0
  %3101 = vmatpush1.msra.mxu0 %v50
  %3102 = vmatprep.subr.mxu0 0.0
  %3103 = vmatpush1.msra.mxu0 %v51
  %3104 = vmatprep.subr.mxu0 0.0
  %3105 = vmatpush1.msra.mxu0 0.0
  %3106 = vmatprep.subr.mxu0 0.0
  %3107 = vmatpush1.msra.mxu0 0.0
  %3108 = vmatprep.subr.mxu0 0.0
  %3109 = vmatpush1.msra.mxu0 0.0
  %3110 = vmatprep.subr.mxu0 0.0
  %3111 = vmatpush1.msra.mxu0 0.0
  %3112 = vmatprep.subr.mxu0 0.0
  %3113 = vmatpush1.msra.mxu0 0.0
  %3114 = vmatprep.subr.mxu0 0.0
  %3115 = vmatpush1.msra.mxu0 0.0
  %3116 = vmatprep.subr.mxu0 0.0
  %3117 = vmatpush1.msra.mxu0 0.0
  %3118 = vmatprep.subr.mxu0 0.0
  %3119 = vmatpush1.msra.mxu0 0.0
  %3120 = vmatprep.subr.mxu0 0.0
  %3121 = vmatpush1.msra.mxu0 0.0
  %3122 = vmatprep.subr.mxu0 0.0
  %3123 = vmatpush1.msra.mxu0 0.0
  %3124 = vmatprep.subr.mxu0 0.0
  %3125 = vmatpush1.msra.mxu0 0.0
  %3126 = vmatprep.subr.mxu0 0.0
  %3127 = vmatpush1.msra.mxu0 0.0
  %3128 = vmatprep.subr.mxu0 0.0
  %3129 = vmatpush1.msra.mxu0 0.0
  %3130 = vmatprep.subr.mxu0 0.0
  %3131 = vmatpush1.msra.mxu0 0.0
  %3132 = vmatprep.subr.mxu0 0.0
  %3133 = vmatpush1.msra.mxu0 0.0
  %3134 = vmatprep.subr.mxu0 0.0
  %3135 = vmatpush1.msra.mxu0 0.0
  %3136 = vmatprep.mubr.f32.mxu0 0.0
  %3137 = vmatmul.mubr.f32.gmra.mrb[0].mxu0 %v3071
  %v3138 = vpop.f32.mrb[0].mxu0
  %v3139 = vadd.f32 0.0, %v3138
  %v3140 = vpop.f32.mrb[0].mxu0
  %3141 = vdwg.mxu0
  %v3143 = vrot.slane %v3139, 1
  %v3145 = vmul.f32 %v3139, 0.001953125
  %v3146 = vmul.f32 %v3143, 0.001953125
  %v3147 = vmul.f32 %v3145, %v3145
  %v3148 = vmul.f32 %v3146, %v3146
  %v3151 = vrot.slane %v3147, 6
  %v3152 = vrot.slane %v3148, 6
  %v3155 = vsub.f32 %v3145, %v3151
  %v3156 = vsub.f32 %v3146, %v3152
  %v3157 = vmax.f32 %v3155, 0.0
  %v3158 = vmax.f32 %v3156, 0.0
  %v3159 = vadd.f32 %v3157, 1e-05
  %v3160 = vadd.f32 %v3158, 1e-05
  %v3161 = vrsqrt.pop %v3159
  %v3162 = vrsqrt.pop %v3160
  %v3166 = vcombine.low %v3161, %v3162
  %v3168 = vunpack.c.l.s4 1983009808
  %v3169 = vunpack.c.0.s8 %v3168
  %v3170 = vlaneseq
  %v3171 = vshrl.u32 %v3170, 7
  %v3172 = vsub.s32 %v3169, %v3171
  %v3173 = vrot.slane %v3166, %v3172
  %v3174 = vcombine.high %v3173, %v3173
  %v3176 = vmul.f32 %v2447, %v3174
  %v3178 = vlaneseq
  %v3179 = vshrl.u32 %v3178, 7
  %v3180 = vsub.s32 0, %v3179
  %v3181 = vrot.slane %v3176, %v3180
  %v3182 = vlaneseq
  %v3183 = vshrl.u32 %v3182, 7
  %v3184 = vsub.s32 2, %v3183
  %v3185 = vrot.slane %v3176, %v3184
  %v3188 = vmul.f32 %v3145, %v3181
  %v3189 = vmul.f32 %v3146, %v3185
  %v3192 = vcombine.low %v3188, %v3189
  %v3194 = vunpack.c.l.s4 1983009808
  %v3195 = vunpack.c.0.s8 %v3194
  %v3196 = vlaneseq
  %v3197 = vshrl.u32 %v3196, 7
  %v3198 = vsub.s32 %v3195, %v3197
  %v3199 = vrot.slane %v3192, %v3198
  %v3200 = vrot.slane %v3199, 7
  %v3202 = vsub.f32 %v2447, %v3200
  %v3203 = vlaneseq
  %v3204 = vshrl.u32 %v3203, 7
  %v3205 = vsub.s32 0, %v3204
  %v3206 = vrot.slane %v3181, %v3205
  %v3207 = vlaneseq
  %v3208 = vshrl.u32 %v3207, 7
  %v3209 = vsub.s32 0, %v3208
  %v3210 = vrot.slane %v3185, %v3209
  %v3211 = vmul.f32 %v3003, %v3206
  %v3212 = vmul.f32 %v3005, %v3210
  %v3213 = vmul.f32 %v3009, %v3206
  %v3214 = vmul.f32 %v3011, %v3210
  %v3215 = vmul.f32 %v3015, %v3206
  %v3216 = vmul.f32 %v3017, %v3210
  %v3217 = vmul.f32 %v3021, %v3206
  %v3218 = vmul.f32 %v3023, %v3210
  %v3220 = vlaneseq
  %v3221 = vshrl.u32 %v3220, 7
  %v3222 = vsub.s32 1, %v3221
  %v3223 = vrot.slane %v3202, %v3222
  %v3224 = vlaneseq
  %v3225 = vshrl.u32 %v3224, 7
  %v3226 = vsub.s32 3, %v3225
  %v3227 = vrot.slane %v3202, %v3226
  %v3230 = vlaneseq
  %v3231 = vshrl.u32 %v3230, 7
  %v3232 = vsub.s32 1, %v3231
  %v3233 = vrot.slane %v3223, %v3232
  %v3234 = vlaneseq
  %v3235 = vshrl.u32 %v3234, 7
  %v3236 = vsub.s32 1, %v3235
  %v3237 = vrot.slane %v3227, %v3236
  %v3238 = vadd.f32 %v3211, %v3233
  %v3239 = vadd.f32 %v3212, %v3237
  %v3240 = vadd.f32 %v3213, %v3233
  %v3241 = vadd.f32 %v3214, %v3237
  %v3242 = vadd.f32 %v3215, %v3233
  %v3243 = vadd.f32 %v3216, %v3237
  %v3244 = vadd.f32 %v3217, %v3233
  %v3245 = vadd.f32 %v3218, %v3237
  %v3246 = vld [vmem:[%s5] sm:$0xff]
  %v3247 = vld [vmem:[%s5 + $0x8] sm:$0xff]
  %v3248 = vld [vmem:[%s5 + $0x10] sm:$0xff]
  %v3249 = vld [vmem:[%s5 + $0x18] sm:$0xff]
  %v3250 = vadd.f32 %v3246, %v2735
  %v3251 = vadd.f32 %v3247, %v2736
  %v3252 = vadd.f32 %v3248, %v2737
  %v3253 = vadd.f32 %v3249, %v2738
  %v3254 = vadd.f32 %v3250, %v3238
  %v3255 = vadd.f32 %v3251, %v3240
  %v3256 = vadd.f32 %v3252, %v3242
  %v3257 = vadd.f32 %v3253, %v3244
  %v3258 = vadd.f32 %v3254, %v3239
  %v3259 = vadd.f32 %v3255, %v3241
  %v3260 = vadd.f32 %v3256, %v3243
  %v3261 = vadd.f32 %v3257, %v3245
  %3262 = vst [vmem:[%s5] sm:$0xff] %v3258
  %3263 = vst [vmem:[%s5 + $0x8] sm:$0xff] %v3259
  %3264 = vst [vmem:[%s5 + $0x10] sm:$0xff] %v3260
  %3265 = vst [vmem:[%s5 + $0x18] sm:$0xff] %v3261
  // Predicated region
  $region22: #{cell_forward.1} parent=0 // pred_check
    _
  $region23: #{cell_forward.1} parent=0 // pred_check_branch
    %3267 = sbr.rel (0) target = $region25
  $region24: #{cell_forward.1} parent=0 // pred_region
    _
  $region25: #{cell_forward.1} parent=0 // pred_fallthru
    _
  // Predicated region
  $region26: #{cell_forward.1} parent=0 // pred_check
    _
  $region27: #{cell_forward.1} parent=0 // pred_check_branch
    %3269 = sbr.rel (0) target = $region29
  $region28: #{cell_forward.1} parent=0 // pred_region
    _
  $region29: #{cell_forward.1} parent=0 // pred_fallthru
    _

</llo_original>
